<compile_context>
chip_gen: v5e
topology: v5e:2x2
jax: 0.10.0
libtpu: 0.0.40
codegen_flags: <defaults>
</compile_context>

<pallas_src>
import functools

import jax
import jax.numpy as jnp
from jax.experimental import pallas as pl
from jax.experimental.pallas import tpu as pltpu


POOL_SIZES = (1, 2, 3, 6)          # classic PSP pyramid levels
ENC_CH = (16, 32, 64)              # simplified encoder widths (stride-8 output)
BN_FOLD = 1.0 / (1.0 + 1e-5) ** 0.5  # freshly-initialized eval-mode BatchNorm fold


# ----------------------------------------------------------------------------
# Pallas kernel 1: fused  out = act(A @ B + bias)   (bf16 operands, f32 accum)
# ----------------------------------------------------------------------------
def _mm_bias_kernel(a_ref, b_ref, bias_ref, o_ref, *, apply_relu):
    acc = jnp.dot(a_ref[...], b_ref[...], preferred_element_type=jnp.float32)
    acc = acc + bias_ref[...]                      # (TM, N) + (1, N) broadcast
    if apply_relu:
        acc = jnp.maximum(acc, 0.0)
    o_ref[...] = acc.astype(o_ref.dtype)


def pallas_matmul(a, b, bias=None, relu=False):
    """a: (M, K), b: (K, N), bias: (N,) -> (M, N) float32.  bf16 MXU operands."""
    M, K = a.shape
    K2, N = b.shape
    assert K == K2, (a.shape, b.shape)
    if bias is None:
        bias = jnp.zeros((N,), jnp.float32)
    bias = bias.reshape(1, N).astype(jnp.float32)

    a = a.astype(jnp.bfloat16)
    b = b.astype(jnp.bfloat16)

    # Row tile: keep >=2 parallel grid steps when M is large (v7x has 2 TCs),
    # otherwise one full-M block (avoid paying per-step overhead on tiny work).
    if M >= 256:
        tm = pl.cdiv(pl.cdiv(M, 2), 8) * 8
    else:
        tm = max(8, pl.cdiv(M, 8) * 8)
    m_pad = pl.cdiv(M, tm) * tm
    k_pad = pl.cdiv(K, 8) * 8                      # zero-pad contraction dim (exact)
    if m_pad != M or k_pad != K:
        a = jnp.pad(a, ((0, m_pad - M), (0, k_pad - K)))
    if k_pad != K:
        b = jnp.pad(b, ((0, k_pad - K), (0, 0)))

    out = pl.pallas_call(
        functools.partial(_mm_bias_kernel, apply_relu=relu),
        out_shape=jax.ShapeDtypeStruct((m_pad, N), jnp.float32),
        grid_spec=pltpu.PrefetchScalarGridSpec(
            num_scalar_prefetch=0,
            grid=(m_pad // tm,),
            in_specs=[
                pl.BlockSpec((tm, k_pad), lambda i: (i, 0)),
                pl.BlockSpec((k_pad, N), lambda i: (0, 0)),
                pl.BlockSpec((1, N), lambda i: (0, 0)),
            ],
            out_specs=pl.BlockSpec((tm, N), lambda i: (i, 0)),
        ),
        compiler_params=pltpu.CompilerParams(
            dimension_semantics=("parallel",)),
    )(a, b, bias)
    return out[:M]


# ----------------------------------------------------------------------------
# Pallas kernel 2: fused PSP module + decoder 1x1 conv, one batch element / step
#   pooled = P_all @ feat                         (all 4 pyramid levels stacked)
#   proj   = relu(pooled @ W_all + b_all) * mask  (4 level projections collapsed)
#   branch = U_all @ proj                         (4 bilinear upsamples stacked)
#   dec    = relu(feat @ Wdec_f + branch @ Wdec_b + b_dec)
# ----------------------------------------------------------------------------
def _psp_decoder_kernel(feat_ref, pool_ref, wproj_ref, bproj_ref, mask_ref,
                        up_ref, wdf_ref, wdb_ref, bdec_ref, o_ref):
    feat = feat_ref[0]                                             # (S8, fc) bf16
    pooled = jnp.dot(pool_ref[...], feat,
                     preferred_element_type=jnp.float32)           # (R8, fc)
    proj = jnp.dot(pooled.astype(jnp.bfloat16), wproj_ref[...],
                   preferred_element_type=jnp.float32) + bproj_ref[...]
    proj = jnp.maximum(proj, 0.0) * mask_ref[...]                  # (R8, 4*bc)
    branch = jnp.dot(up_ref[...], proj.astype(jnp.bfloat16),
                     preferred_element_type=jnp.float32)           # (S8, 4*bc)
    dec = (jnp.dot(feat, wdf_ref[...], preferred_element_type=jnp.float32)
           + jnp.dot(branch.astype(jnp.bfloat16), wdb_ref[...],
                     preferred_element_type=jnp.float32)
           + bdec_ref[...])
    o_ref[0] = jnp.maximum(dec, 0.0)


# ----------------------------------------------------------------------------
# Glue helpers (constant-matrix setup / reshapes only; compute stays in Pallas)
# ----------------------------------------------------------------------------
def im2col(x, k, stride, pad):
    """x: (N, H, W, C) NHWC -> (N*oh*ow, k*k*C) patch matrix (pure slicing)."""
    N, H, W, C = x.shape
    xp = jnp.pad(x, ((0, 0), (pad, pad), (pad, pad), (0, 0)))
    oh = (H + 2 * pad - k) // stride + 1
    ow = (W + 2 * pad - k) // stride + 1
    cols = []
    for ki in range(k):
        for kj in range(k):
            cols.append(xp[:, ki:ki + stride * oh:stride,
                              kj:kj + stride * ow:stride, :])
    patches = jnp.concatenate(cols, axis=-1)       # (N, oh, ow, k*k*C)
    return patches.reshape(N * oh * ow, k * k * C), oh, ow


def conv2d(x, w, b, k, stride, pad, relu):
    """x NHWC, w: (k*k*Cin, Cout). Conv lowered to im2col + Pallas matmul."""
    N = x.shape[0]
    cols, oh, ow = im2col(x, k, stride, pad)
    y = pallas_matmul(cols, w, b, relu=relu)
    return y.reshape(N, oh, ow, w.shape[1])


def avg_pool_matrix_1d(out_size, in_size):
    """Adaptive average pooling (clean division) as a (out, in) matrix."""
    # NOTE: assumes in_size % out_size == 0 (true for spatial multiples of 8*6).
    binsz = in_size // out_size
    return jnp.repeat(jnp.eye(out_size, dtype=jnp.float32), binsz, axis=1) / binsz


def linear_interp_matrix_1d(out_size, in_size):
    """Bilinear (align_corners=True, matching nn.UpsamplingBilinear2d / smp PSP)."""
    if in_size == 1:
        return jnp.ones((out_size, 1), jnp.float32)
    src = jnp.arange(out_size, dtype=jnp.float32) * (in_size - 1) / (out_size - 1)
    lo = jnp.floor(src).astype(jnp.int32)
    hi = jnp.minimum(lo + 1, in_size - 1)
    frac = src - lo.astype(jnp.float32)
    cols = jnp.arange(in_size)[None, :]
    m = ((cols == lo[:, None]).astype(jnp.float32) * (1.0 - frac[:, None])
         + (cols == hi[:, None]).astype(jnp.float32) * frac[:, None])
    return m


def psp_decoder(feat, psp_params, dec_params, fh, fw):
    """feat: (N, fh*fw, fc).  Fused PSP pyramid + decoder 1x1 conv -> (N, fh*fw, fc)."""
    N, S, fc = feat.shape
    branch_c = fc // len(POOL_SIZES)
    bc4 = branch_c * len(POOL_SIZES)
    R = sum(s * s for s in POOL_SIZES)
    S8 = pl.cdiv(S, 8) * 8
    R8 = pl.cdiv(R, 8) * 8

    pool_rows, up_cols, mask_rows, w_cols, b_cols = [], [], [], [], []
    for j, s in enumerate(POOL_SIZES):
        pool_rows.append(jnp.kron(avg_pool_matrix_1d(s, fh),
                                  avg_pool_matrix_1d(s, fw)))          # (s*s, S)
        up_cols.append(jnp.kron(linear_interp_matrix_1d(fh, s),
                                linear_interp_matrix_1d(fw, s)))       # (S, s*s)
        m = jnp.zeros((s * s, bc4), jnp.float32)
        mask_rows.append(m.at[:, j * branch_c:(j + 1) * branch_c].set(1.0))
        w, b = psp_params[j]
        w_cols.append(w)
        b_cols.append(b)

    P = jnp.pad(jnp.concatenate(pool_rows, axis=0), ((0, R8 - R), (0, S8 - S)))
    U = jnp.pad(jnp.concatenate(up_cols, axis=1), ((0, S8 - S), (0, R8 - R)))
    mask = jnp.pad(jnp.concatenate(mask_rows, axis=0), ((0, R8 - R), (0, 0)))
    Wp = jnp.concatenate(w_cols, axis=1)                # (fc, 4*bc)
    bp = jnp.concatenate(b_cols, axis=0)                # (4*bc,)
    Wdec, bdec = dec_params                             # (fc + 4*bc, fc), (fc,)
    Wdf, Wdb = Wdec[:fc], Wdec[fc:]

    feat_p = jnp.pad(feat, ((0, 0), (0, S8 - S), (0, 0)))

    out = pl.pallas_call(
        _psp_decoder_kernel,
        out_shape=jax.ShapeDtypeStruct((N, S8, fc), jnp.float32),
        grid_spec=pltpu.PrefetchScalarGridSpec(
            num_scalar_prefetch=0,
            grid=(N,),
            in_specs=[
                pl.BlockSpec((1, S8, fc), lambda b: (b, 0, 0)),   # feat
                pl.BlockSpec((R8, S8), lambda b: (0, 0)),         # stacked pool op
                pl.BlockSpec((fc, bc4), lambda b: (0, 0)),        # stacked 1x1 weights
                pl.BlockSpec((1, bc4), lambda b: (0, 0)),         # stacked bias
                pl.BlockSpec((R8, bc4), lambda b: (0, 0)),        # per-level mask
                pl.BlockSpec((S8, R8), lambda b: (0, 0)),         # stacked upsample op
                pl.BlockSpec((fc, fc), lambda b: (0, 0)),         # decoder W (feat part)
                pl.BlockSpec((bc4, fc), lambda b: (0, 0)),        # decoder W (branch part)
                pl.BlockSpec((1, fc), lambda b: (0, 0)),          # decoder bias
            ],
            out_specs=pl.BlockSpec((1, S8, fc), lambda b: (b, 0, 0)),
        ),
        compiler_params=pltpu.CompilerParams(
            dimension_semantics=("parallel",)),
    )(
        feat_p.astype(jnp.bfloat16),
        P.astype(jnp.bfloat16),
        Wp.astype(jnp.bfloat16),
        bp.reshape(1, bc4).astype(jnp.float32),
        mask.astype(jnp.float32),
        U.astype(jnp.bfloat16),
        Wdf.astype(jnp.bfloat16),
        Wdb.astype(jnp.bfloat16),
        bdec.reshape(1, fc).astype(jnp.float32),
    )
    return out[:, :S, :]


# ----------------------------------------------------------------------------
# Parameter init (deterministic, synthetic)
# ----------------------------------------------------------------------------
def init_params(key, in_channels, out_channels):
    def dense(key, fan_in, fan_out, scale=0.1):
        kw, kb = jax.random.split(key)
        w = jax.random.normal(kw, (fan_in, fan_out), jnp.float32) * scale
        b = jax.random.normal(kb, (fan_out,), jnp.float32) * 0.01
        return w, b

    keys = jax.random.split(key, 3 + len(POOL_SIZES) + 2)
    params = {}

    # Encoder: 3x 3x3 stride-2 conv + ReLU (stand-in for resnet50 depth-3 encoder).
    enc, cin = [], in_channels
    for i, cout in enumerate(ENC_CH):
        enc.append(dense(keys[i], 9 * cin, cout))
        cin = cout
    params["enc"] = enc

    fc = ENC_CH[-1]
    branch_c = fc // len(POOL_SIZES)  # smp: in_channels // len(sizes)

    # PSP branches: 1x1 conv (+ folded BatchNorm) per pyramid level.
    psp = []
    for j in range(len(POOL_SIZES)):
        w, b = dense(keys[3 + j], fc, branch_c)
        psp.append((w * BN_FOLD, b * BN_FOLD))
    params["psp"] = psp

    # Decoder 1x1 conv: (fc + 4*branch_c) -> fc (+ folded BN).
    w, b = dense(keys[3 + len(POOL_SIZES)], fc + len(POOL_SIZES) * branch_c, fc)
    params["dec"] = (w * BN_FOLD, b * BN_FOLD)

    # Segmentation head: 3x3 conv fc -> out_channels.
    params["head"] = dense(keys[4 + len(POOL_SIZES)], 9 * fc, out_channels)
    return params


# ----------------------------------------------------------------------------
# Forward pass (PSPNet semantics: encode /8 -> pyramid pool -> fuse -> head -> x8)
# ----------------------------------------------------------------------------
def _pspnet_forward(params, x_nchw):
    x = jnp.transpose(x_nchw, (0, 2, 3, 1)).astype(jnp.float32)   # NCHW -> NHWC
    N, H, W, _ = x.shape

    # Encoder: output stride 8.
    f = x
    for (w, b) in params["enc"]:
        f = conv2d(f, w, b, k=3, stride=2, pad=1, relu=True)
    fh, fw, fc = f.shape[1], f.shape[2], f.shape[3]
    feat = f.reshape(N, fh * fw, fc)

    # Fused PSP pyramid pooling module + decoder 1x1 conv (+BN+ReLU), single kernel.
    dec = psp_decoder(feat, params["psp"], params["dec"], fh, fw)  # (N, fh*fw, fc)
    dec = dec.reshape(N, fh, fw, fc)
    # TODO(synk): Dropout2d(p=0.2) omitted — eval-mode identity.

    # Segmentation head: 3x3 conv -> bilinear upsample x8 (align_corners=True).
    w, b = params["head"]
    logits = conv2d(dec, w, b, k=3, stride=1, pad=1, relu=False)   # (N, fh, fw, out_c)
    out_c = logits.shape[-1]

    # Lane-dense final upsample: (N*out_c, fh*fw) @ (fh*fw, H*W) so the output
    # last dim is H*W (multiple of 128) and reshapes directly to NCHW.
    up_t = jnp.kron(linear_interp_matrix_1d(H, fh),
                    linear_interp_matrix_1d(W, fw)).T              # (fh*fw, H*W)
    logits_cf = jnp.transpose(logits, (0, 3, 1, 2)).reshape(N * out_c, fh * fw)
    y = pallas_matmul(logits_cf, up_t)                             # (N*out_c, H*W)
    return y.reshape(N, out_c, H, W)                               # NCHW


pspnet_forward = jax.jit(_pspnet_forward)


# ----------------------------------------------------------------------------
if __name__ == "__main__":
    in_channels, out_channels = 4, 3
    batch, spatial = 2, 48  # divisible by 8*6 so the PSP levels (1,2,3,6) divide cleanly

    key = jax.random.PRNGKey(0)
    k_params, k_x = jax.random.split(key)
    params = init_params(k_params, in_channels, out_channels)
    x = jax.random.normal(k_x, (batch, in_channels, spatial, spatial), jnp.float32)

    y = pspnet_forward(params, x)
    y = jax.block_until_ready(y)
    assert y.shape == (batch, out_channels, spatial, spatial), y.shape
    assert jnp.all(jnp.isfinite(y))
    print("KERNEL_OK")
</pallas_src>

<mosaic_0001>
module attributes {stable_mosaic.version = 11 : i64} {
  func.func @_mm_bias_kernel(%arg0: i32, %arg1: memref<576x40xbf16, #tpu.memory_space<vmem>>, %arg2: memref<40x16xbf16, #tpu.memory_space<vmem>>, %arg3: memref<1x16xf32, #tpu.memory_space<vmem>>, %arg4: memref<576x16xf32, #tpu.memory_space<vmem>>) attributes {dimension_semantics = [#tpu.dimension_semantics<parallel>], iteration_bounds = array<i64: 2>, scalar_prefetch = 0 : i64, scratch_operands = 0 : i64, tpu.core_type = #tpu.core_type<tc>, window_params = [{transform_indices = @transform_0, window_bounds = array<i64: 576, 40>}, {pipeline_mode = #tpu.pipeline_mode<synchronous>, transform_indices = @transform_1, window_bounds = array<i64: 40, 16>}, {pipeline_mode = #tpu.pipeline_mode<synchronous>, transform_indices = @transform_2, window_bounds = array<i64: 1, 16>}, {transform_indices = @transform_3, window_bounds = array<i64: 576, 16>}]} {
    %c0 = arith.constant 0 : index
    %c0_0 = arith.constant 0 : index
    %0 = vector.load %arg1[%c0, %c0_0] : memref<576x40xbf16, #tpu.memory_space<vmem>>, vector<576x40xbf16>
    %c0_1 = arith.constant 0 : index
    %c0_2 = arith.constant 0 : index
    %1 = vector.load %arg2[%c0_1, %c0_2] : memref<40x16xbf16, #tpu.memory_space<vmem>>, vector<40x16xbf16>
    %cst = arith.constant dense<0.000000e+00> : vector<576x16xf32>
    %2 = tpu.matmul %0, %1, %cst {dimension_numbers = #tpu.dot_dimension_numbers<[1], [0], [0], [1], [0, 0, 1, 1], [], []>} : vector<576x40xbf16>, vector<40x16xbf16>, vector<576x16xf32> -> vector<576x16xf32>
    %c0_3 = arith.constant 0 : index
    %c0_4 = arith.constant 0 : index
    %3 = vector.load %arg3[%c0_3, %c0_4] : memref<1x16xf32, #tpu.memory_space<vmem>>, vector<1x16xf32>
    %4 = vector.broadcast %3 : vector<1x16xf32> to vector<576x16xf32>
    %5 = arith.addf %2, %4 : vector<576x16xf32>
    %cst_5 = arith.constant 0.000000e+00 : f32
    %6 = vector.broadcast %cst_5 : f32 to vector<576x16xf32>
    %7 = arith.maximumf %5, %6 : vector<576x16xf32>
    %c0_6 = arith.constant 0 : index
    %c0_7 = arith.constant 0 : index
    %8 = vector.load %arg4[%c0_6, %c0_7] : memref<576x16xf32, #tpu.memory_space<vmem>>, vector<576x16xf32>
    tpu.vector_store %arg4[%c0_6, %c0_7], %7 {strides = array<i32>} : memref<576x16xf32, #tpu.memory_space<vmem>>, vector<576x16xf32>,
    return
  }
  func.func @transform_0(%arg0: i32) -> (i32, i32) {
    %c0_i32 = arith.constant 0 : i32
    %c0_i32_0 = arith.constant 0 : i32
    return %arg0, %c0_i32 : i32, i32
  }
  func.func @transform_1(%arg0: i32) -> (i32, i32) {
    %c0_i32 = arith.constant 0 : i32
    %c0_i32_0 = arith.constant 0 : i32
    %c0_i32_1 = arith.constant 0 : i32
    return %c0_i32, %c0_i32_0 : i32, i32
  }
  func.func @transform_2(%arg0: i32) -> (i32, i32) {
    %c0_i32 = arith.constant 0 : i32
    %c0_i32_0 = arith.constant 0 : i32
    %c0_i32_1 = arith.constant 0 : i32
    return %c0_i32, %c0_i32_0 : i32, i32
  }
  func.func @transform_3(%arg0: i32) -> (i32, i32) {
    %c0_i32 = arith.constant 0 : i32
    %c0_i32_0 = arith.constant 0 : i32
    return %arg0, %c0_i32 : i32, i32
  }
}

module attributes {stable_mosaic.version = 11 : i64} {
  func.func @_mm_bias_kernel(%arg0: i32, %arg1: memref<144x144xbf16, #tpu.memory_space<vmem>>, %arg2: memref<144x32xbf16, #tpu.memory_space<vmem>>, %arg3: memref<1x32xf32, #tpu.memory_space<vmem>>, %arg4: memref<144x32xf32, #tpu.memory_space<vmem>>) attributes {dimension_semantics = [#tpu.dimension_semantics<parallel>], iteration_bounds = array<i64: 2>, scalar_prefetch = 0 : i64, scratch_operands = 0 : i64, tpu.core_type = #tpu.core_type<tc>, window_params = [{transform_indices = @transform_0, window_bounds = array<i64: 144, 144>}, {pipeline_mode = #tpu.pipeline_mode<synchronous>, transform_indices = @transform_1, window_bounds = array<i64: 144, 32>}, {pipeline_mode = #tpu.pipeline_mode<synchronous>, transform_indices = @transform_2, window_bounds = array<i64: 1, 32>}, {transform_indices = @transform_3, window_bounds = array<i64: 144, 32>}]} {
    %c0 = arith.constant 0 : index
    %c0_0 = arith.constant 0 : index
    %0 = vector.load %arg1[%c0, %c0_0] : memref<144x144xbf16, #tpu.memory_space<vmem>>, vector<144x144xbf16>
    %c0_1 = arith.constant 0 : index
    %c0_2 = arith.constant 0 : index
    %1 = vector.load %arg2[%c0_1, %c0_2] : memref<144x32xbf16, #tpu.memory_space<vmem>>, vector<144x32xbf16>
    %cst = arith.constant dense<0.000000e+00> : vector<144x32xf32>
    %2 = tpu.matmul %0, %1, %cst {dimension_numbers = #tpu.dot_dimension_numbers<[1], [0], [0], [1], [0, 0, 1, 1], [], []>} : vector<144x144xbf16>, vector<144x32xbf16>, vector<144x32xf32> -> vector<144x32xf32>
    %c0_3 = arith.constant 0 : index
    %c0_4 = arith.constant 0 : index
    %3 = vector.load %arg3[%c0_3, %c0_4] : memref<1x32xf32, #tpu.memory_space<vmem>>, vector<1x32xf32>
    %4 = vector.broadcast %3 : vector<1x32xf32> to vector<144x32xf32>
    %5 = arith.addf %2, %4 : vector<144x32xf32>
    %cst_5 = arith.constant 0.000000e+00 : f32
    %6 = vector.broadcast %cst_5 : f32 to vector<144x32xf32>
    %7 = arith.maximumf %5, %6 : vector<144x32xf32>
    %c0_6 = arith.constant 0 : index
    %c0_7 = arith.constant 0 : index
    %8 = vector.load %arg4[%c0_6, %c0_7] : memref<144x32xf32, #tpu.memory_space<vmem>>, vector<144x32xf32>
    tpu.vector_store %arg4[%c0_6, %c0_7], %7 {strides = array<i32>} : memref<144x32xf32, #tpu.memory_space<vmem>>, vector<144x32xf32>,
    return
  }
  func.func @transform_0(%arg0: i32) -> (i32, i32) {
    %c0_i32 = arith.constant 0 : i32
    %c0_i32_0 = arith.constant 0 : i32
    return %arg0, %c0_i32 : i32, i32
  }
  func.func @transform_1(%arg0: i32) -> (i32, i32) {
    %c0_i32 = arith.constant 0 : i32
    %c0_i32_0 = arith.constant 0 : i32
    %c0_i32_1 = arith.constant 0 : i32
    return %c0_i32, %c0_i32_0 : i32, i32
  }
  func.func @transform_2(%arg0: i32) -> (i32, i32) {
    %c0_i32 = arith.constant 0 : i32
    %c0_i32_0 = arith.constant 0 : i32
    %c0_i32_1 = arith.constant 0 : i32
    return %c0_i32, %c0_i32_0 : i32, i32
  }
  func.func @transform_3(%arg0: i32) -> (i32, i32) {
    %c0_i32 = arith.constant 0 : i32
    %c0_i32_0 = arith.constant 0 : i32
    return %arg0, %c0_i32 : i32, i32
  }
}

module attributes {stable_mosaic.version = 11 : i64} {
  func.func @_mm_bias_kernel(%arg0: i32, %arg1: memref<72x288xbf16, #tpu.memory_space<vmem>>, %arg2: memref<288x64xbf16, #tpu.memory_space<vmem>>, %arg3: memref<1x64xf32, #tpu.memory_space<vmem>>, %arg4: memref<72x64xf32, #tpu.memory_space<vmem>>) attributes {dimension_semantics = [#tpu.dimension_semantics<parallel>], iteration_bounds = array<i64: 1>, scalar_prefetch = 0 : i64, scratch_operands = 0 : i64, tpu.core_type = #tpu.core_type<tc>, window_params = [{transform_indices = @transform_0, window_bounds = array<i64: 72, 288>}, {pipeline_mode = #tpu.pipeline_mode<synchronous>, transform_indices = @transform_1, window_bounds = array<i64: 288, 64>}, {pipeline_mode = #tpu.pipeline_mode<synchronous>, transform_indices = @transform_2, window_bounds = array<i64: 1, 64>}, {transform_indices = @transform_3, window_bounds = array<i64: 72, 64>}]} {
    %c0 = arith.constant 0 : index
    %c0_0 = arith.constant 0 : index
    %0 = vector.load %arg1[%c0, %c0_0] : memref<72x288xbf16, #tpu.memory_space<vmem>>, vector<72x288xbf16>
    %c0_1 = arith.constant 0 : index
    %c0_2 = arith.constant 0 : index
    %1 = vector.load %arg2[%c0_1, %c0_2] : memref<288x64xbf16, #tpu.memory_space<vmem>>, vector<288x64xbf16>
    %cst = arith.constant dense<0.000000e+00> : vector<72x64xf32>
    %2 = tpu.matmul %0, %1, %cst {dimension_numbers = #tpu.dot_dimension_numbers<[1], [0], [0], [1], [0, 0, 1, 1], [], []>} : vector<72x288xbf16>, vector<288x64xbf16>, vector<72x64xf32> -> vector<72x64xf32>
    %c0_3 = arith.constant 0 : index
    %c0_4 = arith.constant 0 : index
    %3 = vector.load %arg3[%c0_3, %c0_4] : memref<1x64xf32, #tpu.memory_space<vmem>>, vector<1x64xf32>
    %4 = vector.broadcast %3 : vector<1x64xf32> to vector<72x64xf32>
    %5 = arith.addf %2, %4 : vector<72x64xf32>
    %cst_5 = arith.constant 0.000000e+00 : f32
    %6 = vector.broadcast %cst_5 : f32 to vector<72x64xf32>
    %7 = arith.maximumf %5, %6 : vector<72x64xf32>
    %c0_6 = arith.constant 0 : index
    %c0_7 = arith.constant 0 : index
    %8 = vector.load %arg4[%c0_6, %c0_7] : memref<72x64xf32, #tpu.memory_space<vmem>>, vector<72x64xf32>
    tpu.vector_store %arg4[%c0_6, %c0_7], %7 {strides = array<i32>} : memref<72x64xf32, #tpu.memory_space<vmem>>, vector<72x64xf32>,
    return
  }
  func.func @transform_0(%arg0: i32) -> (i32, i32) {
    %c0_i32 = arith.constant 0 : i32
    %c0_i32_0 = arith.constant 0 : i32
    return %arg0, %c0_i32 : i32, i32
  }
  func.func @transform_1(%arg0: i32) -> (i32, i32) {
    %c0_i32 = arith.constant 0 : i32
    %c0_i32_0 = arith.constant 0 : i32
    %c0_i32_1 = arith.constant 0 : i32
    return %c0_i32, %c0_i32_0 : i32, i32
  }
  func.func @transform_2(%arg0: i32) -> (i32, i32) {
    %c0_i32 = arith.constant 0 : i32
    %c0_i32_0 = arith.constant 0 : i32
    %c0_i32_1 = arith.constant 0 : i32
    return %c0_i32, %c0_i32_0 : i32, i32
  }
  func.func @transform_3(%arg0: i32) -> (i32, i32) {
    %c0_i32 = arith.constant 0 : i32
    %c0_i32_0 = arith.constant 0 : i32
    return %arg0, %c0_i32 : i32, i32
  }
}

module attributes {stable_mosaic.version = 11 : i64} {
  func.func @_psp_decoder_kernel(%arg0: i32, %arg1: memref<1x40x64xbf16, #tpu.memory_space<vmem>>, %arg2: memref<56x40xbf16, #tpu.memory_space<vmem>>, %arg3: memref<64x64xbf16, #tpu.memory_space<vmem>>, %arg4: memref<1x64xf32, #tpu.memory_space<vmem>>, %arg5: memref<56x64xf32, #tpu.memory_space<vmem>>, %arg6: memref<40x56xbf16, #tpu.memory_space<vmem>>, %arg7: memref<64x64xbf16, #tpu.memory_space<vmem>>, %arg8: memref<64x64xbf16, #tpu.memory_space<vmem>>, %arg9: memref<1x64xf32, #tpu.memory_space<vmem>>, %arg10: memref<1x40x64xf32, #tpu.memory_space<vmem>>) attributes {dimension_semantics = [#tpu.dimension_semantics<parallel>], iteration_bounds = array<i64: 2>, scalar_prefetch = 0 : i64, scratch_operands = 0 : i64, tpu.core_type = #tpu.core_type<tc>, window_params = [{transform_indices = @transform_0, window_bounds = array<i64: 1, 40, 64>}, {pipeline_mode = #tpu.pipeline_mode<synchronous>, transform_indices = @transform_1, window_bounds = array<i64: 56, 40>}, {pipeline_mode = #tpu.pipeline_mode<synchronous>, transform_indices = @transform_2, window_bounds = array<i64: 64, 64>}, {pipeline_mode = #tpu.pipeline_mode<synchronous>, transform_indices = @transform_3, window_bounds = array<i64: 1, 64>}, {pipeline_mode = #tpu.pipeline_mode<synchronous>, transform_indices = @transform_4, window_bounds = array<i64: 56, 64>}, {pipeline_mode = #tpu.pipeline_mode<synchronous>, transform_indices = @transform_5, window_bounds = array<i64: 40, 56>}, {pipeline_mode = #tpu.pipeline_mode<synchronous>, transform_indices = @transform_6, window_bounds = array<i64: 64, 64>}, {pipeline_mode = #tpu.pipeline_mode<synchronous>, transform_indices = @transform_7, window_bounds = array<i64: 64, 64>}, {pipeline_mode = #tpu.pipeline_mode<synchronous>, transform_indices = @transform_8, window_bounds = array<i64: 1, 64>}, {transform_indices = @transform_9, window_bounds = array<i64: 1, 40, 64>}]} {
    %c0 = arith.constant 0 : index
    %c0_0 = arith.constant 0 : index
    %c0_1 = arith.constant 0 : index
    %0 = vector.load %arg1[%c0, %c0_0, %c0_1] : memref<1x40x64xbf16, #tpu.memory_space<vmem>>, vector<1x40x64xbf16>
    %1 = vector.shape_cast %0 : vector<1x40x64xbf16> to vector<40x64xbf16>
    %c0_2 = arith.constant 0 : index
    %c0_3 = arith.constant 0 : index
    %2 = vector.load %arg2[%c0_2, %c0_3] : memref<56x40xbf16, #tpu.memory_space<vmem>>, vector<56x40xbf16>
    %cst = arith.constant dense<0.000000e+00> : vector<56x64xf32>
    %3 = tpu.matmul %2, %1, %cst {dimension_numbers = #tpu.dot_dimension_numbers<[1], [0], [0], [1], [0, 0, 1, 1], [], []>} : vector<56x40xbf16>, vector<40x64xbf16>, vector<56x64xf32> -> vector<56x64xf32>
    %4 = arith.truncf %3 : vector<56x64xf32> to vector<56x64xbf16>
    %c0_4 = arith.constant 0 : index
    %c0_5 = arith.constant 0 : index
    %5 = vector.load %arg3[%c0_4, %c0_5] : memref<64x64xbf16, #tpu.memory_space<vmem>>, vector<64x64xbf16>
    %cst_6 = arith.constant dense<0.000000e+00> : vector<56x64xf32>
    %6 = tpu.matmul %4, %5, %cst_6 {dimension_numbers = #tpu.dot_dimension_numbers<[1], [0], [0], [1], [0, 0, 1, 1], [], []>} : vector<56x64xbf16>, vector<64x64xbf16>, vector<56x64xf32> -> vector<56x64xf32>
    %c0_7 = arith.constant 0 : index
    %c0_8 = arith.constant 0 : index
    %7 = vector.load %arg4[%c0_7, %c0_8] : memref<1x64xf32, #tpu.memory_space<vmem>>, vector<1x64xf32>
    %8 = vector.broadcast %7 : vector<1x64xf32> to vector<56x64xf32>
    %9 = arith.addf %6, %8 : vector<56x64xf32>
    %cst_9 = arith.constant 0.000000e+00 : f32
    %10 = vector.broadcast %cst_9 : f32 to vector<56x64xf32>
    %11 = arith.maximumf %9, %10 : vector<56x64xf32>
    %c0_10 = arith.constant 0 : index
    %c0_11 = arith.constant 0 : index
    %12 = vector.load %arg5[%c0_10, %c0_11] : memref<56x64xf32, #tpu.memory_space<vmem>>, vector<56x64xf32>
    %13 = arith.mulf %11, %12 : vector<56x64xf32>
    %c0_12 = arith.constant 0 : index
    %c0_13 = arith.constant 0 : index
    %14 = vector.load %arg6[%c0_12, %c0_13] : memref<40x56xbf16, #tpu.memory_space<vmem>>, vector<40x56xbf16>
    %15 = arith.truncf %13 : vector<56x64xf32> to vector<56x64xbf16>
    %cst_14 = arith.constant dense<0.000000e+00> : vector<40x64xf32>
    %16 = tpu.matmul %14, %15, %cst_14 {dimension_numbers = #tpu.dot_dimension_numbers<[1], [0], [0], [1], [0, 0, 1, 1], [], []>} : vector<40x56xbf16>, vector<56x64xbf16>, vector<40x64xf32> -> vector<40x64xf32>
    %c0_15 = arith.constant 0 : index
    %c0_16 = arith.constant 0 : index
    %17 = vector.load %arg7[%c0_15, %c0_16] : memref<64x64xbf16, #tpu.memory_space<vmem>>, vector<64x64xbf16>
    %cst_17 = arith.constant dense<0.000000e+00> : vector<40x64xf32>
    %18 = tpu.matmul %1, %17, %cst_17 {dimension_numbers = #tpu.dot_dimension_numbers<[1], [0], [0], [1], [0, 0, 1, 1], [], []>} : vector<40x64xbf16>, vector<64x64xbf16>, vector<40x64xf32> -> vector<40x64xf32>
    %19 = arith.truncf %16 : vector<40x64xf32> to vector<40x64xbf16>
    %c0_18 = arith.constant 0 : index
    %c0_19 = arith.constant 0 : index
    %20 = vector.load %arg8[%c0_18, %c0_19] : memref<64x64xbf16, #tpu.memory_space<vmem>>, vector<64x64xbf16>
    %cst_20 = arith.constant dense<0.000000e+00> : vector<40x64xf32>
    %21 = tpu.matmul %19, %20, %cst_20 {dimension_numbers = #tpu.dot_dimension_numbers<[1], [0], [0], [1], [0, 0, 1, 1], [], []>} : vector<40x64xbf16>, vector<64x64xbf16>, vector<40x64xf32> -> vector<40x64xf32>
    %22 = arith.addf %18, %21 : vector<40x64xf32>
    %c0_21 = arith.constant 0 : index
    %c0_22 = arith.constant 0 : index
    %23 = vector.load %arg9[%c0_21, %c0_22] : memref<1x64xf32, #tpu.memory_space<vmem>>, vector<1x64xf32>
    %24 = vector.broadcast %23 : vector<1x64xf32> to vector<40x64xf32>
    %25 = arith.addf %22, %24 : vector<40x64xf32>
    %cst_23 = arith.constant 0.000000e+00 : f32
    %26 = vector.broadcast %cst_23 : f32 to vector<40x64xf32>
    %27 = arith.maximumf %25, %26 : vector<40x64xf32>
    %c0_24 = arith.constant 0 : index
    %c0_25 = arith.constant 0 : index
    %c0_26 = arith.constant 0 : index
    %28 = vector.load %arg10[%c0_24, %c0_25, %c0_26] : memref<1x40x64xf32, #tpu.memory_space<vmem>>, vector<1x40x64xf32>
    %29 = vector.shape_cast %28 : vector<1x40x64xf32> to vector<40x64xf32>
    %30 = vector.shape_cast %27 : vector<40x64xf32> to vector<1x40x64xf32>
    tpu.vector_store %arg10[%c0_24, %c0_25, %c0_26], %30 {strides = array<i32>} : memref<1x40x64xf32, #tpu.memory_space<vmem>>, vector<1x40x64xf32>,
    return
  }
  func.func @transform_0(%arg0: i32) -> (i32, i32, i32) {
    %c0_i32 = arith.constant 0 : i32
    %c0_i32_0 = arith.constant 0 : i32
    %c0_i32_1 = arith.constant 0 : i32
    return %arg0, %c0_i32, %c0_i32_0 : i32, i32, i32
  }
  func.func @transform_1(%arg0: i32) -> (i32, i32) {
    %c0_i32 = arith.constant 0 : i32
    %c0_i32_0 = arith.constant 0 : i32
    %c0_i32_1 = arith.constant 0 : i32
    return %c0_i32, %c0_i32_0 : i32, i32
  }
  func.func @transform_2(%arg0: i32) -> (i32, i32) {
    %c0_i32 = arith.constant 0 : i32
    %c0_i32_0 = arith.constant 0 : i32
    %c0_i32_1 = arith.constant 0 : i32
    return %c0_i32, %c0_i32_0 : i32, i32
  }
  func.func @transform_3(%arg0: i32) -> (i32, i32) {
    %c0_i32 = arith.constant 0 : i32
    %c0_i32_0 = arith.constant 0 : i32
    %c0_i32_1 = arith.constant 0 : i32
    return %c0_i32, %c0_i32_0 : i32, i32
  }
  func.func @transform_4(%arg0: i32) -> (i32, i32) {
    %c0_i32 = arith.constant 0 : i32
    %c0_i32_0 = arith.constant 0 : i32
    %c0_i32_1 = arith.constant 0 : i32
    return %c0_i32, %c0_i32_0 : i32, i32
  }
  func.func @transform_5(%arg0: i32) -> (i32, i32) {
    %c0_i32 = arith.constant 0 : i32
    %c0_i32_0 = arith.constant 0 : i32
    %c0_i32_1 = arith.constant 0 : i32
    return %c0_i32, %c0_i32_0 : i32, i32
  }
  func.func @transform_6(%arg0: i32) -> (i32, i32) {
    %c0_i32 = arith.constant 0 : i32
    %c0_i32_0 = arith.constant 0 : i32
    %c0_i32_1 = arith.constant 0 : i32
    return %c0_i32, %c0_i32_0 : i32, i32
  }
  func.func @transform_7(%arg0: i32) -> (i32, i32) {
    %c0_i32 = arith.constant 0 : i32
    %c0_i32_0 = arith.constant 0 : i32
    %c0_i32_1 = arith.constant 0 : i32
    return %c0_i32, %c0_i32_0 : i32, i32
  }
  func.func @transform_8(%arg0: i32) -> (i32, i32) {
    %c0_i32 = arith.constant 0 : i32
    %c0_i32_0 = arith.constant 0 : i32
    %c0_i32_1 = arith.constant 0 : i32
    return %c0_i32, %c0_i32_0 : i32, i32
  }
  func.func @transform_9(%arg0: i32) -> (i32, i32, i32) {
    %c0_i32 = arith.constant 0 : i32
    %c0_i32_0 = arith.constant 0 : i32
    %c0_i32_1 = arith.constant 0 : i32
    return %arg0, %c0_i32, %c0_i32_0 : i32, i32, i32
  }
}

module attributes {stable_mosaic.version = 11 : i64} {
  func.func @_mm_bias_kernel(%arg0: i32, %arg1: memref<72x576xbf16, #tpu.memory_space<vmem>>, %arg2: memref<576x3xbf16, #tpu.memory_space<vmem>>, %arg3: memref<1x3xf32, #tpu.memory_space<vmem>>, %arg4: memref<72x3xf32, #tpu.memory_space<vmem>>) attributes {dimension_semantics = [#tpu.dimension_semantics<parallel>], iteration_bounds = array<i64: 1>, scalar_prefetch = 0 : i64, scratch_operands = 0 : i64, tpu.core_type = #tpu.core_type<tc>, window_params = [{transform_indices = @transform_0, window_bounds = array<i64: 72, 576>}, {pipeline_mode = #tpu.pipeline_mode<synchronous>, transform_indices = @transform_1, window_bounds = array<i64: 576, 3>}, {pipeline_mode = #tpu.pipeline_mode<synchronous>, transform_indices = @transform_2, window_bounds = array<i64: 1, 3>}, {transform_indices = @transform_3, window_bounds = array<i64: 72, 3>}]} {
    %c0 = arith.constant 0 : index
    %c0_0 = arith.constant 0 : index
    %0 = vector.load %arg1[%c0, %c0_0] : memref<72x576xbf16, #tpu.memory_space<vmem>>, vector<72x576xbf16>
    %c0_1 = arith.constant 0 : index
    %c0_2 = arith.constant 0 : index
    %1 = vector.load %arg2[%c0_1, %c0_2] : memref<576x3xbf16, #tpu.memory_space<vmem>>, vector<576x3xbf16>
    %cst = arith.constant dense<0.000000e+00> : vector<72x3xf32>
    %2 = tpu.matmul %0, %1, %cst {dimension_numbers = #tpu.dot_dimension_numbers<[1], [0], [0], [1], [0, 0, 1, 1], [], []>} : vector<72x576xbf16>, vector<576x3xbf16>, vector<72x3xf32> -> vector<72x3xf32>
    %c0_3 = arith.constant 0 : index
    %c0_4 = arith.constant 0 : index
    %3 = vector.load %arg3[%c0_3, %c0_4] : memref<1x3xf32, #tpu.memory_space<vmem>>, vector<1x3xf32>
    %4 = vector.broadcast %3 : vector<1x3xf32> to vector<72x3xf32>
    %5 = arith.addf %2, %4 : vector<72x3xf32>
    %c0_5 = arith.constant 0 : index
    %c0_6 = arith.constant 0 : index
    %6 = vector.load %arg4[%c0_5, %c0_6] : memref<72x3xf32, #tpu.memory_space<vmem>>, vector<72x3xf32>
    tpu.vector_store %arg4[%c0_5, %c0_6], %5 {strides = array<i32>} : memref<72x3xf32, #tpu.memory_space<vmem>>, vector<72x3xf32>,
    return
  }
  func.func @transform_0(%arg0: i32) -> (i32, i32) {
    %c0_i32 = arith.constant 0 : i32
    %c0_i32_0 = arith.constant 0 : i32
    return %arg0, %c0_i32 : i32, i32
  }
  func.func @transform_1(%arg0: i32) -> (i32, i32) {
    %c0_i32 = arith.constant 0 : i32
    %c0_i32_0 = arith.constant 0 : i32
    %c0_i32_1 = arith.constant 0 : i32
    return %c0_i32, %c0_i32_0 : i32, i32
  }
  func.func @transform_2(%arg0: i32) -> (i32, i32) {
    %c0_i32 = arith.constant 0 : i32
    %c0_i32_0 = arith.constant 0 : i32
    %c0_i32_1 = arith.constant 0 : i32
    return %c0_i32, %c0_i32_0 : i32, i32
  }
  func.func @transform_3(%arg0: i32) -> (i32, i32) {
    %c0_i32 = arith.constant 0 : i32
    %c0_i32_0 = arith.constant 0 : i32
    return %arg0, %c0_i32 : i32, i32
  }
}

module attributes {stable_mosaic.version = 11 : i64} {
  func.func @_mm_bias_kernel(%arg0: i32, %arg1: memref<8x40xbf16, #tpu.memory_space<vmem>>, %arg2: memref<40x2304xbf16, #tpu.memory_space<vmem>>, %arg3: memref<1x2304xf32, #tpu.memory_space<vmem>>, %arg4: memref<8x2304xf32, #tpu.memory_space<vmem>>) attributes {dimension_semantics = [#tpu.dimension_semantics<parallel>], iteration_bounds = array<i64: 1>, scalar_prefetch = 0 : i64, scratch_operands = 0 : i64, tpu.core_type = #tpu.core_type<tc>, window_params = [{transform_indices = @transform_0, window_bounds = array<i64: 8, 40>}, {pipeline_mode = #tpu.pipeline_mode<synchronous>, transform_indices = @transform_1, window_bounds = array<i64: 40, 2304>}, {pipeline_mode = #tpu.pipeline_mode<synchronous>, transform_indices = @transform_2, window_bounds = array<i64: 1, 2304>}, {transform_indices = @transform_3, window_bounds = array<i64: 8, 2304>}]} {
    %c0 = arith.constant 0 : index
    %c0_0 = arith.constant 0 : index
    %0 = vector.load %arg1[%c0, %c0_0] : memref<8x40xbf16, #tpu.memory_space<vmem>>, vector<8x40xbf16>
    %c0_1 = arith.constant 0 : index
    %c0_2 = arith.constant 0 : index
    %1 = vector.load %arg2[%c0_1, %c0_2] : memref<40x2304xbf16, #tpu.memory_space<vmem>>, vector<40x2304xbf16>
    %cst = arith.constant dense<0.000000e+00> : vector<8x2304xf32>
    %2 = tpu.matmul %0, %1, %cst {dimension_numbers = #tpu.dot_dimension_numbers<[1], [0], [0], [1], [0, 0, 1, 1], [], []>} : vector<8x40xbf16>, vector<40x2304xbf16>, vector<8x2304xf32> -> vector<8x2304xf32>
    %c0_3 = arith.constant 0 : index
    %c0_4 = arith.constant 0 : index
    %3 = vector.load %arg3[%c0_3, %c0_4] : memref<1x2304xf32, #tpu.memory_space<vmem>>, vector<1x2304xf32>
    %4 = vector.broadcast %3 : vector<1x2304xf32> to vector<8x2304xf32>
    %5 = arith.addf %2, %4 : vector<8x2304xf32>
    %c0_5 = arith.constant 0 : index
    %c0_6 = arith.constant 0 : index
    %6 = vector.load %arg4[%c0_5, %c0_6] : memref<8x2304xf32, #tpu.memory_space<vmem>>, vector<8x2304xf32>
    tpu.vector_store %arg4[%c0_5, %c0_6], %5 {strides = array<i32>} : memref<8x2304xf32, #tpu.memory_space<vmem>>, vector<8x2304xf32>,
    return
  }
  func.func @transform_0(%arg0: i32) -> (i32, i32) {
    %c0_i32 = arith.constant 0 : i32
    %c0_i32_0 = arith.constant 0 : i32
    return %arg0, %c0_i32 : i32, i32
  }
  func.func @transform_1(%arg0: i32) -> (i32, i32) {
    %c0_i32 = arith.constant 0 : i32
    %c0_i32_0 = arith.constant 0 : i32
    %c0_i32_1 = arith.constant 0 : i32
    return %c0_i32, %c0_i32_0 : i32, i32
  }
  func.func @transform_2(%arg0: i32) -> (i32, i32) {
    %c0_i32 = arith.constant 0 : i32
    %c0_i32_0 = arith.constant 0 : i32
    %c0_i32_1 = arith.constant 0 : i32
    return %c0_i32, %c0_i32_0 : i32, i32
  }
  func.func @transform_3(%arg0: i32) -> (i32, i32) {
    %c0_i32 = arith.constant 0 : i32
    %c0_i32_0 = arith.constant 0 : i32
    return %arg0, %c0_i32 : i32, i32
  }
}

</mosaic_0001>

<llo_original>
// kernel: _pspnet_forward.6
$region0: #{_pspnet_forward.6}
  #allocation0 [shape = 'u32[]', space=smem, size = 0x4, offset = 0x4, fixed_abs, tag = 'smem constant byte address 0x4 - core index']
  #allocation1 [shape = 'u32[72,128]{1,0:T(1,128)}', space=vmem, size = 0x9000, scoped, tag = 'internal scratch']
  %s0 = inlined_call_operand.vmem [shape: bf16[1152,40], index: 0, kind: input, shape index: {}]
  %s1 = inlined_call_operand.vmem [shape: bf16[40,16], index: 1, kind: input, shape index: {}]
  %s2 = inlined_call_operand.vmem [shape: f32[1,16], index: 2, kind: input, shape index: {}]
  %s3 = inlined_call_operand.vmem [shape: f32[1152,16], index: 3, kind: output, shape index: {}]
  %s4 = sld [smem:[#allocation0]]
  $region45: #{_pspnet_forward.6} parent=0
    _
  %s6 = ssub.s32 1, %s4
  %s7 = scalar_select 0, %s6, %s4
  loop: start=0, step=1, limit=4
  $region2: #{_pspnet_forward.6} parent=0 // loop_pre_header
    _
  $region3: #{_pspnet_forward.6} parent=0 // loop_header
    %s9 = sphi 0, %s13
    %p10 = scmp.ge.s32.totalorder %s9, 4
    %s19 = sphi 0, %s21
    %s22 = sphi 0, %s19
    %s23 = sphi 0, %s22
    %s39 = sphi 0, %s23
    %s43 = sphi 0, %s43
    %s45 = sphi 0, %s43
    %s46 = sphi 0, %s45
    %s60 = sphi 0, %s46
    %s64 = sphi 0, %s64
    %s66 = sphi 0, %s64
    %s67 = sphi 0, %s66
    %s81 = sphi 0, %s67
    %s87 = sphi 0, %s89
    %s90 = sphi 0, %s87
    %s91 = sphi 0, %s90
    %s107 = sphi 0, %s91
  $region4: #{_pspnet_forward.6} parent=0 // loop_header_branch
    %12 = sbr.rel (%p10) target = $region8
  $region5: #{_pspnet_forward.6} parent=0 // loop_body
    %s14 = ssub.s32 %s9, 1
    %s15 = ssub.s32 %s9, 2
    %s16 = sadd.s32 %s9, 1
    %s17 = ssub.s32 %s9, %s16
    %p18 = scmp.eq.s32.totalorder %s17, 0
    %s20 = sadd.s32 %s19, 1
    %s21 = scalar_select %p18, %s19, %s20
    %p24 = pneg %p18
    %p25 = scmp.eq.s32.totalorder %s9, 1
    %p26 = por %p24, %p25
    %p27 = scmp.ne.s32.totalorder %s19, %s22
    %p28 = scmp.eq.s32.totalorder %s9, 0
    %p29 = por %p27, %p28
    %p30 = scmp.ne.s32.totalorder %s19, %s22
    %p31 = scmp.eq.s32.totalorder %s14, 1
    %p32 = por %p30, %p31
    %p33 = scmp.ne.s32.totalorder %s22, %s23
    %p34 = scmp.eq.s32.totalorder %s14, 0
    %p35 = por %p33, %p34
    %p36 = scmp.ne.s32.totalorder %s22, %s23
    %p37 = scmp.eq.s32.totalorder %s15, 1
    %p38 = por %p36, %p37
    %p40 = scmp.ne.s32.totalorder %s23, %s39
    %p41 = scmp.eq.s32.totalorder %s15, 0
    %p42 = por %p40, %p41
    %s44 = sadd.s32 %s43, 1
    %p47 = scmp.eq.s32.totalorder %s9, 1
    %p48 = scmp.ne.s32.totalorder %s43, %s45
    %p49 = scmp.eq.s32.totalorder %s9, 0
    %p50 = por %p48, %p49
    %p51 = scmp.ne.s32.totalorder %s43, %s45
    %p52 = scmp.eq.s32.totalorder %s14, 1
    %p53 = por %p51, %p52
    %p54 = scmp.ne.s32.totalorder %s45, %s46
    %p55 = scmp.eq.s32.totalorder %s14, 0
    %p56 = por %p54, %p55
    %p57 = scmp.ne.s32.totalorder %s45, %s46
    %p58 = scmp.eq.s32.totalorder %s15, 1
    %p59 = por %p57, %p58
    %p61 = scmp.ne.s32.totalorder %s46, %s60
    %p62 = scmp.eq.s32.totalorder %s15, 0
    %p63 = por %p61, %p62
    %s65 = sadd.s32 %s64, 1
    %p68 = scmp.eq.s32.totalorder %s9, 1
    %p69 = scmp.ne.s32.totalorder %s64, %s66
    %p70 = scmp.eq.s32.totalorder %s9, 0
    %p71 = por %p69, %p70
    %p72 = scmp.ne.s32.totalorder %s64, %s66
    %p73 = scmp.eq.s32.totalorder %s14, 1
    %p74 = por %p72, %p73
    %p75 = scmp.ne.s32.totalorder %s66, %s67
    %p76 = scmp.eq.s32.totalorder %s14, 0
    %p77 = por %p75, %p76
    %p78 = scmp.ne.s32.totalorder %s66, %s67
    %p79 = scmp.eq.s32.totalorder %s15, 1
    %p80 = por %p78, %p79
    %p82 = scmp.ne.s32.totalorder %s67, %s81
    %p83 = scmp.eq.s32.totalorder %s15, 0
    %p84 = por %p82, %p83
    %s85 = ssub.s32 %s9, %s16
    %p86 = scmp.eq.s32.totalorder %s85, 0
    %s88 = sadd.s32 %s87, 1
    %s89 = scalar_select %p86, %s87, %s88
    %p92 = pneg %p86
    %p93 = scmp.eq.s32.totalorder %s9, 1
    %p94 = por %p92, %p93
    %p95 = scmp.ne.s32.totalorder %s87, %s90
    %p96 = scmp.eq.s32.totalorder %s9, 0
    %p97 = por %p95, %p96
    %p98 = scmp.ne.s32.totalorder %s87, %s90
    %p99 = scmp.eq.s32.totalorder %s14, 1
    %p100 = por %p98, %p99
    %p101 = scmp.ne.s32.totalorder %s90, %s91
    %p102 = scmp.eq.s32.totalorder %s14, 0
    %p103 = por %p101, %p102
    %p104 = scmp.ne.s32.totalorder %s90, %s91
    %p105 = scmp.eq.s32.totalorder %s15, 1
    %p106 = por %p104, %p105
    %p108 = scmp.ne.s32.totalorder %s91, %s107
    %p109 = scmp.eq.s32.totalorder %s15, 0
    %p110 = por %p108, %p109
    %p111 = scmp.le.s32.totalorder 1, %s9
    %p112 = scmp.lt.s32.totalorder %s9, 3
    %p113 = pnand %p111, %p112
    %p114 = pneg %p113
    // Predicated region
    $region9: #{_pspnet_forward.6} parent=5 // pred_check
      _
    $region10: #{_pspnet_forward.6} parent=5 // pred_check_branch
      %116 = sbr.rel (%p113) target = $region12
    $region11: #{_pspnet_forward.6} parent=5 // pred_region
      %s117 = ssub.s32 %s9, 1
      // Predicated region
      $region13: #{_pspnet_forward.6} parent=11 // pred_check
        %p118 = pneg %p56
      $region14: #{_pspnet_forward.6} parent=11 // pred_check_branch
        %120 = sbr.rel (%p118) target = $region16
      $region15: #{_pspnet_forward.6} parent=11 // pred_region
        _
      $region16: #{_pspnet_forward.6} parent=11 // pred_fallthru
        _
      // Predicated region
      $region17: #{_pspnet_forward.6} parent=11 // pred_check
        %p121 = pneg %p77
      $region18: #{_pspnet_forward.6} parent=11 // pred_check_branch
        %123 = sbr.rel (%p121) target = $region20
      $region19: #{_pspnet_forward.6} parent=11 // pred_region
        _
      $region20: #{_pspnet_forward.6} parent=11 // pred_fallthru
        _
    $region12: #{_pspnet_forward.6} parent=5 // pred_fallthru
      _
    %p124 = scmp.lt.s32.totalorder %s9, 2
    // Predicated region
    $region21: #{_pspnet_forward.6} parent=5 // pred_check
      %p125 = pneg %p124
    $region22: #{_pspnet_forward.6} parent=5 // pred_check_branch
      %127 = sbr.rel (%p125) target = $region24
    $region23: #{_pspnet_forward.6} parent=5 // pred_region
      // Predicated region
      $region25: #{_pspnet_forward.6} parent=23 // pred_check
        %p128 = pneg %p29
      $region26: #{_pspnet_forward.6} parent=23 // pred_check_branch
        %130 = sbr.rel (%p128) target = $region28
      $region27: #{_pspnet_forward.6} parent=23 // pred_region
        %s131 = smul.u32 72, %s9
        %p132 = scmp.lt.s32.totalorder %s131, 143
        %s133 = scalar_select %p132, %s131, 143
        %s134 = smul.addr %s133, 4
        %s135 = scalar_lea.vmem %s0, %s134
        %s136 = smul.u32 72, %s9
      $region28: #{_pspnet_forward.6} parent=23 // pred_fallthru
        _
    $region24: #{_pspnet_forward.6} parent=5 // pred_fallthru
      _
    %p137 = scmp.le.s32.totalorder 1, %s9
    %p138 = scmp.lt.s32.totalorder %s9, 3
    %p139 = pnand %p137, %p138
    %p140 = pneg %p139
    // Predicated region
    $region29: #{_pspnet_forward.6} parent=5 // pred_check
      _
    $region30: #{_pspnet_forward.6} parent=5 // pred_check_branch
      %142 = sbr.rel (%p139) target = $region32
    $region31: #{_pspnet_forward.6} parent=5 // pred_region
      %s143 = ssub.s32 %s9, 1
      %s144 = smul.u32 72, %s14
      %p145 = scmp.lt.s32.totalorder %s144, 143
      %s146 = scalar_select %p145, %s144, 143
      %s147 = smul.addr %s146, 4
      %s148 = scalar_lea.vmem %s0, %s147
      %p149 = pneg %p35
      %p150 = pneg %p32
      %p151 = pneg %p56
      %p152 = pneg %p53
      %p153 = pneg %p77
      %p154 = pneg %p74
      %p155 = pneg %p103
      %p156 = pneg %p100
      %s157 = smul.u32 72, %s14
      %p158 = scmp.lt.s32.totalorder %s157, 143
      %s159 = scalar_select %p158, %s157, 143
      %s160 = smul.addr %s159, 8
      %s161 = scalar_lea.vmem %s3, %s160
      %s162 = smul.u32 72, %s14
      %p163 = scmp.lt.s32.totalorder %s162, 143
      %s164 = scalar_select %p163, %s162, 143
      %s165 = smul.addr %s164, 4
      %s166 = scalar_lea.vmem %s0, %s165
      %s167 = smul.u32 72, %s14
      %s168 = smul.u32 72, %s14
      %p169 = scmp.lt.s32.totalorder %s168, 143
      %s170 = scalar_select %p169, %s168, 143
      %s171 = smul.addr %s170, 8
      %s172 = scalar_lea.vmem %s3, %s171
      %s173 = smul.u32 72, %s14
      %v175 = vld [vmem:[%s166] sm:$0xf]
      %v176 = vld [vmem:[%s166 + $0x4] sm:$0xf]
      %v177 = vld [vmem:[%s166 + $0x8] sm:$0xf]
      %v178 = vld [vmem:[%s166 + $0xc] sm:$0xf]
      %v179 = vld [vmem:[%s166 + $0x10] sm:$0xf]
      %v180 = vld [vmem:[%s166 + $0x14] sm:$0xf]
      %v181 = vld [vmem:[%s166 + $0x18] sm:$0xf]
      %v182 = vld [vmem:[%s166 + $0x1c] sm:$0xf]
      %v183 = vld [vmem:[%s166 + $0x20] sm:$0xf]
      %v184 = vld [vmem:[%s166 + $0x24] sm:$0xf]
      %v185 = vld [vmem:[%s166 + $0x28] sm:$0xf]
      %v186 = vld [vmem:[%s166 + $0x2c] sm:$0xf]
      %v187 = vld [vmem:[%s166 + $0x30] sm:$0xf]
      %v188 = vld [vmem:[%s166 + $0x34] sm:$0xf]
      %v189 = vld [vmem:[%s166 + $0x38] sm:$0xf]
      %v190 = vld [vmem:[%s166 + $0x3c] sm:$0xf]
      %v191 = vld [vmem:[%s166 + $0x40] sm:$0xf]
      %v192 = vld [vmem:[%s166 + $0x44] sm:$0xf]
      %v193 = vld [vmem:[%s166 + $0x48] sm:$0xf]
      %v194 = vld [vmem:[%s166 + $0x4c] sm:$0xf]
      %v195 = vld [vmem:[%s166 + $0x50] sm:$0xf]
      %v196 = vld [vmem:[%s166 + $0x54] sm:$0xf]
      %v197 = vld [vmem:[%s166 + $0x58] sm:$0xf]
      %v198 = vld [vmem:[%s166 + $0x5c] sm:$0xf]
      %v199 = vld [vmem:[%s166 + $0x60] sm:$0xf]
      %v200 = vld [vmem:[%s166 + $0x64] sm:$0xf]
      %v201 = vld [vmem:[%s166 + $0x68] sm:$0xf]
      %v202 = vld [vmem:[%s166 + $0x6c] sm:$0xf]
      %v203 = vld [vmem:[%s166 + $0x70] sm:$0xf]
      %v204 = vld [vmem:[%s166 + $0x74] sm:$0xf]
      %v205 = vld [vmem:[%s166 + $0x78] sm:$0xf]
      %v206 = vld [vmem:[%s166 + $0x7c] sm:$0xf]
      %v207 = vld [vmem:[%s166 + $0x80] sm:$0xf]
      %v208 = vld [vmem:[%s166 + $0x84] sm:$0xf]
      %v209 = vld [vmem:[%s166 + $0x88] sm:$0xf]
      %v210 = vld [vmem:[%s166 + $0x8c] sm:$0xf]
      %v211 = vld [vmem:[%s166 + $0x90] sm:$0xf]
      %v212 = vld [vmem:[%s166 + $0x94] sm:$0xf]
      %v213 = vld [vmem:[%s166 + $0x98] sm:$0xf]
      %v214 = vld [vmem:[%s166 + $0x9c] sm:$0xf]
      %v215 = vld [vmem:[%s166 + $0xa0] sm:$0xf]
      %v216 = vld [vmem:[%s166 + $0xa4] sm:$0xf]
      %v217 = vld [vmem:[%s166 + $0xa8] sm:$0xf]
      %v218 = vld [vmem:[%s166 + $0xac] sm:$0xf]
      %v219 = vld [vmem:[%s166 + $0xb0] sm:$0xf]
      %v220 = vld [vmem:[%s166 + $0xb4] sm:$0xf]
      %v221 = vld [vmem:[%s166 + $0xb8] sm:$0xf]
      %v222 = vld [vmem:[%s166 + $0xbc] sm:$0xf]
      %v223 = vld [vmem:[%s166 + $0xc0] sm:$0xf]
      %v224 = vld [vmem:[%s166 + $0xc4] sm:$0xf]
      %v225 = vld [vmem:[%s166 + $0xc8] sm:$0xf]
      %v226 = vld [vmem:[%s166 + $0xcc] sm:$0xf]
      %v227 = vld [vmem:[%s166 + $0xd0] sm:$0xf]
      %v228 = vld [vmem:[%s166 + $0xd4] sm:$0xf]
      %v229 = vld [vmem:[%s166 + $0xd8] sm:$0xf]
      %v230 = vld [vmem:[%s166 + $0xdc] sm:$0xf]
      %v231 = vld [vmem:[%s166 + $0xe0] sm:$0xf]
      %v232 = vld [vmem:[%s166 + $0xe4] sm:$0xf]
      %v233 = vld [vmem:[%s166 + $0xe8] sm:$0xf]
      %v234 = vld [vmem:[%s166 + $0xec] sm:$0xf]
      %v235 = vld [vmem:[%s166 + $0xf0] sm:$0xf]
      %v236 = vld [vmem:[%s166 + $0xf4] sm:$0xf]
      %v237 = vld [vmem:[%s166 + $0xf8] sm:$0xf]
      %v238 = vld [vmem:[%s166 + $0xfc] sm:$0xf]
      %v239 = vld [vmem:[%s166 + $0x100] sm:$0xf]
      %v240 = vld [vmem:[%s166 + $0x104] sm:$0xf]
      %v241 = vld [vmem:[%s166 + $0x108] sm:$0xf]
      %v242 = vld [vmem:[%s166 + $0x10c] sm:$0xf]
      %v243 = vld [vmem:[%s166 + $0x110] sm:$0xf]
      %v244 = vld [vmem:[%s166 + $0x114] sm:$0xf]
      %v245 = vld [vmem:[%s166 + $0x118] sm:$0xf]
      %v246 = vld [vmem:[%s166 + $0x11c] sm:$0xf]
      %v247 = vld [vmem:[%s1] sm:$0xf]
      %v248 = vld [vmem:[%s1 + $0x4] sm:$0xf]
      %v249 = vld [vmem:[%s1 + $0x8] sm:$0xf]
      %v250 = vld [vmem:[%s1 + $0xc] sm:$0xf]
      %v251 = vld [vmem:[%s1 + $0x10] sm:$0xf]
      %v252 = vld [vmem:[%s2] sm:$0x1]
      %v254 = vperm.slane %v252, 0
      %v328 = vunpack.c.l.b16 %v175
      %v329 = vunpack.c.l.b16 %v176
      %v330 = vunpack.c.l.b16 %v177
      %v331 = vunpack.c.l.b16 %v178
      %v332 = vunpack.c.l.b16 %v179
      %v333 = vunpack.c.l.b16 %v180
      %v334 = vunpack.c.l.b16 %v181
      %v335 = vunpack.c.l.b16 %v182
      %v336 = vunpack.c.l.b16 %v183
      %v337 = vunpack.c.l.b16 %v184
      %v338 = vunpack.c.l.b16 %v185
      %v339 = vunpack.c.l.b16 %v186
      %v340 = vunpack.c.l.b16 %v187
      %v341 = vunpack.c.l.b16 %v188
      %v342 = vunpack.c.l.b16 %v189
      %v343 = vunpack.c.l.b16 %v190
      %v344 = vunpack.c.l.b16 %v191
      %v345 = vunpack.c.l.b16 %v192
      %v346 = vunpack.c.l.b16 %v193
      %v347 = vunpack.c.l.b16 %v194
      %v348 = vunpack.c.l.b16 %v195
      %v349 = vunpack.c.l.b16 %v196
      %v350 = vunpack.c.l.b16 %v197
      %v351 = vunpack.c.l.b16 %v198
      %v352 = vunpack.c.l.b16 %v199
      %v353 = vunpack.c.l.b16 %v200
      %v354 = vunpack.c.l.b16 %v201
      %v355 = vunpack.c.l.b16 %v202
      %v356 = vunpack.c.l.b16 %v203
      %v357 = vunpack.c.l.b16 %v204
      %v358 = vunpack.c.l.b16 %v205
      %v359 = vunpack.c.l.b16 %v206
      %v360 = vunpack.c.l.b16 %v207
      %v361 = vunpack.c.l.b16 %v208
      %v362 = vunpack.c.l.b16 %v209
      %v363 = vunpack.c.l.b16 %v210
      %v364 = vunpack.c.l.b16 %v211
      %v365 = vunpack.c.l.b16 %v212
      %v366 = vunpack.c.l.b16 %v213
      %v367 = vunpack.c.l.b16 %v214
      %v368 = vunpack.c.l.b16 %v215
      %v369 = vunpack.c.l.b16 %v216
      %v370 = vunpack.c.l.b16 %v217
      %v371 = vunpack.c.l.b16 %v218
      %v372 = vunpack.c.l.b16 %v219
      %v373 = vunpack.c.l.b16 %v220
      %v374 = vunpack.c.l.b16 %v221
      %v375 = vunpack.c.l.b16 %v222
      %v376 = vunpack.c.l.b16 %v223
      %v377 = vunpack.c.l.b16 %v224
      %v378 = vunpack.c.l.b16 %v225
      %v379 = vunpack.c.l.b16 %v226
      %v380 = vunpack.c.l.b16 %v227
      %v381 = vunpack.c.l.b16 %v228
      %v382 = vunpack.c.l.b16 %v229
      %v383 = vunpack.c.l.b16 %v230
      %v384 = vunpack.c.l.b16 %v231
      %v385 = vunpack.c.l.b16 %v232
      %v386 = vunpack.c.l.b16 %v233
      %v387 = vunpack.c.l.b16 %v234
      %v388 = vunpack.c.l.b16 %v235
      %v389 = vunpack.c.l.b16 %v236
      %v390 = vunpack.c.l.b16 %v237
      %v391 = vunpack.c.l.b16 %v238
      %v392 = vunpack.c.l.b16 %v239
      %v393 = vunpack.c.l.b16 %v240
      %v394 = vunpack.c.l.b16 %v241
      %v395 = vunpack.c.l.b16 %v242
      %v396 = vunpack.c.l.b16 %v243
      %v397 = vunpack.c.l.b16 %v244
      %v398 = vunpack.c.l.b16 %v245
      %v399 = vunpack.c.l.b16 %v246
      %v400 = vpack.c.b16 %v329, %v328
      %v401 = vpack.c.b16 %v331, %v330
      %v402 = vpack.c.b16 %v333, %v332
      %v403 = vpack.c.b16 %v335, %v334
      %v404 = vpack.c.b16 %v337, %v336
      %v405 = vpack.c.b16 %v339, %v338
      %v406 = vpack.c.b16 %v341, %v340
      %v407 = vpack.c.b16 %v343, %v342
      %v408 = vpack.c.b16 %v345, %v344
      %v409 = vpack.c.b16 %v347, %v346
      %v410 = vpack.c.b16 %v349, %v348
      %v411 = vpack.c.b16 %v351, %v350
      %v412 = vpack.c.b16 %v353, %v352
      %v413 = vpack.c.b16 %v355, %v354
      %v414 = vpack.c.b16 %v357, %v356
      %v415 = vpack.c.b16 %v359, %v358
      %v416 = vpack.c.b16 %v361, %v360
      %v417 = vpack.c.b16 %v363, %v362
      %v418 = vpack.c.b16 %v365, %v364
      %v419 = vpack.c.b16 %v367, %v366
      %v420 = vpack.c.b16 %v369, %v368
      %v421 = vpack.c.b16 %v371, %v370
      %v422 = vpack.c.b16 %v373, %v372
      %v423 = vpack.c.b16 %v375, %v374
      %v424 = vpack.c.b16 %v377, %v376
      %v425 = vpack.c.b16 %v379, %v378
      %v426 = vpack.c.b16 %v381, %v380
      %v427 = vpack.c.b16 %v383, %v382
      %v428 = vpack.c.b16 %v385, %v384
      %v429 = vpack.c.b16 %v387, %v386
      %v430 = vpack.c.b16 %v389, %v388
      %v431 = vpack.c.b16 %v391, %v390
      %v432 = vpack.c.b16 %v393, %v392
      %v433 = vpack.c.b16 %v395, %v394
      %v434 = vpack.c.b16 %v397, %v396
      %v435 = vpack.c.b16 %v399, %v398
      %v441 = vunpack.c.l.b16 %v247
      %v442 = vunpack.c.l.b16 %v248
      %v443 = vunpack.c.l.b16 %v249
      %v444 = vunpack.c.l.b16 %v250
      %v445 = vunpack.c.l.b16 %v251
      %v446 = vpack.c.b16 %v442, %v441
      %v447 = vpack.c.b16 %v444, %v443
      %v448 = vpack.c.b16 %v445, %v445
      %vm451 = vcmask 326656
      %v453 = vsel %vm451, %v400, 0
      %v456 = vsel %vm451, %v401, 0
      %v459 = vsel %vm451, %v402, 0
      %v462 = vsel %vm451, %v403, 0
      %v465 = vsel %vm451, %v404, 0
      %v468 = vsel %vm451, %v405, 0
      %v471 = vsel %vm451, %v406, 0
      %v474 = vsel %vm451, %v407, 0
      %v477 = vsel %vm451, %v408, 0
      %v480 = vsel %vm451, %v409, 0
      %v483 = vsel %vm451, %v410, 0
      %v486 = vsel %vm451, %v411, 0
      %v489 = vsel %vm451, %v412, 0
      %v492 = vsel %vm451, %v413, 0
      %v495 = vsel %vm451, %v414, 0
      %v498 = vsel %vm451, %v415, 0
      %v501 = vsel %vm451, %v416, 0
      %v504 = vsel %vm451, %v417, 0
      %v507 = vsel %vm451, %v418, 0
      %v510 = vsel %vm451, %v419, 0
      %v513 = vsel %vm451, %v420, 0
      %v516 = vsel %vm451, %v421, 0
      %v519 = vsel %vm451, %v422, 0
      %v522 = vsel %vm451, %v423, 0
      %v525 = vsel %vm451, %v424, 0
      %v528 = vsel %vm451, %v425, 0
      %v531 = vsel %vm451, %v426, 0
      %v534 = vsel %vm451, %v427, 0
      %v537 = vsel %vm451, %v428, 0
      %v540 = vsel %vm451, %v429, 0
      %v543 = vsel %vm451, %v430, 0
      %v546 = vsel %vm451, %v431, 0
      %v549 = vsel %vm451, %v432, 0
      %v552 = vsel %vm451, %v433, 0
      %v555 = vsel %vm451, %v434, 0
      %v558 = vsel %vm451, %v435, 0
      %vm560 = vcmask 1043456
      %v562 = vsel %vm560, %v448, 0
      %564 = vmatpush.bf16.msra.mxu0 0
      %565 = vmatpush.bf16.msra.mxu0 0
      %566 = vmatpush.bf16.msra.mxu0 0
      %567 = vmatpush.bf16.msra.mxu0 0
      %568 = vmatpush.bf16.msra.mxu0 0
      %569 = vmatpush.bf16.msra.mxu0 %v562
      %570 = vmatpush.bf16.msra.mxu0 %v447
      %571 = vmatpush.bf16.msra.mxu0 %v446
      %572 = vmatmul.bf16.gmra.mxu0 %v453
      %v573 = vpop.f32.mrf.mxu0
      %v574 = vadd.f32 %v254, %v573
      %v575 = vpop.f32.mrf.mxu0
      %v576 = vadd.f32 %v254, %v575
      %577 = vmatmul.bf16.gmra.mxu0 %v456
      %v578 = vpop.f32.mrf.mxu0
      %v579 = vadd.f32 %v254, %v578
      %v580 = vpop.f32.mrf.mxu0
      %v581 = vadd.f32 %v254, %v580
      %582 = vmatmul.bf16.gmra.mxu0 %v459
      %v583 = vpop.f32.mrf.mxu0
      %v584 = vadd.f32 %v254, %v583
      %v585 = vpop.f32.mrf.mxu0
      %v586 = vadd.f32 %v254, %v585
      %587 = vmatmul.bf16.gmra.mxu0 %v462
      %v588 = vpop.f32.mrf.mxu0
      %v589 = vadd.f32 %v254, %v588
      %v590 = vpop.f32.mrf.mxu0
      %v591 = vadd.f32 %v254, %v590
      %592 = vmatmul.bf16.gmra.mxu0 %v465
      %v593 = vpop.f32.mrf.mxu0
      %v594 = vadd.f32 %v254, %v593
      %v595 = vpop.f32.mrf.mxu0
      %v596 = vadd.f32 %v254, %v595
      %597 = vmatmul.bf16.gmra.mxu0 %v468
      %v598 = vpop.f32.mrf.mxu0
      %v599 = vadd.f32 %v254, %v598
      %v600 = vpop.f32.mrf.mxu0
      %v601 = vadd.f32 %v254, %v600
      %602 = vmatmul.bf16.gmra.mxu0 %v471
      %v603 = vpop.f32.mrf.mxu0
      %v604 = vadd.f32 %v254, %v603
      %v605 = vpop.f32.mrf.mxu0
      %v606 = vadd.f32 %v254, %v605
      %607 = vmatmul.bf16.gmra.mxu0 %v474
      %v608 = vpop.f32.mrf.mxu0
      %v609 = vadd.f32 %v254, %v608
      %v610 = vpop.f32.mrf.mxu0
      %v611 = vadd.f32 %v254, %v610
      %612 = vmatmul.bf16.gmra.mxu0 %v477
      %v613 = vpop.f32.mrf.mxu0
      %v614 = vadd.f32 %v254, %v613
      %v615 = vpop.f32.mrf.mxu0
      %v616 = vadd.f32 %v254, %v615
      %617 = vmatmul.bf16.gmra.mxu0 %v480
      %v618 = vpop.f32.mrf.mxu0
      %v619 = vadd.f32 %v254, %v618
      %v620 = vpop.f32.mrf.mxu0
      %v621 = vadd.f32 %v254, %v620
      %622 = vmatmul.bf16.gmra.mxu0 %v483
      %v623 = vpop.f32.mrf.mxu0
      %v624 = vadd.f32 %v254, %v623
      %v625 = vpop.f32.mrf.mxu0
      %v626 = vadd.f32 %v254, %v625
      %627 = vmatmul.bf16.gmra.mxu0 %v486
      %v628 = vpop.f32.mrf.mxu0
      %v629 = vadd.f32 %v254, %v628
      %v630 = vpop.f32.mrf.mxu0
      %v631 = vadd.f32 %v254, %v630
      %632 = vmatmul.bf16.gmra.mxu0 %v489
      %v633 = vpop.f32.mrf.mxu0
      %v634 = vadd.f32 %v254, %v633
      %v635 = vpop.f32.mrf.mxu0
      %v636 = vadd.f32 %v254, %v635
      %637 = vmatmul.bf16.gmra.mxu0 %v492
      %v638 = vpop.f32.mrf.mxu0
      %v639 = vadd.f32 %v254, %v638
      %v640 = vpop.f32.mrf.mxu0
      %v641 = vadd.f32 %v254, %v640
      %642 = vmatmul.bf16.gmra.mxu0 %v495
      %v643 = vpop.f32.mrf.mxu0
      %v644 = vadd.f32 %v254, %v643
      %v645 = vpop.f32.mrf.mxu0
      %v646 = vadd.f32 %v254, %v645
      %647 = vmatmul.bf16.gmra.mxu0 %v498
      %v648 = vpop.f32.mrf.mxu0
      %v649 = vadd.f32 %v254, %v648
      %v650 = vpop.f32.mrf.mxu0
      %v651 = vadd.f32 %v254, %v650
      %652 = vmatmul.bf16.gmra.mxu0 %v501
      %v653 = vpop.f32.mrf.mxu0
      %v654 = vadd.f32 %v254, %v653
      %v655 = vpop.f32.mrf.mxu0
      %v656 = vadd.f32 %v254, %v655
      %657 = vmatmul.bf16.gmra.mxu0 %v504
      %v658 = vpop.f32.mrf.mxu0
      %v659 = vadd.f32 %v254, %v658
      %v660 = vpop.f32.mrf.mxu0
      %v661 = vadd.f32 %v254, %v660
      %662 = vmatmul.bf16.gmra.mxu0 %v507
      %v663 = vpop.f32.mrf.mxu0
      %v664 = vadd.f32 %v254, %v663
      %v665 = vpop.f32.mrf.mxu0
      %v666 = vadd.f32 %v254, %v665
      %667 = vmatmul.bf16.gmra.mxu0 %v510
      %v668 = vpop.f32.mrf.mxu0
      %v669 = vadd.f32 %v254, %v668
      %v670 = vpop.f32.mrf.mxu0
      %v671 = vadd.f32 %v254, %v670
      %672 = vmatmul.bf16.gmra.mxu0 %v513
      %v673 = vpop.f32.mrf.mxu0
      %v674 = vadd.f32 %v254, %v673
      %v675 = vpop.f32.mrf.mxu0
      %v676 = vadd.f32 %v254, %v675
      %677 = vmatmul.bf16.gmra.mxu0 %v516
      %v678 = vpop.f32.mrf.mxu0
      %v679 = vadd.f32 %v254, %v678
      %v680 = vpop.f32.mrf.mxu0
      %v681 = vadd.f32 %v254, %v680
      %682 = vmatmul.bf16.gmra.mxu0 %v519
      %v683 = vpop.f32.mrf.mxu0
      %v684 = vadd.f32 %v254, %v683
      %v685 = vpop.f32.mrf.mxu0
      %v686 = vadd.f32 %v254, %v685
      %687 = vmatmul.bf16.gmra.mxu0 %v522
      %v688 = vpop.f32.mrf.mxu0
      %v689 = vadd.f32 %v254, %v688
      %v690 = vpop.f32.mrf.mxu0
      %v691 = vadd.f32 %v254, %v690
      %692 = vmatmul.bf16.gmra.mxu0 %v525
      %v693 = vpop.f32.mrf.mxu0
      %v694 = vadd.f32 %v254, %v693
      %v695 = vpop.f32.mrf.mxu0
      %v696 = vadd.f32 %v254, %v695
      %697 = vmatmul.bf16.gmra.mxu0 %v528
      %v698 = vpop.f32.mrf.mxu0
      %v699 = vadd.f32 %v254, %v698
      %v700 = vpop.f32.mrf.mxu0
      %v701 = vadd.f32 %v254, %v700
      %702 = vmatmul.bf16.gmra.mxu0 %v531
      %v703 = vpop.f32.mrf.mxu0
      %v704 = vadd.f32 %v254, %v703
      %v705 = vpop.f32.mrf.mxu0
      %v706 = vadd.f32 %v254, %v705
      %707 = vmatmul.bf16.gmra.mxu0 %v534
      %v708 = vpop.f32.mrf.mxu0
      %v709 = vadd.f32 %v254, %v708
      %v710 = vpop.f32.mrf.mxu0
      %v711 = vadd.f32 %v254, %v710
      %712 = vmatmul.bf16.gmra.mxu0 %v537
      %v713 = vpop.f32.mrf.mxu0
      %v714 = vadd.f32 %v254, %v713
      %v715 = vpop.f32.mrf.mxu0
      %v716 = vadd.f32 %v254, %v715
      %717 = vmatmul.bf16.gmra.mxu0 %v540
      %v718 = vpop.f32.mrf.mxu0
      %v719 = vadd.f32 %v254, %v718
      %v720 = vpop.f32.mrf.mxu0
      %v721 = vadd.f32 %v254, %v720
      %722 = vmatmul.bf16.gmra.mxu0 %v543
      %v723 = vpop.f32.mrf.mxu0
      %v724 = vadd.f32 %v254, %v723
      %v725 = vpop.f32.mrf.mxu0
      %v726 = vadd.f32 %v254, %v725
      %727 = vmatmul.bf16.gmra.mxu0 %v546
      %v728 = vpop.f32.mrf.mxu0
      %v729 = vadd.f32 %v254, %v728
      %v730 = vpop.f32.mrf.mxu0
      %v731 = vadd.f32 %v254, %v730
      %732 = vmatmul.bf16.gmra.mxu0 %v549
      %v733 = vpop.f32.mrf.mxu0
      %v734 = vadd.f32 %v254, %v733
      %v735 = vpop.f32.mrf.mxu0
      %v736 = vadd.f32 %v254, %v735
      %737 = vmatmul.bf16.gmra.mxu0 %v552
      %v738 = vpop.f32.mrf.mxu0
      %v739 = vadd.f32 %v254, %v738
      %v740 = vpop.f32.mrf.mxu0
      %v741 = vadd.f32 %v254, %v740
      %742 = vmatmul.bf16.gmra.mxu0 %v555
      %v743 = vpop.f32.mrf.mxu0
      %v744 = vadd.f32 %v254, %v743
      %v745 = vpop.f32.mrf.mxu0
      %v746 = vadd.f32 %v254, %v745
      %747 = vmatmul.bf16.gmra.mxu0 %v558
      %v748 = vpop.f32.mrf.mxu0
      %v749 = vadd.f32 %v254, %v748
      %v750 = vpop.f32.mrf.mxu0
      %v751 = vadd.f32 %v254, %v750
      %752 = vdwg.mxu0
      %v753 = vmax.f32 %v574, 0.0
      %v754 = vmax.f32 %v576, 0.0
      %v755 = vmax.f32 %v579, 0.0
      %v756 = vmax.f32 %v581, 0.0
      %v757 = vmax.f32 %v584, 0.0
      %v758 = vmax.f32 %v586, 0.0
      %v759 = vmax.f32 %v589, 0.0
      %v760 = vmax.f32 %v591, 0.0
      %v761 = vmax.f32 %v594, 0.0
      %v762 = vmax.f32 %v596, 0.0
      %v763 = vmax.f32 %v599, 0.0
      %v764 = vmax.f32 %v601, 0.0
      %v765 = vmax.f32 %v604, 0.0
      %v766 = vmax.f32 %v606, 0.0
      %v767 = vmax.f32 %v609, 0.0
      %v768 = vmax.f32 %v611, 0.0
      %v769 = vmax.f32 %v614, 0.0
      %v770 = vmax.f32 %v616, 0.0
      %v771 = vmax.f32 %v619, 0.0
      %v772 = vmax.f32 %v621, 0.0
      %v773 = vmax.f32 %v624, 0.0
      %v774 = vmax.f32 %v626, 0.0
      %v775 = vmax.f32 %v629, 0.0
      %v776 = vmax.f32 %v631, 0.0
      %v777 = vmax.f32 %v634, 0.0
      %v778 = vmax.f32 %v636, 0.0
      %v779 = vmax.f32 %v639, 0.0
      %v780 = vmax.f32 %v641, 0.0
      %v781 = vmax.f32 %v644, 0.0
      %v782 = vmax.f32 %v646, 0.0
      %v783 = vmax.f32 %v649, 0.0
      %v784 = vmax.f32 %v651, 0.0
      %v785 = vmax.f32 %v654, 0.0
      %v786 = vmax.f32 %v656, 0.0
      %v787 = vmax.f32 %v659, 0.0
      %v788 = vmax.f32 %v661, 0.0
      %v789 = vmax.f32 %v664, 0.0
      %v790 = vmax.f32 %v666, 0.0
      %v791 = vmax.f32 %v669, 0.0
      %v792 = vmax.f32 %v671, 0.0
      %v793 = vmax.f32 %v674, 0.0
      %v794 = vmax.f32 %v676, 0.0
      %v795 = vmax.f32 %v679, 0.0
      %v796 = vmax.f32 %v681, 0.0
      %v797 = vmax.f32 %v684, 0.0
      %v798 = vmax.f32 %v686, 0.0
      %v799 = vmax.f32 %v689, 0.0
      %v800 = vmax.f32 %v691, 0.0
      %v801 = vmax.f32 %v694, 0.0
      %v802 = vmax.f32 %v696, 0.0
      %v803 = vmax.f32 %v699, 0.0
      %v804 = vmax.f32 %v701, 0.0
      %v805 = vmax.f32 %v704, 0.0
      %v806 = vmax.f32 %v706, 0.0
      %v807 = vmax.f32 %v709, 0.0
      %v808 = vmax.f32 %v711, 0.0
      %v809 = vmax.f32 %v714, 0.0
      %v810 = vmax.f32 %v716, 0.0
      %v811 = vmax.f32 %v719, 0.0
      %v812 = vmax.f32 %v721, 0.0
      %v813 = vmax.f32 %v724, 0.0
      %v814 = vmax.f32 %v726, 0.0
      %v815 = vmax.f32 %v729, 0.0
      %v816 = vmax.f32 %v731, 0.0
      %v817 = vmax.f32 %v734, 0.0
      %v818 = vmax.f32 %v736, 0.0
      %v819 = vmax.f32 %v739, 0.0
      %v820 = vmax.f32 %v741, 0.0
      %v821 = vmax.f32 %v744, 0.0
      %v822 = vmax.f32 %v746, 0.0
      %v823 = vmax.f32 %v749, 0.0
      %v824 = vmax.f32 %v751, 0.0
      %vm825 = vcmask 130048
      %826 = vst.msk [vmem:[%s172] sm:$0xff] %vm825, %v753
      %827 = vst.msk [vmem:[%s172 + $0x8] sm:$0xff] %vm825, %v754
      %828 = vst.msk [vmem:[%s172 + $0x10] sm:$0xff] %vm825, %v755
      %829 = vst.msk [vmem:[%s172 + $0x18] sm:$0xff] %vm825, %v756
      %830 = vst.msk [vmem:[%s172 + $0x20] sm:$0xff] %vm825, %v757
      %831 = vst.msk [vmem:[%s172 + $0x28] sm:$0xff] %vm825, %v758
      %832 = vst.msk [vmem:[%s172 + $0x30] sm:$0xff] %vm825, %v759
      %833 = vst.msk [vmem:[%s172 + $0x38] sm:$0xff] %vm825, %v760
      %834 = vst.msk [vmem:[%s172 + $0x40] sm:$0xff] %vm825, %v761
      %835 = vst.msk [vmem:[%s172 + $0x48] sm:$0xff] %vm825, %v762
      %836 = vst.msk [vmem:[%s172 + $0x50] sm:$0xff] %vm825, %v763
      %837 = vst.msk [vmem:[%s172 + $0x58] sm:$0xff] %vm825, %v764
      %838 = vst.msk [vmem:[%s172 + $0x60] sm:$0xff] %vm825, %v765
      %839 = vst.msk [vmem:[%s172 + $0x68] sm:$0xff] %vm825, %v766
      %840 = vst.msk [vmem:[%s172 + $0x70] sm:$0xff] %vm825, %v767
      %841 = vst.msk [vmem:[%s172 + $0x78] sm:$0xff] %vm825, %v768
      %842 = vst.msk [vmem:[%s172 + $0x80] sm:$0xff] %vm825, %v769
      %843 = vst.msk [vmem:[%s172 + $0x88] sm:$0xff] %vm825, %v770
      %844 = vst.msk [vmem:[%s172 + $0x90] sm:$0xff] %vm825, %v771
      %845 = vst.msk [vmem:[%s172 + $0x98] sm:$0xff] %vm825, %v772
      %846 = vst.msk [vmem:[%s172 + $0xa0] sm:$0xff] %vm825, %v773
      %847 = vst.msk [vmem:[%s172 + $0xa8] sm:$0xff] %vm825, %v774
      %848 = vst.msk [vmem:[%s172 + $0xb0] sm:$0xff] %vm825, %v775
      %849 = vst.msk [vmem:[%s172 + $0xb8] sm:$0xff] %vm825, %v776
      %850 = vst.msk [vmem:[%s172 + $0xc0] sm:$0xff] %vm825, %v777
      %851 = vst.msk [vmem:[%s172 + $0xc8] sm:$0xff] %vm825, %v778
      %852 = vst.msk [vmem:[%s172 + $0xd0] sm:$0xff] %vm825, %v779
      %853 = vst.msk [vmem:[%s172 + $0xd8] sm:$0xff] %vm825, %v780
      %854 = vst.msk [vmem:[%s172 + $0xe0] sm:$0xff] %vm825, %v781
      %855 = vst.msk [vmem:[%s172 + $0xe8] sm:$0xff] %vm825, %v782
      %856 = vst.msk [vmem:[%s172 + $0xf0] sm:$0xff] %vm825, %v783
      %857 = vst.msk [vmem:[%s172 + $0xf8] sm:$0xff] %vm825, %v784
      %858 = vst.msk [vmem:[%s172 + $0x100] sm:$0xff] %vm825, %v785
      %859 = vst.msk [vmem:[%s172 + $0x108] sm:$0xff] %vm825, %v786
      %860 = vst.msk [vmem:[%s172 + $0x110] sm:$0xff] %vm825, %v787
      %861 = vst.msk [vmem:[%s172 + $0x118] sm:$0xff] %vm825, %v788
      %862 = vst.msk [vmem:[%s172 + $0x120] sm:$0xff] %vm825, %v789
      %863 = vst.msk [vmem:[%s172 + $0x128] sm:$0xff] %vm825, %v790
      %864 = vst.msk [vmem:[%s172 + $0x130] sm:$0xff] %vm825, %v791
      %865 = vst.msk [vmem:[%s172 + $0x138] sm:$0xff] %vm825, %v792
      %866 = vst.msk [vmem:[%s172 + $0x140] sm:$0xff] %vm825, %v793
      %867 = vst.msk [vmem:[%s172 + $0x148] sm:$0xff] %vm825, %v794
      %868 = vst.msk [vmem:[%s172 + $0x150] sm:$0xff] %vm825, %v795
      %869 = vst.msk [vmem:[%s172 + $0x158] sm:$0xff] %vm825, %v796
      %870 = vst.msk [vmem:[%s172 + $0x160] sm:$0xff] %vm825, %v797
      %871 = vst.msk [vmem:[%s172 + $0x168] sm:$0xff] %vm825, %v798
      %872 = vst.msk [vmem:[%s172 + $0x170] sm:$0xff] %vm825, %v799
      %873 = vst.msk [vmem:[%s172 + $0x178] sm:$0xff] %vm825, %v800
      %874 = vst.msk [vmem:[%s172 + $0x180] sm:$0xff] %vm825, %v801
      %875 = vst.msk [vmem:[%s172 + $0x188] sm:$0xff] %vm825, %v802
      %876 = vst.msk [vmem:[%s172 + $0x190] sm:$0xff] %vm825, %v803
      %877 = vst.msk [vmem:[%s172 + $0x198] sm:$0xff] %vm825, %v804
      %878 = vst.msk [vmem:[%s172 + $0x1a0] sm:$0xff] %vm825, %v805
      %879 = vst.msk [vmem:[%s172 + $0x1a8] sm:$0xff] %vm825, %v806
      %880 = vst.msk [vmem:[%s172 + $0x1b0] sm:$0xff] %vm825, %v807
      %881 = vst.msk [vmem:[%s172 + $0x1b8] sm:$0xff] %vm825, %v808
      %882 = vst.msk [vmem:[%s172 + $0x1c0] sm:$0xff] %vm825, %v809
      %883 = vst.msk [vmem:[%s172 + $0x1c8] sm:$0xff] %vm825, %v810
      %884 = vst.msk [vmem:[%s172 + $0x1d0] sm:$0xff] %vm825, %v811
      %885 = vst.msk [vmem:[%s172 + $0x1d8] sm:$0xff] %vm825, %v812
      %886 = vst.msk [vmem:[%s172 + $0x1e0] sm:$0xff] %vm825, %v813
      %887 = vst.msk [vmem:[%s172 + $0x1e8] sm:$0xff] %vm825, %v814
      %888 = vst.msk [vmem:[%s172 + $0x1f0] sm:$0xff] %vm825, %v815
      %889 = vst.msk [vmem:[%s172 + $0x1f8] sm:$0xff] %vm825, %v816
      %890 = vst.msk [vmem:[%s172 + $0x200] sm:$0xff] %vm825, %v817
      %891 = vst.msk [vmem:[%s172 + $0x208] sm:$0xff] %vm825, %v818
      %892 = vst.msk [vmem:[%s172 + $0x210] sm:$0xff] %vm825, %v819
      %893 = vst.msk [vmem:[%s172 + $0x218] sm:$0xff] %vm825, %v820
      %894 = vst.msk [vmem:[%s172 + $0x220] sm:$0xff] %vm825, %v821
      %895 = vst.msk [vmem:[%s172 + $0x228] sm:$0xff] %vm825, %v822
      %896 = vst.msk [vmem:[%s172 + $0x230] sm:$0xff] %vm825, %v823
      %897 = vst.msk [vmem:[%s172 + $0x238] sm:$0xff] %vm825, %v824
      %s898 = smul.u32 72, %s14
      %p899 = scmp.lt.s32.totalorder %s898, 143
      %s900 = scalar_select %p899, %s898, 143
      %s901 = smul.addr %s900, 8
      %s902 = scalar_lea.vmem %s3, %s901
      // Predicated region
      $region33: #{_pspnet_forward.6} parent=31 // pred_check
        %p903 = pneg %p100
      $region34: #{_pspnet_forward.6} parent=31 // pred_check_branch
        %905 = sbr.rel (%p903) target = $region36
      $region35: #{_pspnet_forward.6} parent=31 // pred_region
        %s906 = smul.u32 72, %s14
      $region36: #{_pspnet_forward.6} parent=31 // pred_fallthru
        _
    $region32: #{_pspnet_forward.6} parent=5 // pred_fallthru
      _
    %p907 = scmp.le.s32.totalorder 2, %s9
    // Predicated region
    $region37: #{_pspnet_forward.6} parent=5 // pred_check
      %p908 = pneg %p907
    $region38: #{_pspnet_forward.6} parent=5 // pred_check_branch
      %910 = sbr.rel (%p908) target = $region40
    $region39: #{_pspnet_forward.6} parent=5 // pred_region
      %s911 = ssub.s32 %s9, 2
      // Predicated region
      $region41: #{_pspnet_forward.6} parent=39 // pred_check
        %p912 = pneg %p106
      $region42: #{_pspnet_forward.6} parent=39 // pred_check_branch
        %914 = sbr.rel (%p912) target = $region44
      $region43: #{_pspnet_forward.6} parent=39 // pred_region
        %s915 = smul.u32 72, %s15
        %p916 = scmp.lt.s32.totalorder %s915, 143
        %s917 = scalar_select %p916, %s915, 143
        %s918 = smul.addr %s917, 8
        %s919 = scalar_lea.vmem %s3, %s918
      $region44: #{_pspnet_forward.6} parent=39 // pred_fallthru
        _
    $region40: #{_pspnet_forward.6} parent=5 // pred_fallthru
      _
  $region6: #{_pspnet_forward.6} parent=0 // loop_footer
    %s13 = sadd.s32 1, %s9
  $region7: #{_pspnet_forward.6} parent=0 // loop_footer_branch
    %8 = sbr.rel target = $region3
  $region8: #{_pspnet_forward.6} parent=0 // loop_exit
    _

// kernel: _pspnet_forward.7
$region0: #{_pspnet_forward.7}
  #allocation0 [shape = 'u32[]', space=smem, size = 0x4, offset = 0x4, fixed_abs, tag = 'smem constant byte address 0x4 - core index']
  #allocation1 [shape = 'u32[72,128]{1,0:T(1,128)}', space=vmem, size = 0x9000, scoped, tag = 'internal scratch']
  %s0 = inlined_call_operand.vmem [shape: bf16[288,144], index: 0, kind: input, shape index: {}]
  %s1 = inlined_call_operand.vmem [shape: bf16[144,32], index: 1, kind: input, shape index: {}]
  %s2 = inlined_call_operand.vmem [shape: f32[1,32], index: 2, kind: input, shape index: {}]
  %s3 = inlined_call_operand.vmem [shape: f32[288,32], index: 3, kind: output, shape index: {}]
  %s4 = sld [smem:[#allocation0]]
  $region45: #{_pspnet_forward.7} parent=0
    _
  %s6 = ssub.s32 1, %s4
  %s7 = scalar_select 0, %s6, %s4
  loop: start=0, step=1, limit=4
  $region2: #{_pspnet_forward.7} parent=0 // loop_pre_header
    _
  $region3: #{_pspnet_forward.7} parent=0 // loop_header
    %s9 = sphi 0, %s13
    %p10 = scmp.ge.s32.totalorder %s9, 4
    %s19 = sphi 0, %s21
    %s22 = sphi 0, %s19
    %s23 = sphi 0, %s22
    %s39 = sphi 0, %s23
    %s43 = sphi 0, %s43
    %s45 = sphi 0, %s43
    %s46 = sphi 0, %s45
    %s60 = sphi 0, %s46
    %s64 = sphi 0, %s64
    %s66 = sphi 0, %s64
    %s67 = sphi 0, %s66
    %s81 = sphi 0, %s67
    %s87 = sphi 0, %s89
    %s90 = sphi 0, %s87
    %s91 = sphi 0, %s90
    %s107 = sphi 0, %s91
  $region4: #{_pspnet_forward.7} parent=0 // loop_header_branch
    %12 = sbr.rel (%p10) target = $region8
  $region5: #{_pspnet_forward.7} parent=0 // loop_body
    %s14 = ssub.s32 %s9, 1
    %s15 = ssub.s32 %s9, 2
    %s16 = sadd.s32 %s9, 1
    %s17 = ssub.s32 %s9, %s16
    %p18 = scmp.eq.s32.totalorder %s17, 0
    %s20 = sadd.s32 %s19, 1
    %s21 = scalar_select %p18, %s19, %s20
    %p24 = pneg %p18
    %p25 = scmp.eq.s32.totalorder %s9, 1
    %p26 = por %p24, %p25
    %p27 = scmp.ne.s32.totalorder %s19, %s22
    %p28 = scmp.eq.s32.totalorder %s9, 0
    %p29 = por %p27, %p28
    %p30 = scmp.ne.s32.totalorder %s19, %s22
    %p31 = scmp.eq.s32.totalorder %s14, 1
    %p32 = por %p30, %p31
    %p33 = scmp.ne.s32.totalorder %s22, %s23
    %p34 = scmp.eq.s32.totalorder %s14, 0
    %p35 = por %p33, %p34
    %p36 = scmp.ne.s32.totalorder %s22, %s23
    %p37 = scmp.eq.s32.totalorder %s15, 1
    %p38 = por %p36, %p37
    %p40 = scmp.ne.s32.totalorder %s23, %s39
    %p41 = scmp.eq.s32.totalorder %s15, 0
    %p42 = por %p40, %p41
    %s44 = sadd.s32 %s43, 1
    %p47 = scmp.eq.s32.totalorder %s9, 1
    %p48 = scmp.ne.s32.totalorder %s43, %s45
    %p49 = scmp.eq.s32.totalorder %s9, 0
    %p50 = por %p48, %p49
    %p51 = scmp.ne.s32.totalorder %s43, %s45
    %p52 = scmp.eq.s32.totalorder %s14, 1
    %p53 = por %p51, %p52
    %p54 = scmp.ne.s32.totalorder %s45, %s46
    %p55 = scmp.eq.s32.totalorder %s14, 0
    %p56 = por %p54, %p55
    %p57 = scmp.ne.s32.totalorder %s45, %s46
    %p58 = scmp.eq.s32.totalorder %s15, 1
    %p59 = por %p57, %p58
    %p61 = scmp.ne.s32.totalorder %s46, %s60
    %p62 = scmp.eq.s32.totalorder %s15, 0
    %p63 = por %p61, %p62
    %s65 = sadd.s32 %s64, 1
    %p68 = scmp.eq.s32.totalorder %s9, 1
    %p69 = scmp.ne.s32.totalorder %s64, %s66
    %p70 = scmp.eq.s32.totalorder %s9, 0
    %p71 = por %p69, %p70
    %p72 = scmp.ne.s32.totalorder %s64, %s66
    %p73 = scmp.eq.s32.totalorder %s14, 1
    %p74 = por %p72, %p73
    %p75 = scmp.ne.s32.totalorder %s66, %s67
    %p76 = scmp.eq.s32.totalorder %s14, 0
    %p77 = por %p75, %p76
    %p78 = scmp.ne.s32.totalorder %s66, %s67
    %p79 = scmp.eq.s32.totalorder %s15, 1
    %p80 = por %p78, %p79
    %p82 = scmp.ne.s32.totalorder %s67, %s81
    %p83 = scmp.eq.s32.totalorder %s15, 0
    %p84 = por %p82, %p83
    %s85 = ssub.s32 %s9, %s16
    %p86 = scmp.eq.s32.totalorder %s85, 0
    %s88 = sadd.s32 %s87, 1
    %s89 = scalar_select %p86, %s87, %s88
    %p92 = pneg %p86
    %p93 = scmp.eq.s32.totalorder %s9, 1
    %p94 = por %p92, %p93
    %p95 = scmp.ne.s32.totalorder %s87, %s90
    %p96 = scmp.eq.s32.totalorder %s9, 0
    %p97 = por %p95, %p96
    %p98 = scmp.ne.s32.totalorder %s87, %s90
    %p99 = scmp.eq.s32.totalorder %s14, 1
    %p100 = por %p98, %p99
    %p101 = scmp.ne.s32.totalorder %s90, %s91
    %p102 = scmp.eq.s32.totalorder %s14, 0
    %p103 = por %p101, %p102
    %p104 = scmp.ne.s32.totalorder %s90, %s91
    %p105 = scmp.eq.s32.totalorder %s15, 1
    %p106 = por %p104, %p105
    %p108 = scmp.ne.s32.totalorder %s91, %s107
    %p109 = scmp.eq.s32.totalorder %s15, 0
    %p110 = por %p108, %p109
    %p111 = scmp.le.s32.totalorder 1, %s9
    %p112 = scmp.lt.s32.totalorder %s9, 3
    %p113 = pnand %p111, %p112
    %p114 = pneg %p113
    // Predicated region
    $region9: #{_pspnet_forward.7} parent=5 // pred_check
      _
    $region10: #{_pspnet_forward.7} parent=5 // pred_check_branch
      %116 = sbr.rel (%p113) target = $region12
    $region11: #{_pspnet_forward.7} parent=5 // pred_region
      %s117 = ssub.s32 %s9, 1
      // Predicated region
      $region13: #{_pspnet_forward.7} parent=11 // pred_check
        %p118 = pneg %p56
      $region14: #{_pspnet_forward.7} parent=11 // pred_check_branch
        %120 = sbr.rel (%p118) target = $region16
      $region15: #{_pspnet_forward.7} parent=11 // pred_region
        _
      $region16: #{_pspnet_forward.7} parent=11 // pred_fallthru
        _
      // Predicated region
      $region17: #{_pspnet_forward.7} parent=11 // pred_check
        %p121 = pneg %p77
      $region18: #{_pspnet_forward.7} parent=11 // pred_check_branch
        %123 = sbr.rel (%p121) target = $region20
      $region19: #{_pspnet_forward.7} parent=11 // pred_region
        _
      $region20: #{_pspnet_forward.7} parent=11 // pred_fallthru
        _
    $region12: #{_pspnet_forward.7} parent=5 // pred_fallthru
      _
    %p124 = scmp.lt.s32.totalorder %s9, 2
    // Predicated region
    $region21: #{_pspnet_forward.7} parent=5 // pred_check
      %p125 = pneg %p124
    $region22: #{_pspnet_forward.7} parent=5 // pred_check_branch
      %127 = sbr.rel (%p125) target = $region24
    $region23: #{_pspnet_forward.7} parent=5 // pred_region
      // Predicated region
      $region25: #{_pspnet_forward.7} parent=23 // pred_check
        %p128 = pneg %p29
      $region26: #{_pspnet_forward.7} parent=23 // pred_check_branch
        %130 = sbr.rel (%p128) target = $region28
      $region27: #{_pspnet_forward.7} parent=23 // pred_region
        %s131 = smul.u32 18, %s9
        %p132 = scmp.lt.s32.totalorder %s131, 35
        %s133 = scalar_select %p132, %s131, 35
        %s134 = smul.addr %s133, 2
        %s135 = smul.addr %s134, 4
        %s136 = scalar_lea.vmem %s0, %s135
        %s137 = smul.u32 18, %s9
      $region28: #{_pspnet_forward.7} parent=23 // pred_fallthru
        _
    $region24: #{_pspnet_forward.7} parent=5 // pred_fallthru
      _
    %p138 = scmp.le.s32.totalorder 1, %s9
    %p139 = scmp.lt.s32.totalorder %s9, 3
    %p140 = pnand %p138, %p139
    %p141 = pneg %p140
    // Predicated region
    $region29: #{_pspnet_forward.7} parent=5 // pred_check
      _
    $region30: #{_pspnet_forward.7} parent=5 // pred_check_branch
      %143 = sbr.rel (%p140) target = $region32
    $region31: #{_pspnet_forward.7} parent=5 // pred_region
      %s144 = ssub.s32 %s9, 1
      %s145 = smul.u32 18, %s14
      %p146 = scmp.lt.s32.totalorder %s145, 35
      %s147 = scalar_select %p146, %s145, 35
      %s148 = smul.addr %s147, 2
      %s149 = smul.addr %s148, 4
      %s150 = scalar_lea.vmem %s0, %s149
      %p151 = pneg %p35
      %p152 = pneg %p32
      %p153 = pneg %p56
      %p154 = pneg %p53
      %p155 = pneg %p77
      %p156 = pneg %p74
      %p157 = pneg %p103
      %p158 = pneg %p100
      %s159 = smul.u32 18, %s14
      %p160 = scmp.lt.s32.totalorder %s159, 35
      %s161 = scalar_select %p160, %s159, 35
      %s162 = smul.addr %s161, 8
      %s163 = scalar_lea.vmem %s3, %s162
      %s164 = smul.u32 18, %s14
      %p165 = scmp.lt.s32.totalorder %s164, 35
      %s166 = scalar_select %p165, %s164, 35
      %s167 = smul.addr %s166, 2
      %s168 = smul.addr %s167, 4
      %s169 = scalar_lea.vmem %s0, %s168
      %s170 = smul.u32 18, %s14
      %s171 = smul.u32 18, %s14
      %p172 = scmp.lt.s32.totalorder %s171, 35
      %s173 = scalar_select %p172, %s171, 35
      %s174 = smul.addr %s173, 8
      %s175 = scalar_lea.vmem %s3, %s174
      %s176 = smul.u32 18, %s14
      %v178 = vld [vmem:[%s169] sm:$0xff]
      %v179 = vld [vmem:[%s169 + $0x8] sm:$0xff]
      %v180 = vld [vmem:[%s169 + $0x10] sm:$0xff]
      %v181 = vld [vmem:[%s169 + $0x18] sm:$0xff]
      %v182 = vld [vmem:[%s169 + $0x20] sm:$0xff]
      %v183 = vld [vmem:[%s169 + $0x28] sm:$0xff]
      %v184 = vld [vmem:[%s169 + $0x30] sm:$0xff]
      %v185 = vld [vmem:[%s169 + $0x38] sm:$0xff]
      %v186 = vld [vmem:[%s169 + $0x40] sm:$0xff]
      %v187 = vld [vmem:[%s169 + $0x48] sm:$0xff]
      %v188 = vld [vmem:[%s169 + $0x50] sm:$0xff]
      %v189 = vld [vmem:[%s169 + $0x58] sm:$0xff]
      %v190 = vld [vmem:[%s169 + $0x60] sm:$0xff]
      %v191 = vld [vmem:[%s169 + $0x68] sm:$0xff]
      %v192 = vld [vmem:[%s169 + $0x70] sm:$0xff]
      %v193 = vld [vmem:[%s169 + $0x78] sm:$0xff]
      %v194 = vld [vmem:[%s169 + $0x80] sm:$0xff]
      %v195 = vld [vmem:[%s169 + $0x88] sm:$0xff]
      %v196 = vld [vmem:[%s1] sm:$0xf]
      %v197 = vld [vmem:[%s1 + $0x4] sm:$0xf]
      %v198 = vld [vmem:[%s1 + $0x8] sm:$0xf]
      %v199 = vld [vmem:[%s1 + $0xc] sm:$0xf]
      %v200 = vld [vmem:[%s1 + $0x10] sm:$0xf]
      %v201 = vld [vmem:[%s1 + $0x14] sm:$0xf]
      %v202 = vld [vmem:[%s1 + $0x18] sm:$0xf]
      %v203 = vld [vmem:[%s1 + $0x1c] sm:$0xf]
      %v204 = vld [vmem:[%s1 + $0x20] sm:$0xf]
      %v205 = vld [vmem:[%s1 + $0x24] sm:$0xf]
      %v206 = vld [vmem:[%s1 + $0x28] sm:$0xf]
      %v207 = vld [vmem:[%s1 + $0x2c] sm:$0xf]
      %v208 = vld [vmem:[%s1 + $0x30] sm:$0xf]
      %v209 = vld [vmem:[%s1 + $0x34] sm:$0xf]
      %v210 = vld [vmem:[%s1 + $0x38] sm:$0xf]
      %v211 = vld [vmem:[%s1 + $0x3c] sm:$0xf]
      %v212 = vld [vmem:[%s1 + $0x40] sm:$0xf]
      %v213 = vld [vmem:[%s1 + $0x44] sm:$0xf]
      %v214 = vld [vmem:[%s2] sm:$0x1]
      %v216 = vperm.slane %v214, 0
      %v236 = vunpack.c.l.b16 %v178
      %v237 = vunpack.c.h.b16 %v178
      %v238 = vunpack.c.l.b16 %v179
      %v239 = vunpack.c.h.b16 %v179
      %v240 = vunpack.c.l.b16 %v180
      %v241 = vunpack.c.h.b16 %v180
      %v242 = vunpack.c.l.b16 %v181
      %v243 = vunpack.c.h.b16 %v181
      %v244 = vunpack.c.l.b16 %v182
      %v245 = vunpack.c.h.b16 %v182
      %v246 = vunpack.c.l.b16 %v183
      %v247 = vunpack.c.h.b16 %v183
      %v248 = vunpack.c.l.b16 %v184
      %v249 = vunpack.c.h.b16 %v184
      %v250 = vunpack.c.l.b16 %v185
      %v251 = vunpack.c.h.b16 %v185
      %v252 = vunpack.c.l.b16 %v186
      %v253 = vunpack.c.h.b16 %v186
      %v254 = vunpack.c.l.b16 %v187
      %v255 = vunpack.c.h.b16 %v187
      %v256 = vunpack.c.l.b16 %v188
      %v257 = vunpack.c.h.b16 %v188
      %v258 = vunpack.c.l.b16 %v189
      %v259 = vunpack.c.h.b16 %v189
      %v260 = vunpack.c.l.b16 %v190
      %v261 = vunpack.c.h.b16 %v190
      %v262 = vunpack.c.l.b16 %v191
      %v263 = vunpack.c.h.b16 %v191
      %v264 = vunpack.c.l.b16 %v192
      %v265 = vunpack.c.h.b16 %v192
      %v266 = vunpack.c.l.b16 %v193
      %v267 = vunpack.c.h.b16 %v193
      %v268 = vunpack.c.l.b16 %v194
      %v269 = vunpack.c.h.b16 %v194
      %v270 = vunpack.c.l.b16 %v195
      %v271 = vunpack.c.h.b16 %v195
      %v272 = vpack.c.b16 %v238, %v236
      %v273 = vpack.c.b16 %v239, %v237
      %v274 = vpack.c.b16 %v242, %v240
      %v275 = vpack.c.b16 %v243, %v241
      %v276 = vpack.c.b16 %v246, %v244
      %v277 = vpack.c.b16 %v247, %v245
      %v278 = vpack.c.b16 %v250, %v248
      %v279 = vpack.c.b16 %v251, %v249
      %v280 = vpack.c.b16 %v254, %v252
      %v281 = vpack.c.b16 %v255, %v253
      %v282 = vpack.c.b16 %v258, %v256
      %v283 = vpack.c.b16 %v259, %v257
      %v284 = vpack.c.b16 %v262, %v260
      %v285 = vpack.c.b16 %v263, %v261
      %v286 = vpack.c.b16 %v266, %v264
      %v287 = vpack.c.b16 %v267, %v265
      %v288 = vpack.c.b16 %v270, %v268
      %v289 = vpack.c.b16 %v271, %v269
      %v317 = vunpack.c.l.b16 %v196
      %v318 = vunpack.c.l.b16 %v197
      %v319 = vunpack.c.l.b16 %v198
      %v320 = vunpack.c.l.b16 %v199
      %v321 = vunpack.c.l.b16 %v200
      %v322 = vunpack.c.l.b16 %v201
      %v323 = vunpack.c.l.b16 %v202
      %v324 = vunpack.c.l.b16 %v203
      %v325 = vunpack.c.l.b16 %v204
      %v326 = vunpack.c.l.b16 %v205
      %v327 = vunpack.c.l.b16 %v206
      %v328 = vunpack.c.l.b16 %v207
      %v329 = vunpack.c.l.b16 %v208
      %v330 = vunpack.c.l.b16 %v209
      %v331 = vunpack.c.l.b16 %v210
      %v332 = vunpack.c.l.b16 %v211
      %v333 = vunpack.c.l.b16 %v212
      %v334 = vunpack.c.l.b16 %v213
      %v335 = vpack.c.b16 %v318, %v317
      %v336 = vpack.c.b16 %v320, %v319
      %v337 = vpack.c.b16 %v322, %v321
      %v338 = vpack.c.b16 %v324, %v323
      %v339 = vpack.c.b16 %v326, %v325
      %v340 = vpack.c.b16 %v328, %v327
      %v341 = vpack.c.b16 %v330, %v329
      %v342 = vpack.c.b16 %v332, %v331
      %v343 = vpack.c.b16 %v334, %v333
      %vm353 = vcmask 130048
      %v355 = vsel %vm353, %v273, 0
      %v358 = vsel %vm353, %v275, 0
      %v361 = vsel %vm353, %v277, 0
      %v364 = vsel %vm353, %v279, 0
      %v367 = vsel %vm353, %v281, 0
      %v370 = vsel %vm353, %v283, 0
      %v373 = vsel %vm353, %v285, 0
      %v376 = vsel %vm353, %v287, 0
      %v379 = vsel %vm353, %v289, 0
      %381 = vmatpush.bf16.msra.mxu0 %v342
      %382 = vmatpush.bf16.msra.mxu0 %v341
      %383 = vmatpush.bf16.msra.mxu0 %v340
      %384 = vmatpush.bf16.msra.mxu0 %v339
      %385 = vmatpush.bf16.msra.mxu0 %v338
      %386 = vmatpush.bf16.msra.mxu0 %v337
      %387 = vmatpush.bf16.msra.mxu0 %v336
      %388 = vmatpush.bf16.msra.mxu0 %v335
      %389 = vmatmul.bf16.gmra.mxu0 %v272
      %v390 = vpop.f32.mrf.mxu0
      %v391 = vadd.f32 %v216, %v390
      %v392 = vpop.f32.mrf.mxu0
      %v393 = vadd.f32 %v216, %v392
      %394 = vmatmul.bf16.gmra.mxu0 %v274
      %v395 = vpop.f32.mrf.mxu0
      %v396 = vadd.f32 %v216, %v395
      %v397 = vpop.f32.mrf.mxu0
      %v398 = vadd.f32 %v216, %v397
      %399 = vmatmul.bf16.gmra.mxu0 %v276
      %v400 = vpop.f32.mrf.mxu0
      %v401 = vadd.f32 %v216, %v400
      %v402 = vpop.f32.mrf.mxu0
      %v403 = vadd.f32 %v216, %v402
      %404 = vmatmul.bf16.gmra.mxu0 %v278
      %v405 = vpop.f32.mrf.mxu0
      %v406 = vadd.f32 %v216, %v405
      %v407 = vpop.f32.mrf.mxu0
      %v408 = vadd.f32 %v216, %v407
      %409 = vmatmul.bf16.gmra.mxu0 %v280
      %v410 = vpop.f32.mrf.mxu0
      %v411 = vadd.f32 %v216, %v410
      %v412 = vpop.f32.mrf.mxu0
      %v413 = vadd.f32 %v216, %v412
      %414 = vmatmul.bf16.gmra.mxu0 %v282
      %v415 = vpop.f32.mrf.mxu0
      %v416 = vadd.f32 %v216, %v415
      %v417 = vpop.f32.mrf.mxu0
      %v418 = vadd.f32 %v216, %v417
      %419 = vmatmul.bf16.gmra.mxu0 %v284
      %v420 = vpop.f32.mrf.mxu0
      %v421 = vadd.f32 %v216, %v420
      %v422 = vpop.f32.mrf.mxu0
      %v423 = vadd.f32 %v216, %v422
      %424 = vmatmul.bf16.gmra.mxu0 %v286
      %v425 = vpop.f32.mrf.mxu0
      %v426 = vadd.f32 %v216, %v425
      %v427 = vpop.f32.mrf.mxu0
      %v428 = vadd.f32 %v216, %v427
      %429 = vmatmul.bf16.gmra.mxu0 %v288
      %v430 = vpop.f32.mrf.mxu0
      %v431 = vadd.f32 %v216, %v430
      %v432 = vpop.f32.mrf.mxu0
      %v433 = vadd.f32 %v216, %v432
      %434 = vdwg.mxu0
      %435 = vmatpush.bf16.msra.mxu0 0
      %436 = vmatpush.bf16.msra.mxu0 0
      %437 = vmatpush.bf16.msra.mxu0 0
      %438 = vmatpush.bf16.msra.mxu0 0
      %439 = vmatpush.bf16.msra.mxu0 0
      %440 = vmatpush.bf16.msra.mxu0 0
      %441 = vmatpush.bf16.msra.mxu0 0
      %442 = vmatpush.bf16.msra.mxu0 %v343
      %443 = vmatmul.bf16.gmra.mxu0 %v355
      %v444 = vpop.f32.mrf.mxu0
      %v445 = vadd.f32 %v391, %v444
      %v446 = vpop.f32.mrf.mxu0
      %v447 = vadd.f32 %v393, %v446
      %448 = vmatmul.bf16.gmra.mxu0 %v358
      %v449 = vpop.f32.mrf.mxu0
      %v450 = vadd.f32 %v396, %v449
      %v451 = vpop.f32.mrf.mxu0
      %v452 = vadd.f32 %v398, %v451
      %453 = vmatmul.bf16.gmra.mxu0 %v361
      %v454 = vpop.f32.mrf.mxu0
      %v455 = vadd.f32 %v401, %v454
      %v456 = vpop.f32.mrf.mxu0
      %v457 = vadd.f32 %v403, %v456
      %458 = vmatmul.bf16.gmra.mxu0 %v364
      %v459 = vpop.f32.mrf.mxu0
      %v460 = vadd.f32 %v406, %v459
      %v461 = vpop.f32.mrf.mxu0
      %v462 = vadd.f32 %v408, %v461
      %463 = vmatmul.bf16.gmra.mxu0 %v367
      %v464 = vpop.f32.mrf.mxu0
      %v465 = vadd.f32 %v411, %v464
      %v466 = vpop.f32.mrf.mxu0
      %v467 = vadd.f32 %v413, %v466
      %468 = vmatmul.bf16.gmra.mxu0 %v370
      %v469 = vpop.f32.mrf.mxu0
      %v470 = vadd.f32 %v416, %v469
      %v471 = vpop.f32.mrf.mxu0
      %v472 = vadd.f32 %v418, %v471
      %473 = vmatmul.bf16.gmra.mxu0 %v373
      %v474 = vpop.f32.mrf.mxu0
      %v475 = vadd.f32 %v421, %v474
      %v476 = vpop.f32.mrf.mxu0
      %v477 = vadd.f32 %v423, %v476
      %478 = vmatmul.bf16.gmra.mxu0 %v376
      %v479 = vpop.f32.mrf.mxu0
      %v480 = vadd.f32 %v426, %v479
      %v481 = vpop.f32.mrf.mxu0
      %v482 = vadd.f32 %v428, %v481
      %483 = vmatmul.bf16.gmra.mxu0 %v379
      %v484 = vpop.f32.mrf.mxu0
      %v485 = vadd.f32 %v431, %v484
      %v486 = vpop.f32.mrf.mxu0
      %v487 = vadd.f32 %v433, %v486
      %488 = vdwg.mxu0
      %v489 = vmax.f32 %v445, 0.0
      %v490 = vmax.f32 %v447, 0.0
      %v491 = vmax.f32 %v450, 0.0
      %v492 = vmax.f32 %v452, 0.0
      %v493 = vmax.f32 %v455, 0.0
      %v494 = vmax.f32 %v457, 0.0
      %v495 = vmax.f32 %v460, 0.0
      %v496 = vmax.f32 %v462, 0.0
      %v497 = vmax.f32 %v465, 0.0
      %v498 = vmax.f32 %v467, 0.0
      %v499 = vmax.f32 %v470, 0.0
      %v500 = vmax.f32 %v472, 0.0
      %v501 = vmax.f32 %v475, 0.0
      %v502 = vmax.f32 %v477, 0.0
      %v503 = vmax.f32 %v480, 0.0
      %v504 = vmax.f32 %v482, 0.0
      %v505 = vmax.f32 %v485, 0.0
      %v506 = vmax.f32 %v487, 0.0
      %vm507 = vcmask 261120
      %508 = vst.msk [vmem:[%s175] sm:$0xff] %vm507, %v489
      %509 = vst.msk [vmem:[%s175 + $0x8] sm:$0xff] %vm507, %v490
      %510 = vst.msk [vmem:[%s175 + $0x10] sm:$0xff] %vm507, %v491
      %511 = vst.msk [vmem:[%s175 + $0x18] sm:$0xff] %vm507, %v492
      %512 = vst.msk [vmem:[%s175 + $0x20] sm:$0xff] %vm507, %v493
      %513 = vst.msk [vmem:[%s175 + $0x28] sm:$0xff] %vm507, %v494
      %514 = vst.msk [vmem:[%s175 + $0x30] sm:$0xff] %vm507, %v495
      %515 = vst.msk [vmem:[%s175 + $0x38] sm:$0xff] %vm507, %v496
      %516 = vst.msk [vmem:[%s175 + $0x40] sm:$0xff] %vm507, %v497
      %517 = vst.msk [vmem:[%s175 + $0x48] sm:$0xff] %vm507, %v498
      %518 = vst.msk [vmem:[%s175 + $0x50] sm:$0xff] %vm507, %v499
      %519 = vst.msk [vmem:[%s175 + $0x58] sm:$0xff] %vm507, %v500
      %520 = vst.msk [vmem:[%s175 + $0x60] sm:$0xff] %vm507, %v501
      %521 = vst.msk [vmem:[%s175 + $0x68] sm:$0xff] %vm507, %v502
      %522 = vst.msk [vmem:[%s175 + $0x70] sm:$0xff] %vm507, %v503
      %523 = vst.msk [vmem:[%s175 + $0x78] sm:$0xff] %vm507, %v504
      %524 = vst.msk [vmem:[%s175 + $0x80] sm:$0xff] %vm507, %v505
      %525 = vst.msk [vmem:[%s175 + $0x88] sm:$0xff] %vm507, %v506
      %s526 = smul.u32 18, %s14
      %p527 = scmp.lt.s32.totalorder %s526, 35
      %s528 = scalar_select %p527, %s526, 35
      %s529 = smul.addr %s528, 8
      %s530 = scalar_lea.vmem %s3, %s529
      // Predicated region
      $region33: #{_pspnet_forward.7} parent=31 // pred_check
        %p531 = pneg %p100
      $region34: #{_pspnet_forward.7} parent=31 // pred_check_branch
        %533 = sbr.rel (%p531) target = $region36
      $region35: #{_pspnet_forward.7} parent=31 // pred_region
        %s534 = smul.u32 18, %s14
      $region36: #{_pspnet_forward.7} parent=31 // pred_fallthru
        _
    $region32: #{_pspnet_forward.7} parent=5 // pred_fallthru
      _
    %p535 = scmp.le.s32.totalorder 2, %s9
    // Predicated region
    $region37: #{_pspnet_forward.7} parent=5 // pred_check
      %p536 = pneg %p535
    $region38: #{_pspnet_forward.7} parent=5 // pred_check_branch
      %538 = sbr.rel (%p536) target = $region40
    $region39: #{_pspnet_forward.7} parent=5 // pred_region
      %s539 = ssub.s32 %s9, 2
      // Predicated region
      $region41: #{_pspnet_forward.7} parent=39 // pred_check
        %p540 = pneg %p106
      $region42: #{_pspnet_forward.7} parent=39 // pred_check_branch
        %542 = sbr.rel (%p540) target = $region44
      $region43: #{_pspnet_forward.7} parent=39 // pred_region
        %s543 = smul.u32 18, %s15
        %p544 = scmp.lt.s32.totalorder %s543, 35
        %s545 = scalar_select %p544, %s543, 35
        %s546 = smul.addr %s545, 8
        %s547 = scalar_lea.vmem %s3, %s546
      $region44: #{_pspnet_forward.7} parent=39 // pred_fallthru
        _
    $region40: #{_pspnet_forward.7} parent=5 // pred_fallthru
      _
  $region6: #{_pspnet_forward.7} parent=0 // loop_footer
    %s13 = sadd.s32 1, %s9
  $region7: #{_pspnet_forward.7} parent=0 // loop_footer_branch
    %8 = sbr.rel target = $region3
  $region8: #{_pspnet_forward.7} parent=0 // loop_exit
    _

// kernel: _pspnet_forward.8
$region0: #{_pspnet_forward.8}
  #allocation0 [shape = 'u32[]', space=smem, size = 0x4, offset = 0x4, fixed_abs, tag = 'smem constant byte address 0x4 - core index']
  #allocation1 [shape = 'u32[72,128]{1,0:T(1,128)}', space=vmem, size = 0x9000, scoped, tag = 'internal scratch']
  %s0 = inlined_call_operand.vmem [shape: bf16[72,288], index: 0, kind: input, shape index: {}]
  %s1 = inlined_call_operand.vmem [shape: bf16[288,64], index: 1, kind: input, shape index: {}]
  %s2 = inlined_call_operand.vmem [shape: f32[1,64], index: 2, kind: input, shape index: {}]
  %s3 = inlined_call_operand.vmem [shape: f32[72,64], index: 3, kind: output, shape index: {}]
  %s4 = sld [smem:[#allocation0]]
  $region22: #{_pspnet_forward.8} parent=0
    _
  %s6 = ssub.s32 1, %s4
  %s7 = scalar_select 0, %s6, %s4
  // Predicated region
  $region2: #{_pspnet_forward.8} parent=0 // pred_check
    _
  $region3: #{_pspnet_forward.8} parent=0 // pred_check_branch
    %9 = sbr.rel (0) target = $region5
  $region4: #{_pspnet_forward.8} parent=0 // pred_region
    _
  $region5: #{_pspnet_forward.8} parent=0 // pred_fallthru
    _
  // Predicated region
  $region6: #{_pspnet_forward.8} parent=0 // pred_check
    _
  $region7: #{_pspnet_forward.8} parent=0 // pred_check_branch
    %11 = sbr.rel (0) target = $region9
  $region8: #{_pspnet_forward.8} parent=0 // pred_region
    _
  $region9: #{_pspnet_forward.8} parent=0 // pred_fallthru
    _
  // Predicated region
  $region10: #{_pspnet_forward.8} parent=0 // pred_check
    _
  $region11: #{_pspnet_forward.8} parent=0 // pred_check_branch
    %13 = sbr.rel (0) target = $region13
  $region12: #{_pspnet_forward.8} parent=0 // pred_region
    _
  $region13: #{_pspnet_forward.8} parent=0 // pred_fallthru
    _
  %v15 = vld [vmem:[%s0] sm:$0xff]
  %v16 = vld [vmem:[%s0 + $0x8] sm:$0xf]
  %v17 = vld [vmem:[%s0 + $0xc] sm:$0xff]
  %v18 = vld [vmem:[%s0 + $0x14] sm:$0xf]
  %v19 = vld [vmem:[%s0 + $0x18] sm:$0xff]
  %v20 = vld [vmem:[%s0 + $0x20] sm:$0xf]
  %v21 = vld [vmem:[%s0 + $0x24] sm:$0xff]
  %v22 = vld [vmem:[%s0 + $0x2c] sm:$0xf]
  %v23 = vld [vmem:[%s0 + $0x30] sm:$0xff]
  %v24 = vld [vmem:[%s0 + $0x38] sm:$0xf]
  %v25 = vld [vmem:[%s0 + $0x3c] sm:$0xff]
  %v26 = vld [vmem:[%s0 + $0x44] sm:$0xf]
  %v27 = vld [vmem:[%s0 + $0x48] sm:$0xff]
  %v28 = vld [vmem:[%s0 + $0x50] sm:$0xf]
  %v29 = vld [vmem:[%s0 + $0x54] sm:$0xff]
  %v30 = vld [vmem:[%s0 + $0x5c] sm:$0xf]
  %v31 = vld [vmem:[%s0 + $0x60] sm:$0xff]
  %v32 = vld [vmem:[%s0 + $0x68] sm:$0xf]
  %v33 = vld [vmem:[%s1] sm:$0xf]
  %v34 = vld [vmem:[%s1 + $0x4] sm:$0xf]
  %v35 = vld [vmem:[%s1 + $0x8] sm:$0xf]
  %v36 = vld [vmem:[%s1 + $0xc] sm:$0xf]
  %v37 = vld [vmem:[%s1 + $0x10] sm:$0xf]
  %v38 = vld [vmem:[%s1 + $0x14] sm:$0xf]
  %v39 = vld [vmem:[%s1 + $0x18] sm:$0xf]
  %v40 = vld [vmem:[%s1 + $0x1c] sm:$0xf]
  %v41 = vld [vmem:[%s1 + $0x20] sm:$0xf]
  %v42 = vld [vmem:[%s1 + $0x24] sm:$0xf]
  %v43 = vld [vmem:[%s1 + $0x28] sm:$0xf]
  %v44 = vld [vmem:[%s1 + $0x2c] sm:$0xf]
  %v45 = vld [vmem:[%s1 + $0x30] sm:$0xf]
  %v46 = vld [vmem:[%s1 + $0x34] sm:$0xf]
  %v47 = vld [vmem:[%s1 + $0x38] sm:$0xf]
  %v48 = vld [vmem:[%s1 + $0x3c] sm:$0xf]
  %v49 = vld [vmem:[%s1 + $0x40] sm:$0xf]
  %v50 = vld [vmem:[%s1 + $0x44] sm:$0xf]
  %v51 = vld [vmem:[%s1 + $0x48] sm:$0xf]
  %v52 = vld [vmem:[%s1 + $0x4c] sm:$0xf]
  %v53 = vld [vmem:[%s1 + $0x50] sm:$0xf]
  %v54 = vld [vmem:[%s1 + $0x54] sm:$0xf]
  %v55 = vld [vmem:[%s1 + $0x58] sm:$0xf]
  %v56 = vld [vmem:[%s1 + $0x5c] sm:$0xf]
  %v57 = vld [vmem:[%s1 + $0x60] sm:$0xf]
  %v58 = vld [vmem:[%s1 + $0x64] sm:$0xf]
  %v59 = vld [vmem:[%s1 + $0x68] sm:$0xf]
  %v60 = vld [vmem:[%s1 + $0x6c] sm:$0xf]
  %v61 = vld [vmem:[%s1 + $0x70] sm:$0xf]
  %v62 = vld [vmem:[%s1 + $0x74] sm:$0xf]
  %v63 = vld [vmem:[%s1 + $0x78] sm:$0xf]
  %v64 = vld [vmem:[%s1 + $0x7c] sm:$0xf]
  %v65 = vld [vmem:[%s1 + $0x80] sm:$0xf]
  %v66 = vld [vmem:[%s1 + $0x84] sm:$0xf]
  %v67 = vld [vmem:[%s1 + $0x88] sm:$0xf]
  %v68 = vld [vmem:[%s1 + $0x8c] sm:$0xf]
  %v69 = vld [vmem:[%s2] sm:$0x1]
  %v71 = vperm.slane %v69, 0
  %v91 = vunpack.c.l.b16 %v15
  %v92 = vunpack.c.h.b16 %v15
  %v93 = vunpack.c.l.b16 %v16
  %v94 = vunpack.c.l.b16 %v17
  %v95 = vunpack.c.h.b16 %v17
  %v96 = vunpack.c.l.b16 %v18
  %v97 = vunpack.c.l.b16 %v19
  %v98 = vunpack.c.h.b16 %v19
  %v99 = vunpack.c.l.b16 %v20
  %v100 = vunpack.c.l.b16 %v21
  %v101 = vunpack.c.h.b16 %v21
  %v102 = vunpack.c.l.b16 %v22
  %v103 = vunpack.c.l.b16 %v23
  %v104 = vunpack.c.h.b16 %v23
  %v105 = vunpack.c.l.b16 %v24
  %v106 = vunpack.c.l.b16 %v25
  %v107 = vunpack.c.h.b16 %v25
  %v108 = vunpack.c.l.b16 %v26
  %v109 = vunpack.c.l.b16 %v27
  %v110 = vunpack.c.h.b16 %v27
  %v111 = vunpack.c.l.b16 %v28
  %v112 = vunpack.c.l.b16 %v29
  %v113 = vunpack.c.h.b16 %v29
  %v114 = vunpack.c.l.b16 %v30
  %v115 = vunpack.c.l.b16 %v31
  %v116 = vunpack.c.h.b16 %v31
  %v117 = vunpack.c.l.b16 %v32
  %v118 = vpack.c.b16 %v94, %v91
  %v119 = vpack.c.b16 %v95, %v92
  %v120 = vpack.c.b16 %v96, %v93
  %v121 = vpack.c.b16 %v100, %v97
  %v122 = vpack.c.b16 %v101, %v98
  %v123 = vpack.c.b16 %v102, %v99
  %v124 = vpack.c.b16 %v106, %v103
  %v125 = vpack.c.b16 %v107, %v104
  %v126 = vpack.c.b16 %v108, %v105
  %v127 = vpack.c.b16 %v112, %v109
  %v128 = vpack.c.b16 %v113, %v110
  %v129 = vpack.c.b16 %v114, %v111
  %v130 = vpack.c.b16 %v115, %v115
  %v131 = vpack.c.b16 %v116, %v116
  %v132 = vpack.c.b16 %v117, %v117
  %v179 = vunpack.c.l.b16 %v33
  %v180 = vunpack.c.l.b16 %v34
  %v181 = vunpack.c.l.b16 %v35
  %v182 = vunpack.c.l.b16 %v36
  %v183 = vunpack.c.l.b16 %v37
  %v184 = vunpack.c.l.b16 %v38
  %v185 = vunpack.c.l.b16 %v39
  %v186 = vunpack.c.l.b16 %v40
  %v187 = vunpack.c.l.b16 %v41
  %v188 = vunpack.c.l.b16 %v42
  %v189 = vunpack.c.l.b16 %v43
  %v190 = vunpack.c.l.b16 %v44
  %v191 = vunpack.c.l.b16 %v45
  %v192 = vunpack.c.l.b16 %v46
  %v193 = vunpack.c.l.b16 %v47
  %v194 = vunpack.c.l.b16 %v48
  %v195 = vunpack.c.l.b16 %v49
  %v196 = vunpack.c.l.b16 %v50
  %v197 = vunpack.c.l.b16 %v51
  %v198 = vunpack.c.l.b16 %v52
  %v199 = vunpack.c.l.b16 %v53
  %v200 = vunpack.c.l.b16 %v54
  %v201 = vunpack.c.l.b16 %v55
  %v202 = vunpack.c.l.b16 %v56
  %v203 = vunpack.c.l.b16 %v57
  %v204 = vunpack.c.l.b16 %v58
  %v205 = vunpack.c.l.b16 %v59
  %v206 = vunpack.c.l.b16 %v60
  %v207 = vunpack.c.l.b16 %v61
  %v208 = vunpack.c.l.b16 %v62
  %v209 = vunpack.c.l.b16 %v63
  %v210 = vunpack.c.l.b16 %v64
  %v211 = vunpack.c.l.b16 %v65
  %v212 = vunpack.c.l.b16 %v66
  %v213 = vunpack.c.l.b16 %v67
  %v214 = vunpack.c.l.b16 %v68
  %v215 = vpack.c.b16 %v180, %v179
  %v216 = vpack.c.b16 %v182, %v181
  %v217 = vpack.c.b16 %v184, %v183
  %v218 = vpack.c.b16 %v186, %v185
  %v219 = vpack.c.b16 %v188, %v187
  %v220 = vpack.c.b16 %v190, %v189
  %v221 = vpack.c.b16 %v192, %v191
  %v222 = vpack.c.b16 %v194, %v193
  %v223 = vpack.c.b16 %v196, %v195
  %v224 = vpack.c.b16 %v198, %v197
  %v225 = vpack.c.b16 %v200, %v199
  %v226 = vpack.c.b16 %v202, %v201
  %v227 = vpack.c.b16 %v204, %v203
  %v228 = vpack.c.b16 %v206, %v205
  %v229 = vpack.c.b16 %v208, %v207
  %v230 = vpack.c.b16 %v210, %v209
  %v231 = vpack.c.b16 %v212, %v211
  %v232 = vpack.c.b16 %v214, %v213
  %vm251 = vcmask 261120
  %v253 = vsel %vm251, %v120, 0
  %v256 = vsel %vm251, %v123, 0
  %v259 = vsel %vm251, %v126, 0
  %v262 = vsel %vm251, %v129, 0
  %v265 = vsel %vm251, %v132, 0
  %267 = vmatpush.bf16.msra.mxu0 %v222
  %268 = vmatpush.bf16.msra.mxu0 %v221
  %269 = vmatpush.bf16.msra.mxu0 %v220
  %270 = vmatpush.bf16.msra.mxu0 %v219
  %271 = vmatpush.bf16.msra.mxu0 %v218
  %272 = vmatpush.bf16.msra.mxu0 %v217
  %273 = vmatpush.bf16.msra.mxu0 %v216
  %274 = vmatpush.bf16.msra.mxu0 %v215
  %275 = vmatmul.bf16.gmra.mxu0 %v118
  %v276 = vpop.f32.mrf.mxu0
  %v277 = vadd.f32 %v71, %v276
  %v278 = vpop.f32.mrf.mxu0
  %v279 = vadd.f32 %v71, %v278
  %280 = vmatmul.bf16.gmra.mxu0 %v121
  %v281 = vpop.f32.mrf.mxu0
  %v282 = vadd.f32 %v71, %v281
  %v283 = vpop.f32.mrf.mxu0
  %v284 = vadd.f32 %v71, %v283
  %285 = vmatmul.bf16.gmra.mxu0 %v124
  %v286 = vpop.f32.mrf.mxu0
  %v287 = vadd.f32 %v71, %v286
  %v288 = vpop.f32.mrf.mxu0
  %v289 = vadd.f32 %v71, %v288
  %290 = vmatmul.bf16.gmra.mxu0 %v127
  %v291 = vpop.f32.mrf.mxu0
  %v292 = vadd.f32 %v71, %v291
  %v293 = vpop.f32.mrf.mxu0
  %v294 = vadd.f32 %v71, %v293
  %295 = vmatmul.bf16.gmra.mxu0 %v130
  %v296 = vpop.f32.mrf.mxu0
  %v297 = vadd.f32 %v71, %v296
  %v298 = vpop.f32.mrf.mxu0
  %299 = vdwg.mxu0
  %300 = vmatpush.bf16.msra.mxu0 %v230
  %301 = vmatpush.bf16.msra.mxu0 %v229
  %302 = vmatpush.bf16.msra.mxu0 %v228
  %303 = vmatpush.bf16.msra.mxu0 %v227
  %304 = vmatpush.bf16.msra.mxu0 %v226
  %305 = vmatpush.bf16.msra.mxu0 %v225
  %306 = vmatpush.bf16.msra.mxu0 %v224
  %307 = vmatpush.bf16.msra.mxu0 %v223
  %308 = vmatmul.bf16.gmra.mxu0 %v119
  %v309 = vpop.f32.mrf.mxu0
  %v310 = vadd.f32 %v277, %v309
  %v311 = vpop.f32.mrf.mxu0
  %v312 = vadd.f32 %v279, %v311
  %313 = vmatmul.bf16.gmra.mxu0 %v122
  %v314 = vpop.f32.mrf.mxu0
  %v315 = vadd.f32 %v282, %v314
  %v316 = vpop.f32.mrf.mxu0
  %v317 = vadd.f32 %v284, %v316
  %318 = vmatmul.bf16.gmra.mxu0 %v125
  %v319 = vpop.f32.mrf.mxu0
  %v320 = vadd.f32 %v287, %v319
  %v321 = vpop.f32.mrf.mxu0
  %v322 = vadd.f32 %v289, %v321
  %323 = vmatmul.bf16.gmra.mxu0 %v128
  %v324 = vpop.f32.mrf.mxu0
  %v325 = vadd.f32 %v292, %v324
  %v326 = vpop.f32.mrf.mxu0
  %v327 = vadd.f32 %v294, %v326
  %328 = vmatmul.bf16.gmra.mxu0 %v131
  %v329 = vpop.f32.mrf.mxu0
  %v330 = vadd.f32 %v297, %v329
  %v331 = vpop.f32.mrf.mxu0
  %332 = vdwg.mxu0
  %333 = vmatpush.bf16.msra.mxu0 0
  %334 = vmatpush.bf16.msra.mxu0 0
  %335 = vmatpush.bf16.msra.mxu0 0
  %336 = vmatpush.bf16.msra.mxu0 0
  %337 = vmatpush.bf16.msra.mxu0 0
  %338 = vmatpush.bf16.msra.mxu0 0
  %339 = vmatpush.bf16.msra.mxu0 %v232
  %340 = vmatpush.bf16.msra.mxu0 %v231
  %341 = vmatmul.bf16.gmra.mxu0 %v253
  %v342 = vpop.f32.mrf.mxu0
  %v343 = vadd.f32 %v310, %v342
  %v344 = vpop.f32.mrf.mxu0
  %v345 = vadd.f32 %v312, %v344
  %346 = vmatmul.bf16.gmra.mxu0 %v256
  %v347 = vpop.f32.mrf.mxu0
  %v348 = vadd.f32 %v315, %v347
  %v349 = vpop.f32.mrf.mxu0
  %v350 = vadd.f32 %v317, %v349
  %351 = vmatmul.bf16.gmra.mxu0 %v259
  %v352 = vpop.f32.mrf.mxu0
  %v353 = vadd.f32 %v320, %v352
  %v354 = vpop.f32.mrf.mxu0
  %v355 = vadd.f32 %v322, %v354
  %356 = vmatmul.bf16.gmra.mxu0 %v262
  %v357 = vpop.f32.mrf.mxu0
  %v358 = vadd.f32 %v325, %v357
  %v359 = vpop.f32.mrf.mxu0
  %v360 = vadd.f32 %v327, %v359
  %361 = vmatmul.bf16.gmra.mxu0 %v265
  %v362 = vpop.f32.mrf.mxu0
  %v363 = vadd.f32 %v330, %v362
  %v364 = vpop.f32.mrf.mxu0
  %365 = vdwg.mxu0
  %v366 = vmax.f32 %v343, 0.0
  %v367 = vmax.f32 %v345, 0.0
  %v368 = vmax.f32 %v348, 0.0
  %v369 = vmax.f32 %v350, 0.0
  %v370 = vmax.f32 %v353, 0.0
  %v371 = vmax.f32 %v355, 0.0
  %v372 = vmax.f32 %v358, 0.0
  %v373 = vmax.f32 %v360, 0.0
  %v374 = vmax.f32 %v363, 0.0
  %vm375 = vcmask 523264
  %376 = vst.msk [vmem:[%s3] sm:$0xff] %vm375, %v366
  %377 = vst.msk [vmem:[%s3 + $0x8] sm:$0xff] %vm375, %v367
  %378 = vst.msk [vmem:[%s3 + $0x10] sm:$0xff] %vm375, %v368
  %379 = vst.msk [vmem:[%s3 + $0x18] sm:$0xff] %vm375, %v369
  %380 = vst.msk [vmem:[%s3 + $0x20] sm:$0xff] %vm375, %v370
  %381 = vst.msk [vmem:[%s3 + $0x28] sm:$0xff] %vm375, %v371
  %382 = vst.msk [vmem:[%s3 + $0x30] sm:$0xff] %vm375, %v372
  %383 = vst.msk [vmem:[%s3 + $0x38] sm:$0xff] %vm375, %v373
  %384 = vst.msk [vmem:[%s3 + $0x40] sm:$0xff] %vm375, %v374
  // Predicated region
  $region14: #{_pspnet_forward.8} parent=0 // pred_check
    _
  $region15: #{_pspnet_forward.8} parent=0 // pred_check_branch
    %386 = sbr.rel (0) target = $region17
  $region16: #{_pspnet_forward.8} parent=0 // pred_region
    _
  $region17: #{_pspnet_forward.8} parent=0 // pred_fallthru
    _
  // Predicated region
  $region18: #{_pspnet_forward.8} parent=0 // pred_check
    _
  $region19: #{_pspnet_forward.8} parent=0 // pred_check_branch
    %388 = sbr.rel (0) target = $region21
  $region20: #{_pspnet_forward.8} parent=0 // pred_region
    _
  $region21: #{_pspnet_forward.8} parent=0 // pred_fallthru
    _

// kernel: _pspnet_forward.9
$region0: #{_pspnet_forward.9}
  #allocation0 [shape = 'u32[]', space=smem, size = 0x4, offset = 0x4, fixed_abs, tag = 'smem constant byte address 0x4 - core index']
  #allocation1 [shape = 'u32[72,128]{1,0:T(1,128)}', space=vmem, size = 0x9000, scoped, tag = 'internal scratch']
  %s0 = inlined_call_operand.vmem [shape: bf16[2,40,64], index: 0, kind: input, shape index: {}]
  %s1 = inlined_call_operand.vmem [shape: bf16[56,40], index: 1, kind: input, shape index: {}]
  %s2 = inlined_call_operand.vmem [shape: bf16[64,64], index: 2, kind: input, shape index: {}]
  %s3 = inlined_call_operand.vmem [shape: f32[1,64], index: 3, kind: input, shape index: {}]
  %s4 = inlined_call_operand.vmem [shape: f32[56,64], index: 4, kind: input, shape index: {}]
  %s5 = inlined_call_operand.vmem [shape: bf16[40,56], index: 5, kind: input, shape index: {}]
  %s6 = inlined_call_operand.vmem [shape: bf16[64,64], index: 6, kind: input, shape index: {}]
  %s7 = inlined_call_operand.vmem [shape: bf16[64,64], index: 7, kind: input, shape index: {}]
  %s8 = inlined_call_operand.vmem [shape: f32[1,64], index: 8, kind: input, shape index: {}]
  %s9 = inlined_call_operand.vmem [shape: f32[2,40,64], index: 9, kind: output, shape index: {}]
  %s10 = sld [smem:[#allocation0]]
  $region69: #{_pspnet_forward.9} parent=0
    _
  %s12 = ssub.s32 1, %s10
  %s13 = scalar_select 0, %s12, %s10
  loop: start=0, step=1, limit=4
  $region2: #{_pspnet_forward.9} parent=0 // loop_pre_header
    _
  $region3: #{_pspnet_forward.9} parent=0 // loop_header
    %s15 = sphi 0, %s19
    %p16 = scmp.ge.s32.totalorder %s15, 4
    %s25 = sphi 0, %s27
    %s28 = sphi 0, %s25
    %s29 = sphi 0, %s28
    %s45 = sphi 0, %s29
    %s49 = sphi 0, %s49
    %s51 = sphi 0, %s49
    %s52 = sphi 0, %s51
    %s66 = sphi 0, %s52
    %s70 = sphi 0, %s70
    %s72 = sphi 0, %s70
    %s73 = sphi 0, %s72
    %s87 = sphi 0, %s73
    %s91 = sphi 0, %s91
    %s93 = sphi 0, %s91
    %s94 = sphi 0, %s93
    %s108 = sphi 0, %s94
    %s112 = sphi 0, %s112
    %s114 = sphi 0, %s112
    %s115 = sphi 0, %s114
    %s129 = sphi 0, %s115
    %s133 = sphi 0, %s133
    %s135 = sphi 0, %s133
    %s136 = sphi 0, %s135
    %s150 = sphi 0, %s136
    %s154 = sphi 0, %s154
    %s156 = sphi 0, %s154
    %s157 = sphi 0, %s156
    %s171 = sphi 0, %s157
    %s175 = sphi 0, %s175
    %s177 = sphi 0, %s175
    %s178 = sphi 0, %s177
    %s192 = sphi 0, %s178
    %s196 = sphi 0, %s196
    %s198 = sphi 0, %s196
    %s199 = sphi 0, %s198
    %s213 = sphi 0, %s199
    %s219 = sphi 0, %s221
    %s222 = sphi 0, %s219
    %s223 = sphi 0, %s222
    %s239 = sphi 0, %s223
  $region4: #{_pspnet_forward.9} parent=0 // loop_header_branch
    %18 = sbr.rel (%p16) target = $region8
  $region5: #{_pspnet_forward.9} parent=0 // loop_body
    %s20 = ssub.s32 %s15, 1
    %s21 = ssub.s32 %s15, 2
    %s22 = sadd.s32 %s15, 1
    %s23 = ssub.s32 %s15, %s22
    %p24 = scmp.eq.s32.totalorder %s23, 0
    %s26 = sadd.s32 %s25, 1
    %s27 = scalar_select %p24, %s25, %s26
    %p30 = pneg %p24
    %p31 = scmp.eq.s32.totalorder %s15, 1
    %p32 = por %p30, %p31
    %p33 = scmp.ne.s32.totalorder %s25, %s28
    %p34 = scmp.eq.s32.totalorder %s15, 0
    %p35 = por %p33, %p34
    %p36 = scmp.ne.s32.totalorder %s25, %s28
    %p37 = scmp.eq.s32.totalorder %s20, 1
    %p38 = por %p36, %p37
    %p39 = scmp.ne.s32.totalorder %s28, %s29
    %p40 = scmp.eq.s32.totalorder %s20, 0
    %p41 = por %p39, %p40
    %p42 = scmp.ne.s32.totalorder %s28, %s29
    %p43 = scmp.eq.s32.totalorder %s21, 1
    %p44 = por %p42, %p43
    %p46 = scmp.ne.s32.totalorder %s29, %s45
    %p47 = scmp.eq.s32.totalorder %s21, 0
    %p48 = por %p46, %p47
    %s50 = sadd.s32 %s49, 1
    %p53 = scmp.eq.s32.totalorder %s15, 1
    %p54 = scmp.ne.s32.totalorder %s49, %s51
    %p55 = scmp.eq.s32.totalorder %s15, 0
    %p56 = por %p54, %p55
    %p57 = scmp.ne.s32.totalorder %s49, %s51
    %p58 = scmp.eq.s32.totalorder %s20, 1
    %p59 = por %p57, %p58
    %p60 = scmp.ne.s32.totalorder %s51, %s52
    %p61 = scmp.eq.s32.totalorder %s20, 0
    %p62 = por %p60, %p61
    %p63 = scmp.ne.s32.totalorder %s51, %s52
    %p64 = scmp.eq.s32.totalorder %s21, 1
    %p65 = por %p63, %p64
    %p67 = scmp.ne.s32.totalorder %s52, %s66
    %p68 = scmp.eq.s32.totalorder %s21, 0
    %p69 = por %p67, %p68
    %s71 = sadd.s32 %s70, 1
    %p74 = scmp.eq.s32.totalorder %s15, 1
    %p75 = scmp.ne.s32.totalorder %s70, %s72
    %p76 = scmp.eq.s32.totalorder %s15, 0
    %p77 = por %p75, %p76
    %p78 = scmp.ne.s32.totalorder %s70, %s72
    %p79 = scmp.eq.s32.totalorder %s20, 1
    %p80 = por %p78, %p79
    %p81 = scmp.ne.s32.totalorder %s72, %s73
    %p82 = scmp.eq.s32.totalorder %s20, 0
    %p83 = por %p81, %p82
    %p84 = scmp.ne.s32.totalorder %s72, %s73
    %p85 = scmp.eq.s32.totalorder %s21, 1
    %p86 = por %p84, %p85
    %p88 = scmp.ne.s32.totalorder %s73, %s87
    %p89 = scmp.eq.s32.totalorder %s21, 0
    %p90 = por %p88, %p89
    %s92 = sadd.s32 %s91, 1
    %p95 = scmp.eq.s32.totalorder %s15, 1
    %p96 = scmp.ne.s32.totalorder %s91, %s93
    %p97 = scmp.eq.s32.totalorder %s15, 0
    %p98 = por %p96, %p97
    %p99 = scmp.ne.s32.totalorder %s91, %s93
    %p100 = scmp.eq.s32.totalorder %s20, 1
    %p101 = por %p99, %p100
    %p102 = scmp.ne.s32.totalorder %s93, %s94
    %p103 = scmp.eq.s32.totalorder %s20, 0
    %p104 = por %p102, %p103
    %p105 = scmp.ne.s32.totalorder %s93, %s94
    %p106 = scmp.eq.s32.totalorder %s21, 1
    %p107 = por %p105, %p106
    %p109 = scmp.ne.s32.totalorder %s94, %s108
    %p110 = scmp.eq.s32.totalorder %s21, 0
    %p111 = por %p109, %p110
    %s113 = sadd.s32 %s112, 1
    %p116 = scmp.eq.s32.totalorder %s15, 1
    %p117 = scmp.ne.s32.totalorder %s112, %s114
    %p118 = scmp.eq.s32.totalorder %s15, 0
    %p119 = por %p117, %p118
    %p120 = scmp.ne.s32.totalorder %s112, %s114
    %p121 = scmp.eq.s32.totalorder %s20, 1
    %p122 = por %p120, %p121
    %p123 = scmp.ne.s32.totalorder %s114, %s115
    %p124 = scmp.eq.s32.totalorder %s20, 0
    %p125 = por %p123, %p124
    %p126 = scmp.ne.s32.totalorder %s114, %s115
    %p127 = scmp.eq.s32.totalorder %s21, 1
    %p128 = por %p126, %p127
    %p130 = scmp.ne.s32.totalorder %s115, %s129
    %p131 = scmp.eq.s32.totalorder %s21, 0
    %p132 = por %p130, %p131
    %s134 = sadd.s32 %s133, 1
    %p137 = scmp.eq.s32.totalorder %s15, 1
    %p138 = scmp.ne.s32.totalorder %s133, %s135
    %p139 = scmp.eq.s32.totalorder %s15, 0
    %p140 = por %p138, %p139
    %p141 = scmp.ne.s32.totalorder %s133, %s135
    %p142 = scmp.eq.s32.totalorder %s20, 1
    %p143 = por %p141, %p142
    %p144 = scmp.ne.s32.totalorder %s135, %s136
    %p145 = scmp.eq.s32.totalorder %s20, 0
    %p146 = por %p144, %p145
    %p147 = scmp.ne.s32.totalorder %s135, %s136
    %p148 = scmp.eq.s32.totalorder %s21, 1
    %p149 = por %p147, %p148
    %p151 = scmp.ne.s32.totalorder %s136, %s150
    %p152 = scmp.eq.s32.totalorder %s21, 0
    %p153 = por %p151, %p152
    %s155 = sadd.s32 %s154, 1
    %p158 = scmp.eq.s32.totalorder %s15, 1
    %p159 = scmp.ne.s32.totalorder %s154, %s156
    %p160 = scmp.eq.s32.totalorder %s15, 0
    %p161 = por %p159, %p160
    %p162 = scmp.ne.s32.totalorder %s154, %s156
    %p163 = scmp.eq.s32.totalorder %s20, 1
    %p164 = por %p162, %p163
    %p165 = scmp.ne.s32.totalorder %s156, %s157
    %p166 = scmp.eq.s32.totalorder %s20, 0
    %p167 = por %p165, %p166
    %p168 = scmp.ne.s32.totalorder %s156, %s157
    %p169 = scmp.eq.s32.totalorder %s21, 1
    %p170 = por %p168, %p169
    %p172 = scmp.ne.s32.totalorder %s157, %s171
    %p173 = scmp.eq.s32.totalorder %s21, 0
    %p174 = por %p172, %p173
    %s176 = sadd.s32 %s175, 1
    %p179 = scmp.eq.s32.totalorder %s15, 1
    %p180 = scmp.ne.s32.totalorder %s175, %s177
    %p181 = scmp.eq.s32.totalorder %s15, 0
    %p182 = por %p180, %p181
    %p183 = scmp.ne.s32.totalorder %s175, %s177
    %p184 = scmp.eq.s32.totalorder %s20, 1
    %p185 = por %p183, %p184
    %p186 = scmp.ne.s32.totalorder %s177, %s178
    %p187 = scmp.eq.s32.totalorder %s20, 0
    %p188 = por %p186, %p187
    %p189 = scmp.ne.s32.totalorder %s177, %s178
    %p190 = scmp.eq.s32.totalorder %s21, 1
    %p191 = por %p189, %p190
    %p193 = scmp.ne.s32.totalorder %s178, %s192
    %p194 = scmp.eq.s32.totalorder %s21, 0
    %p195 = por %p193, %p194
    %s197 = sadd.s32 %s196, 1
    %p200 = scmp.eq.s32.totalorder %s15, 1
    %p201 = scmp.ne.s32.totalorder %s196, %s198
    %p202 = scmp.eq.s32.totalorder %s15, 0
    %p203 = por %p201, %p202
    %p204 = scmp.ne.s32.totalorder %s196, %s198
    %p205 = scmp.eq.s32.totalorder %s20, 1
    %p206 = por %p204, %p205
    %p207 = scmp.ne.s32.totalorder %s198, %s199
    %p208 = scmp.eq.s32.totalorder %s20, 0
    %p209 = por %p207, %p208
    %p210 = scmp.ne.s32.totalorder %s198, %s199
    %p211 = scmp.eq.s32.totalorder %s21, 1
    %p212 = por %p210, %p211
    %p214 = scmp.ne.s32.totalorder %s199, %s213
    %p215 = scmp.eq.s32.totalorder %s21, 0
    %p216 = por %p214, %p215
    %s217 = ssub.s32 %s15, %s22
    %p218 = scmp.eq.s32.totalorder %s217, 0
    %s220 = sadd.s32 %s219, 1
    %s221 = scalar_select %p218, %s219, %s220
    %p224 = pneg %p218
    %p225 = scmp.eq.s32.totalorder %s15, 1
    %p226 = por %p224, %p225
    %p227 = scmp.ne.s32.totalorder %s219, %s222
    %p228 = scmp.eq.s32.totalorder %s15, 0
    %p229 = por %p227, %p228
    %p230 = scmp.ne.s32.totalorder %s219, %s222
    %p231 = scmp.eq.s32.totalorder %s20, 1
    %p232 = por %p230, %p231
    %p233 = scmp.ne.s32.totalorder %s222, %s223
    %p234 = scmp.eq.s32.totalorder %s20, 0
    %p235 = por %p233, %p234
    %p236 = scmp.ne.s32.totalorder %s222, %s223
    %p237 = scmp.eq.s32.totalorder %s21, 1
    %p238 = por %p236, %p237
    %p240 = scmp.ne.s32.totalorder %s223, %s239
    %p241 = scmp.eq.s32.totalorder %s21, 0
    %p242 = por %p240, %p241
    %p243 = scmp.le.s32.totalorder 1, %s15
    %p244 = scmp.lt.s32.totalorder %s15, 3
    %p245 = pnand %p243, %p244
    %p246 = pneg %p245
    // Predicated region
    $region9: #{_pspnet_forward.9} parent=5 // pred_check
      _
    $region10: #{_pspnet_forward.9} parent=5 // pred_check_branch
      %248 = sbr.rel (%p245) target = $region12
    $region11: #{_pspnet_forward.9} parent=5 // pred_region
      %s249 = ssub.s32 %s15, 1
      // Predicated region
      $region13: #{_pspnet_forward.9} parent=11 // pred_check
        %p250 = pneg %p62
      $region14: #{_pspnet_forward.9} parent=11 // pred_check_branch
        %252 = sbr.rel (%p250) target = $region16
      $region15: #{_pspnet_forward.9} parent=11 // pred_region
        _
      $region16: #{_pspnet_forward.9} parent=11 // pred_fallthru
        _
      // Predicated region
      $region17: #{_pspnet_forward.9} parent=11 // pred_check
        %p253 = pneg %p83
      $region18: #{_pspnet_forward.9} parent=11 // pred_check_branch
        %255 = sbr.rel (%p253) target = $region20
      $region19: #{_pspnet_forward.9} parent=11 // pred_region
        _
      $region20: #{_pspnet_forward.9} parent=11 // pred_fallthru
        _
      // Predicated region
      $region21: #{_pspnet_forward.9} parent=11 // pred_check
        %p256 = pneg %p104
      $region22: #{_pspnet_forward.9} parent=11 // pred_check_branch
        %258 = sbr.rel (%p256) target = $region24
      $region23: #{_pspnet_forward.9} parent=11 // pred_region
        _
      $region24: #{_pspnet_forward.9} parent=11 // pred_fallthru
        _
      // Predicated region
      $region25: #{_pspnet_forward.9} parent=11 // pred_check
        %p259 = pneg %p125
      $region26: #{_pspnet_forward.9} parent=11 // pred_check_branch
        %261 = sbr.rel (%p259) target = $region28
      $region27: #{_pspnet_forward.9} parent=11 // pred_region
        _
      $region28: #{_pspnet_forward.9} parent=11 // pred_fallthru
        _
      // Predicated region
      $region29: #{_pspnet_forward.9} parent=11 // pred_check
        %p262 = pneg %p146
      $region30: #{_pspnet_forward.9} parent=11 // pred_check_branch
        %264 = sbr.rel (%p262) target = $region32
      $region31: #{_pspnet_forward.9} parent=11 // pred_region
        _
      $region32: #{_pspnet_forward.9} parent=11 // pred_fallthru
        _
      // Predicated region
      $region33: #{_pspnet_forward.9} parent=11 // pred_check
        %p265 = pneg %p167
      $region34: #{_pspnet_forward.9} parent=11 // pred_check_branch
        %267 = sbr.rel (%p265) target = $region36
      $region35: #{_pspnet_forward.9} parent=11 // pred_region
        _
      $region36: #{_pspnet_forward.9} parent=11 // pred_fallthru
        _
      // Predicated region
      $region37: #{_pspnet_forward.9} parent=11 // pred_check
        %p268 = pneg %p188
      $region38: #{_pspnet_forward.9} parent=11 // pred_check_branch
        %270 = sbr.rel (%p268) target = $region40
      $region39: #{_pspnet_forward.9} parent=11 // pred_region
        _
      $region40: #{_pspnet_forward.9} parent=11 // pred_fallthru
        _
      // Predicated region
      $region41: #{_pspnet_forward.9} parent=11 // pred_check
        %p271 = pneg %p209
      $region42: #{_pspnet_forward.9} parent=11 // pred_check_branch
        %273 = sbr.rel (%p271) target = $region44
      $region43: #{_pspnet_forward.9} parent=11 // pred_region
        _
      $region44: #{_pspnet_forward.9} parent=11 // pred_fallthru
        _
    $region12: #{_pspnet_forward.9} parent=5 // pred_fallthru
      _
    %p274 = scmp.lt.s32.totalorder %s15, 2
    // Predicated region
    $region45: #{_pspnet_forward.9} parent=5 // pred_check
      %p275 = pneg %p274
    $region46: #{_pspnet_forward.9} parent=5 // pred_check_branch
      %277 = sbr.rel (%p275) target = $region48
    $region47: #{_pspnet_forward.9} parent=5 // pred_region
      // Predicated region
      $region49: #{_pspnet_forward.9} parent=47 // pred_check
        %p278 = pneg %p35
      $region50: #{_pspnet_forward.9} parent=47 // pred_check_branch
        %280 = sbr.rel (%p278) target = $region52
      $region51: #{_pspnet_forward.9} parent=47 // pred_region
        %p281 = scmp.lt.s32.totalorder %s15, 1
        %s282 = scalar_select %p281, %s15, 1
        %s283 = smul.addr %s282, 5
        %s284 = smul.addr %s283, 4
        %s285 = scalar_lea.vmem %s0, %s284
      $region52: #{_pspnet_forward.9} parent=47 // pred_fallthru
        _
    $region48: #{_pspnet_forward.9} parent=5 // pred_fallthru
      _
    %p286 = scmp.le.s32.totalorder 1, %s15
    %p287 = scmp.lt.s32.totalorder %s15, 3
    %p288 = pnand %p286, %p287
    %p289 = pneg %p288
    // Predicated region
    $region53: #{_pspnet_forward.9} parent=5 // pred_check
      _
    $region54: #{_pspnet_forward.9} parent=5 // pred_check_branch
      %291 = sbr.rel (%p288) target = $region56
    $region55: #{_pspnet_forward.9} parent=5 // pred_region
      %s292 = ssub.s32 %s15, 1
      %p293 = scmp.lt.s32.totalorder %s20, 1
      %s294 = scalar_select %p293, %s20, 1
      %s295 = smul.addr %s294, 5
      %s296 = smul.addr %s295, 4
      %s297 = scalar_lea.vmem %s0, %s296
      %p298 = pneg %p41
      %p299 = pneg %p38
      %p300 = pneg %p62
      %p301 = pneg %p59
      %p302 = pneg %p83
      %p303 = pneg %p80
      %p304 = pneg %p104
      %p305 = pneg %p101
      %p306 = pneg %p125
      %p307 = pneg %p122
      %p308 = pneg %p146
      %p309 = pneg %p143
      %p310 = pneg %p167
      %p311 = pneg %p164
      %p312 = pneg %p188
      %p313 = pneg %p185
      %p314 = pneg %p209
      %p315 = pneg %p206
      %p316 = pneg %p235
      %p317 = pneg %p232
      %p318 = scmp.lt.s32.totalorder %s20, 1
      %s319 = scalar_select %p318, %s20, 1
      %s320 = smul.addr %s319, 5
      %s321 = smul.addr %s320, 8
      %s322 = scalar_lea.vmem %s9, %s321
      %p323 = scmp.lt.s32.totalorder %s20, 1
      %s324 = scalar_select %p323, %s20, 1
      %s325 = smul.addr %s324, 5
      %s326 = smul.addr %s325, 4
      %s327 = scalar_lea.vmem %s0, %s326
      %p328 = scmp.lt.s32.totalorder %s20, 1
      %s329 = scalar_select %p328, %s20, 1
      %s330 = smul.addr %s329, 5
      %s331 = smul.addr %s330, 8
      %s332 = scalar_lea.vmem %s9, %s331
      %v334 = vld [vmem:[%s327] sm:$0xf]
      %v335 = vld [vmem:[%s327 + $0x4] sm:$0xf]
      %v336 = vld [vmem:[%s327 + $0x8] sm:$0xf]
      %v337 = vld [vmem:[%s327 + $0xc] sm:$0xf]
      %v338 = vld [vmem:[%s327 + $0x10] sm:$0xf]
      %v339 = vld [vmem:[%s1] sm:$0xf]
      %v340 = vld [vmem:[%s1 + $0x4] sm:$0xf]
      %v341 = vld [vmem:[%s1 + $0x8] sm:$0xf]
      %v342 = vld [vmem:[%s1 + $0xc] sm:$0xf]
      %v343 = vld [vmem:[%s1 + $0x10] sm:$0xf]
      %v344 = vld [vmem:[%s1 + $0x14] sm:$0xf]
      %v345 = vld [vmem:[%s1 + $0x18] sm:$0xf]
      %v353 = vunpack.c.l.b16 %v339
      %v354 = vunpack.c.l.b16 %v340
      %v355 = vunpack.c.l.b16 %v341
      %v356 = vunpack.c.l.b16 %v342
      %v357 = vunpack.c.l.b16 %v343
      %v358 = vunpack.c.l.b16 %v344
      %v359 = vunpack.c.l.b16 %v345
      %v360 = vpack.c.b16 %v354, %v353
      %v361 = vpack.c.b16 %v356, %v355
      %v362 = vpack.c.b16 %v358, %v357
      %v363 = vpack.c.b16 %v359, %v359
      %v369 = vunpack.c.l.b16 %v334
      %v370 = vunpack.c.l.b16 %v335
      %v371 = vunpack.c.l.b16 %v336
      %v372 = vunpack.c.l.b16 %v337
      %v373 = vunpack.c.l.b16 %v338
      %v374 = vpack.c.b16 %v370, %v369
      %v375 = vpack.c.b16 %v372, %v371
      %v376 = vpack.c.b16 %v373, %v373
      %vm379 = vcmask 326656
      %v381 = vsel %vm379, %v360, 0
      %v384 = vsel %vm379, %v361, 0
      %v387 = vsel %vm379, %v362, 0
      %v390 = vsel %vm379, %v363, 0
      %vm392 = vcmask 1043456
      %v394 = vsel %vm392, %v376, 0
      %396 = vmatpush.bf16.msra.mxu0 0
      %397 = vmatpush.bf16.msra.mxu0 0
      %398 = vmatpush.bf16.msra.mxu0 0
      %399 = vmatpush.bf16.msra.mxu0 0
      %400 = vmatpush.bf16.msra.mxu0 0
      %401 = vmatpush.bf16.msra.mxu0 %v394
      %402 = vmatpush.bf16.msra.mxu0 %v375
      %403 = vmatpush.bf16.msra.mxu0 %v374
      %404 = vmatmul.bf16.gmra.mxu0 %v381
      %v405 = vpop.f32.mrf.mxu0
      %v406 = vadd.f32 0.0, %v405
      %v407 = vpop.f32.mrf.mxu0
      %v408 = vadd.f32 0.0, %v407
      %409 = vmatmul.bf16.gmra.mxu0 %v384
      %v410 = vpop.f32.mrf.mxu0
      %v411 = vadd.f32 0.0, %v410
      %v412 = vpop.f32.mrf.mxu0
      %v413 = vadd.f32 0.0, %v412
      %414 = vmatmul.bf16.gmra.mxu0 %v387
      %v415 = vpop.f32.mrf.mxu0
      %v416 = vadd.f32 0.0, %v415
      %v417 = vpop.f32.mrf.mxu0
      %v418 = vadd.f32 0.0, %v417
      %419 = vmatmul.bf16.gmra.mxu0 %v390
      %v420 = vpop.f32.mrf.mxu0
      %v421 = vadd.f32 0.0, %v420
      %v422 = vpop.f32.mrf.mxu0
      %423 = vdwg.mxu0
      %v424 = vpack.c.bf16 %v408, %v406
      %v425 = vpack.c.bf16 %v413, %v411
      %v426 = vpack.c.bf16 %v418, %v416
      %v427 = vpack.c.bf16 %v421, %v421
      %v428 = vld [vmem:[%s2] sm:$0xf]
      %v429 = vld [vmem:[%s2 + $0x4] sm:$0xf]
      %v430 = vld [vmem:[%s2 + $0x8] sm:$0xf]
      %v431 = vld [vmem:[%s2 + $0xc] sm:$0xf]
      %v432 = vld [vmem:[%s2 + $0x10] sm:$0xf]
      %v433 = vld [vmem:[%s2 + $0x14] sm:$0xf]
      %v434 = vld [vmem:[%s2 + $0x18] sm:$0xf]
      %v435 = vld [vmem:[%s2 + $0x1c] sm:$0xf]
      %v436 = vld [vmem:[%s3] sm:$0x1]
      %v438 = vperm.slane %v436, 0
      %v448 = vunpack.c.l.b16 %v428
      %v449 = vunpack.c.l.b16 %v429
      %v450 = vunpack.c.l.b16 %v430
      %v451 = vunpack.c.l.b16 %v431
      %v452 = vunpack.c.l.b16 %v432
      %v453 = vunpack.c.l.b16 %v433
      %v454 = vunpack.c.l.b16 %v434
      %v455 = vunpack.c.l.b16 %v435
      %v456 = vpack.c.b16 %v449, %v448
      %v457 = vpack.c.b16 %v451, %v450
      %v458 = vpack.c.b16 %v453, %v452
      %v459 = vpack.c.b16 %v455, %v454
      %vm464 = vcmask 523264
      %v466 = vsel %vm464, %v424, 0
      %v469 = vsel %vm464, %v425, 0
      %v472 = vsel %vm464, %v426, 0
      %v475 = vsel %vm464, %v427, 0
      %477 = vmatpush.bf16.msra.mxu0 0
      %478 = vmatpush.bf16.msra.mxu0 0
      %479 = vmatpush.bf16.msra.mxu0 0
      %480 = vmatpush.bf16.msra.mxu0 0
      %481 = vmatpush.bf16.msra.mxu0 %v459
      %482 = vmatpush.bf16.msra.mxu0 %v458
      %483 = vmatpush.bf16.msra.mxu0 %v457
      %484 = vmatpush.bf16.msra.mxu0 %v456
      %485 = vmatmul.bf16.gmra.mxu0 %v466
      %v486 = vpop.f32.mrf.mxu0
      %v487 = vadd.f32 %v438, %v486
      %v488 = vpop.f32.mrf.mxu0
      %v489 = vadd.f32 %v438, %v488
      %490 = vmatmul.bf16.gmra.mxu0 %v469
      %v491 = vpop.f32.mrf.mxu0
      %v492 = vadd.f32 %v438, %v491
      %v493 = vpop.f32.mrf.mxu0
      %v494 = vadd.f32 %v438, %v493
      %495 = vmatmul.bf16.gmra.mxu0 %v472
      %v496 = vpop.f32.mrf.mxu0
      %v497 = vadd.f32 %v438, %v496
      %v498 = vpop.f32.mrf.mxu0
      %v499 = vadd.f32 %v438, %v498
      %500 = vmatmul.bf16.gmra.mxu0 %v475
      %v501 = vpop.f32.mrf.mxu0
      %v502 = vadd.f32 %v438, %v501
      %v503 = vpop.f32.mrf.mxu0
      %504 = vdwg.mxu0
      %v505 = vmax.f32 %v487, 0.0
      %v506 = vmax.f32 %v489, 0.0
      %v507 = vmax.f32 %v492, 0.0
      %v508 = vmax.f32 %v494, 0.0
      %v509 = vmax.f32 %v497, 0.0
      %v510 = vmax.f32 %v499, 0.0
      %v511 = vmax.f32 %v502, 0.0
      %v512 = vld [vmem:[%s4] sm:$0xff]
      %v513 = vld [vmem:[%s4 + $0x8] sm:$0xff]
      %v514 = vld [vmem:[%s4 + $0x10] sm:$0xff]
      %v515 = vld [vmem:[%s4 + $0x18] sm:$0xff]
      %v516 = vld [vmem:[%s4 + $0x20] sm:$0xff]
      %v517 = vld [vmem:[%s4 + $0x28] sm:$0xff]
      %v518 = vld [vmem:[%s4 + $0x30] sm:$0xff]
      %v519 = vmul.f32 %v505, %v512
      %v520 = vmul.f32 %v506, %v513
      %v521 = vmul.f32 %v507, %v514
      %v522 = vmul.f32 %v508, %v515
      %v523 = vmul.f32 %v509, %v516
      %v524 = vmul.f32 %v510, %v517
      %v525 = vmul.f32 %v511, %v518
      %v526 = vld [vmem:[%s5] sm:$0xf]
      %v527 = vld [vmem:[%s5 + $0x4] sm:$0xf]
      %v528 = vld [vmem:[%s5 + $0x8] sm:$0xf]
      %v529 = vld [vmem:[%s5 + $0xc] sm:$0xf]
      %v530 = vld [vmem:[%s5 + $0x10] sm:$0xf]
      %v531 = vpack.c.bf16 %v520, %v519
      %v532 = vpack.c.bf16 %v522, %v521
      %v533 = vpack.c.bf16 %v524, %v523
      %v534 = vpack.c.bf16 %v525, %v525
      %v540 = vunpack.c.l.b16 %v526
      %v541 = vunpack.c.l.b16 %v527
      %v542 = vunpack.c.l.b16 %v528
      %v543 = vunpack.c.l.b16 %v529
      %v544 = vunpack.c.l.b16 %v530
      %v545 = vpack.c.b16 %v541, %v540
      %v546 = vpack.c.b16 %v543, %v542
      %v547 = vpack.c.b16 %v544, %v544
      %vm548 = vcmask 457728
      %v550 = vsel %vm548, %v545, 0
      %v553 = vsel %vm548, %v546, 0
      %v556 = vsel %vm548, %v547, 0
      %v559 = vsel %vm392, %v534, 0
      %561 = vmatpush.bf16.msra.mxu0 0
      %562 = vmatpush.bf16.msra.mxu0 0
      %563 = vmatpush.bf16.msra.mxu0 0
      %564 = vmatpush.bf16.msra.mxu0 0
      %565 = vmatpush.bf16.msra.mxu0 %v559
      %566 = vmatpush.bf16.msra.mxu0 %v533
      %567 = vmatpush.bf16.msra.mxu0 %v532
      %568 = vmatpush.bf16.msra.mxu0 %v531
      %569 = vmatmul.bf16.gmra.mxu0 %v550
      %v570 = vpop.f32.mrf.mxu0
      %v571 = vadd.f32 0.0, %v570
      %v572 = vpop.f32.mrf.mxu0
      %v573 = vadd.f32 0.0, %v572
      %574 = vmatmul.bf16.gmra.mxu0 %v553
      %v575 = vpop.f32.mrf.mxu0
      %v576 = vadd.f32 0.0, %v575
      %v577 = vpop.f32.mrf.mxu0
      %v578 = vadd.f32 0.0, %v577
      %579 = vmatmul.bf16.gmra.mxu0 %v556
      %v580 = vpop.f32.mrf.mxu0
      %v581 = vadd.f32 0.0, %v580
      %v582 = vpop.f32.mrf.mxu0
      %583 = vdwg.mxu0
      %v584 = vld [vmem:[%s6] sm:$0xf]
      %v585 = vld [vmem:[%s6 + $0x4] sm:$0xf]
      %v586 = vld [vmem:[%s6 + $0x8] sm:$0xf]
      %v587 = vld [vmem:[%s6 + $0xc] sm:$0xf]
      %v588 = vld [vmem:[%s6 + $0x10] sm:$0xf]
      %v589 = vld [vmem:[%s6 + $0x14] sm:$0xf]
      %v590 = vld [vmem:[%s6 + $0x18] sm:$0xf]
      %v591 = vld [vmem:[%s6 + $0x1c] sm:$0xf]
      %v592 = vpack.c.bf16 %v573, %v571
      %v593 = vpack.c.bf16 %v578, %v576
      %v594 = vpack.c.bf16 %v581, %v581
      %v595 = vld [vmem:[%s7] sm:$0xf]
      %v596 = vld [vmem:[%s7 + $0x4] sm:$0xf]
      %v597 = vld [vmem:[%s7 + $0x8] sm:$0xf]
      %v598 = vld [vmem:[%s7 + $0xc] sm:$0xf]
      %v599 = vld [vmem:[%s7 + $0x10] sm:$0xf]
      %v600 = vld [vmem:[%s7 + $0x14] sm:$0xf]
      %v601 = vld [vmem:[%s7 + $0x18] sm:$0xf]
      %v602 = vld [vmem:[%s7 + $0x1c] sm:$0xf]
      %v611 = vunpack.c.l.b16 %v595
      %v612 = vunpack.c.l.b16 %v596
      %v613 = vunpack.c.l.b16 %v597
      %v614 = vunpack.c.l.b16 %v598
      %v615 = vunpack.c.l.b16 %v599
      %v616 = vunpack.c.l.b16 %v600
      %v617 = vunpack.c.l.b16 %v601
      %v618 = vunpack.c.l.b16 %v602
      %v619 = vpack.c.b16 %v612, %v611
      %v620 = vpack.c.b16 %v614, %v613
      %v621 = vpack.c.b16 %v616, %v615
      %v622 = vpack.c.b16 %v618, %v617
      %v628 = vsel %vm464, %v592, 0
      %v631 = vsel %vm464, %v593, 0
      %v634 = vsel %vm464, %v594, 0
      %636 = vmatpush.bf16.msra.mxu0 0
      %637 = vmatpush.bf16.msra.mxu0 0
      %638 = vmatpush.bf16.msra.mxu0 0
      %639 = vmatpush.bf16.msra.mxu0 0
      %640 = vmatpush.bf16.msra.mxu0 %v622
      %641 = vmatpush.bf16.msra.mxu0 %v621
      %642 = vmatpush.bf16.msra.mxu0 %v620
      %643 = vmatpush.bf16.msra.mxu0 %v619
      %644 = vmatmul.bf16.gmra.mxu0 %v628
      %v645 = vpop.f32.mrf.mxu0
      %v646 = vadd.f32 0.0, %v645
      %v647 = vpop.f32.mrf.mxu0
      %v648 = vadd.f32 0.0, %v647
      %649 = vmatmul.bf16.gmra.mxu0 %v631
      %v650 = vpop.f32.mrf.mxu0
      %v651 = vadd.f32 0.0, %v650
      %v652 = vpop.f32.mrf.mxu0
      %v653 = vadd.f32 0.0, %v652
      %654 = vmatmul.bf16.gmra.mxu0 %v634
      %v655 = vpop.f32.mrf.mxu0
      %v656 = vadd.f32 0.0, %v655
      %v657 = vpop.f32.mrf.mxu0
      %658 = vdwg.mxu0
      %v667 = vunpack.c.l.b16 %v584
      %v668 = vunpack.c.l.b16 %v585
      %v669 = vunpack.c.l.b16 %v586
      %v670 = vunpack.c.l.b16 %v587
      %v671 = vunpack.c.l.b16 %v588
      %v672 = vunpack.c.l.b16 %v589
      %v673 = vunpack.c.l.b16 %v590
      %v674 = vunpack.c.l.b16 %v591
      %v675 = vpack.c.b16 %v668, %v667
      %v676 = vpack.c.b16 %v670, %v669
      %v677 = vpack.c.b16 %v672, %v671
      %v678 = vpack.c.b16 %v674, %v673
      %v684 = vsel %vm464, %v374, 0
      %v687 = vsel %vm464, %v375, 0
      %v689 = vsel %vm464, %v376, 0
      %691 = vmatpush.bf16.msra.mxu0 0
      %692 = vmatpush.bf16.msra.mxu0 0
      %693 = vmatpush.bf16.msra.mxu0 0
      %694 = vmatpush.bf16.msra.mxu0 0
      %695 = vmatpush.bf16.msra.mxu0 %v678
      %696 = vmatpush.bf16.msra.mxu0 %v677
      %697 = vmatpush.bf16.msra.mxu0 %v676
      %698 = vmatpush.bf16.msra.mxu0 %v675
      %699 = vmatmul.bf16.gmra.mxu0 %v684
      %v700 = vpop.f32.mrf.mxu0
      %v701 = vadd.f32 %v646, %v700
      %v702 = vpop.f32.mrf.mxu0
      %v703 = vadd.f32 %v648, %v702
      %704 = vmatmul.bf16.gmra.mxu0 %v687
      %v705 = vpop.f32.mrf.mxu0
      %v706 = vadd.f32 %v651, %v705
      %v707 = vpop.f32.mrf.mxu0
      %v708 = vadd.f32 %v653, %v707
      %709 = vmatmul.bf16.gmra.mxu0 %v689
      %v710 = vpop.f32.mrf.mxu0
      %v711 = vadd.f32 %v656, %v710
      %v712 = vpop.f32.mrf.mxu0
      %713 = vdwg.mxu0
      %v714 = vld [vmem:[%s8] sm:$0x1]
      %v716 = vperm.slane %v714, 0
      %v718 = vadd.f32 %v701, %v716
      %v719 = vadd.f32 %v703, %v716
      %v720 = vadd.f32 %v706, %v716
      %v721 = vadd.f32 %v708, %v716
      %v722 = vadd.f32 %v711, %v716
      %v723 = vmax.f32 %v718, 0.0
      %v724 = vmax.f32 %v719, 0.0
      %v725 = vmax.f32 %v720, 0.0
      %v726 = vmax.f32 %v721, 0.0
      %v727 = vmax.f32 %v722, 0.0
      %728 = vst.msk [vmem:[%s332] sm:$0xff] %vm464, %v723
      %729 = vst.msk [vmem:[%s332 + $0x8] sm:$0xff] %vm464, %v724
      %730 = vst.msk [vmem:[%s332 + $0x10] sm:$0xff] %vm464, %v725
      %731 = vst.msk [vmem:[%s332 + $0x18] sm:$0xff] %vm464, %v726
      %732 = vst.msk [vmem:[%s332 + $0x20] sm:$0xff] %vm464, %v727
      %p733 = scmp.lt.s32.totalorder %s20, 1
      %s734 = scalar_select %p733, %s20, 1
      %s735 = smul.addr %s734, 5
      %s736 = smul.addr %s735, 8
      %s737 = scalar_lea.vmem %s9, %s736
      // Predicated region
      $region57: #{_pspnet_forward.9} parent=55 // pred_check
        %p738 = pneg %p232
      $region58: #{_pspnet_forward.9} parent=55 // pred_check_branch
        %740 = sbr.rel (%p738) target = $region60
      $region59: #{_pspnet_forward.9} parent=55 // pred_region
        _
      $region60: #{_pspnet_forward.9} parent=55 // pred_fallthru
        _
    $region56: #{_pspnet_forward.9} parent=5 // pred_fallthru
      _
    %p741 = scmp.le.s32.totalorder 2, %s15
    // Predicated region
    $region61: #{_pspnet_forward.9} parent=5 // pred_check
      %p742 = pneg %p741
    $region62: #{_pspnet_forward.9} parent=5 // pred_check_branch
      %744 = sbr.rel (%p742) target = $region64
    $region63: #{_pspnet_forward.9} parent=5 // pred_region
      %s745 = ssub.s32 %s15, 2
      // Predicated region
      $region65: #{_pspnet_forward.9} parent=63 // pred_check
        %p746 = pneg %p238
      $region66: #{_pspnet_forward.9} parent=63 // pred_check_branch
        %748 = sbr.rel (%p746) target = $region68
      $region67: #{_pspnet_forward.9} parent=63 // pred_region
        %p749 = scmp.lt.s32.totalorder %s21, 1
        %s750 = scalar_select %p749, %s21, 1
        %s751 = smul.addr %s750, 5
        %s752 = smul.addr %s751, 8
        %s753 = scalar_lea.vmem %s9, %s752
      $region68: #{_pspnet_forward.9} parent=63 // pred_fallthru
        _
    $region64: #{_pspnet_forward.9} parent=5 // pred_fallthru
      _
  $region6: #{_pspnet_forward.9} parent=0 // loop_footer
    %s19 = sadd.s32 1, %s15
  $region7: #{_pspnet_forward.9} parent=0 // loop_footer_branch
    %14 = sbr.rel target = $region3
  $region8: #{_pspnet_forward.9} parent=0 // loop_exit
    _

// kernel: _pspnet_forward.10
$region0: #{_pspnet_forward.10}
  #allocation0 [shape = 'u32[]', space=smem, size = 0x4, offset = 0x4, fixed_abs, tag = 'smem constant byte address 0x4 - core index']
  #allocation1 [shape = 'u32[72,128]{1,0:T(1,128)}', space=vmem, size = 0x9000, scoped, tag = 'internal scratch']
  %s0 = inlined_call_operand.vmem [shape: bf16[72,576], index: 0, kind: input, shape index: {}]
  %s1 = inlined_call_operand.vmem [shape: bf16[576,3], index: 1, kind: input, shape index: {}]
  %s2 = inlined_call_operand.vmem [shape: f32[1,3], index: 2, kind: input, shape index: {}]
  %s3 = inlined_call_operand.vmem [shape: f32[72,3], index: 3, kind: output, shape index: {}]
  %s4 = sld [smem:[#allocation0]]
  $region22: #{_pspnet_forward.10} parent=0
    _
  %s6 = ssub.s32 1, %s4
  %s7 = scalar_select 0, %s6, %s4
  // Predicated region
  $region2: #{_pspnet_forward.10} parent=0 // pred_check
    _
  $region3: #{_pspnet_forward.10} parent=0 // pred_check_branch
    %9 = sbr.rel (0) target = $region5
  $region4: #{_pspnet_forward.10} parent=0 // pred_region
    _
  $region5: #{_pspnet_forward.10} parent=0 // pred_fallthru
    _
  // Predicated region
  $region6: #{_pspnet_forward.10} parent=0 // pred_check
    _
  $region7: #{_pspnet_forward.10} parent=0 // pred_check_branch
    %11 = sbr.rel (0) target = $region9
  $region8: #{_pspnet_forward.10} parent=0 // pred_region
    _
  $region9: #{_pspnet_forward.10} parent=0 // pred_fallthru
    _
  // Predicated region
  $region10: #{_pspnet_forward.10} parent=0 // pred_check
    _
  $region11: #{_pspnet_forward.10} parent=0 // pred_check_branch
    %13 = sbr.rel (0) target = $region13
  $region12: #{_pspnet_forward.10} parent=0 // pred_region
    _
  $region13: #{_pspnet_forward.10} parent=0 // pred_fallthru
    _
  %v15 = vld [vmem:[%s0] sm:$0xff]
  %v16 = vld [vmem:[%s0 + $0x8] sm:$0xff]
  %v17 = vld [vmem:[%s0 + $0x10] sm:$0xf]
  %v18 = vld [vmem:[%s0 + $0x14] sm:$0xff]
  %v19 = vld [vmem:[%s0 + $0x1c] sm:$0xff]
  %v20 = vld [vmem:[%s0 + $0x24] sm:$0xf]
  %v21 = vld [vmem:[%s0 + $0x28] sm:$0xff]
  %v22 = vld [vmem:[%s0 + $0x30] sm:$0xff]
  %v23 = vld [vmem:[%s0 + $0x38] sm:$0xf]
  %v24 = vld [vmem:[%s0 + $0x3c] sm:$0xff]
  %v25 = vld [vmem:[%s0 + $0x44] sm:$0xff]
  %v26 = vld [vmem:[%s0 + $0x4c] sm:$0xf]
  %v27 = vld [vmem:[%s0 + $0x50] sm:$0xff]
  %v28 = vld [vmem:[%s0 + $0x58] sm:$0xff]
  %v29 = vld [vmem:[%s0 + $0x60] sm:$0xf]
  %v30 = vld [vmem:[%s0 + $0x64] sm:$0xff]
  %v31 = vld [vmem:[%s0 + $0x6c] sm:$0xff]
  %v32 = vld [vmem:[%s0 + $0x74] sm:$0xf]
  %v33 = vld [vmem:[%s0 + $0x78] sm:$0xff]
  %v34 = vld [vmem:[%s0 + $0x80] sm:$0xff]
  %v35 = vld [vmem:[%s0 + $0x88] sm:$0xf]
  %v36 = vld [vmem:[%s0 + $0x8c] sm:$0xff]
  %v37 = vld [vmem:[%s0 + $0x94] sm:$0xff]
  %v38 = vld [vmem:[%s0 + $0x9c] sm:$0xf]
  %v39 = vld [vmem:[%s0 + $0xa0] sm:$0xff]
  %v40 = vld [vmem:[%s0 + $0xa8] sm:$0xff]
  %v41 = vld [vmem:[%s0 + $0xb0] sm:$0xf]
  %v42 = vld [vmem:[%s1] sm:$0xf]
  %v43 = vld [vmem:[%s1 + $0x4] sm:$0xf]
  %v44 = vld [vmem:[%s1 + $0x8] sm:$0xf]
  %v45 = vld [vmem:[%s1 + $0xc] sm:$0xf]
  %v46 = vld [vmem:[%s1 + $0x10] sm:$0xf]
  %v47 = vld [vmem:[%s1 + $0x14] sm:$0xf]
  %v48 = vld [vmem:[%s1 + $0x18] sm:$0xf]
  %v49 = vld [vmem:[%s1 + $0x1c] sm:$0xf]
  %v50 = vld [vmem:[%s1 + $0x20] sm:$0xf]
  %v51 = vld [vmem:[%s1 + $0x24] sm:$0xf]
  %v52 = vld [vmem:[%s1 + $0x28] sm:$0xf]
  %v53 = vld [vmem:[%s1 + $0x2c] sm:$0xf]
  %v54 = vld [vmem:[%s1 + $0x30] sm:$0xf]
  %v55 = vld [vmem:[%s1 + $0x34] sm:$0xf]
  %v56 = vld [vmem:[%s1 + $0x38] sm:$0xf]
  %v57 = vld [vmem:[%s1 + $0x3c] sm:$0xf]
  %v58 = vld [vmem:[%s1 + $0x40] sm:$0xf]
  %v59 = vld [vmem:[%s1 + $0x44] sm:$0xf]
  %v60 = vld [vmem:[%s1 + $0x48] sm:$0xf]
  %v61 = vld [vmem:[%s1 + $0x4c] sm:$0xf]
  %v62 = vld [vmem:[%s1 + $0x50] sm:$0xf]
  %v63 = vld [vmem:[%s1 + $0x54] sm:$0xf]
  %v64 = vld [vmem:[%s1 + $0x58] sm:$0xf]
  %v65 = vld [vmem:[%s1 + $0x5c] sm:$0xf]
  %v66 = vld [vmem:[%s1 + $0x60] sm:$0xf]
  %v67 = vld [vmem:[%s1 + $0x64] sm:$0xf]
  %v68 = vld [vmem:[%s1 + $0x68] sm:$0xf]
  %v69 = vld [vmem:[%s1 + $0x6c] sm:$0xf]
  %v70 = vld [vmem:[%s1 + $0x70] sm:$0xf]
  %v71 = vld [vmem:[%s1 + $0x74] sm:$0xf]
  %v72 = vld [vmem:[%s1 + $0x78] sm:$0xf]
  %v73 = vld [vmem:[%s1 + $0x7c] sm:$0xf]
  %v74 = vld [vmem:[%s1 + $0x80] sm:$0xf]
  %v75 = vld [vmem:[%s1 + $0x84] sm:$0xf]
  %v76 = vld [vmem:[%s1 + $0x88] sm:$0xf]
  %v77 = vld [vmem:[%s1 + $0x8c] sm:$0xf]
  %v78 = vld [vmem:[%s1 + $0x90] sm:$0xf]
  %v79 = vld [vmem:[%s1 + $0x94] sm:$0xf]
  %v80 = vld [vmem:[%s1 + $0x98] sm:$0xf]
  %v81 = vld [vmem:[%s1 + $0x9c] sm:$0xf]
  %v82 = vld [vmem:[%s1 + $0xa0] sm:$0xf]
  %v83 = vld [vmem:[%s1 + $0xa4] sm:$0xf]
  %v84 = vld [vmem:[%s1 + $0xa8] sm:$0xf]
  %v85 = vld [vmem:[%s1 + $0xac] sm:$0xf]
  %v86 = vld [vmem:[%s1 + $0xb0] sm:$0xf]
  %v87 = vld [vmem:[%s1 + $0xb4] sm:$0xf]
  %v88 = vld [vmem:[%s1 + $0xb8] sm:$0xf]
  %v89 = vld [vmem:[%s1 + $0xbc] sm:$0xf]
  %v90 = vld [vmem:[%s1 + $0xc0] sm:$0xf]
  %v91 = vld [vmem:[%s1 + $0xc4] sm:$0xf]
  %v92 = vld [vmem:[%s1 + $0xc8] sm:$0xf]
  %v93 = vld [vmem:[%s1 + $0xcc] sm:$0xf]
  %v94 = vld [vmem:[%s1 + $0xd0] sm:$0xf]
  %v95 = vld [vmem:[%s1 + $0xd4] sm:$0xf]
  %v96 = vld [vmem:[%s1 + $0xd8] sm:$0xf]
  %v97 = vld [vmem:[%s1 + $0xdc] sm:$0xf]
  %v98 = vld [vmem:[%s1 + $0xe0] sm:$0xf]
  %v99 = vld [vmem:[%s1 + $0xe4] sm:$0xf]
  %v100 = vld [vmem:[%s1 + $0xe8] sm:$0xf]
  %v101 = vld [vmem:[%s1 + $0xec] sm:$0xf]
  %v102 = vld [vmem:[%s1 + $0xf0] sm:$0xf]
  %v103 = vld [vmem:[%s1 + $0xf4] sm:$0xf]
  %v104 = vld [vmem:[%s1 + $0xf8] sm:$0xf]
  %v105 = vld [vmem:[%s1 + $0xfc] sm:$0xf]
  %v106 = vld [vmem:[%s1 + $0x100] sm:$0xf]
  %v107 = vld [vmem:[%s1 + $0x104] sm:$0xf]
  %v108 = vld [vmem:[%s1 + $0x108] sm:$0xf]
  %v109 = vld [vmem:[%s1 + $0x10c] sm:$0xf]
  %v110 = vld [vmem:[%s1 + $0x110] sm:$0xf]
  %v111 = vld [vmem:[%s1 + $0x114] sm:$0xf]
  %v112 = vld [vmem:[%s1 + $0x118] sm:$0xf]
  %v113 = vld [vmem:[%s1 + $0x11c] sm:$0xf]
  %v114 = vld [vmem:[%s2] sm:$0x1]
  %v116 = vperm.slane %v114, 0
  %v145 = vunpack.c.l.b16 %v15
  %v146 = vunpack.c.h.b16 %v15
  %v147 = vunpack.c.l.b16 %v16
  %v148 = vunpack.c.h.b16 %v16
  %v149 = vunpack.c.l.b16 %v17
  %v150 = vunpack.c.l.b16 %v18
  %v151 = vunpack.c.h.b16 %v18
  %v152 = vunpack.c.l.b16 %v19
  %v153 = vunpack.c.h.b16 %v19
  %v154 = vunpack.c.l.b16 %v20
  %v155 = vunpack.c.l.b16 %v21
  %v156 = vunpack.c.h.b16 %v21
  %v157 = vunpack.c.l.b16 %v22
  %v158 = vunpack.c.h.b16 %v22
  %v159 = vunpack.c.l.b16 %v23
  %v160 = vunpack.c.l.b16 %v24
  %v161 = vunpack.c.h.b16 %v24
  %v162 = vunpack.c.l.b16 %v25
  %v163 = vunpack.c.h.b16 %v25
  %v164 = vunpack.c.l.b16 %v26
  %v165 = vunpack.c.l.b16 %v27
  %v166 = vunpack.c.h.b16 %v27
  %v167 = vunpack.c.l.b16 %v28
  %v168 = vunpack.c.h.b16 %v28
  %v169 = vunpack.c.l.b16 %v29
  %v170 = vunpack.c.l.b16 %v30
  %v171 = vunpack.c.h.b16 %v30
  %v172 = vunpack.c.l.b16 %v31
  %v173 = vunpack.c.h.b16 %v31
  %v174 = vunpack.c.l.b16 %v32
  %v175 = vunpack.c.l.b16 %v33
  %v176 = vunpack.c.h.b16 %v33
  %v177 = vunpack.c.l.b16 %v34
  %v178 = vunpack.c.h.b16 %v34
  %v179 = vunpack.c.l.b16 %v35
  %v180 = vunpack.c.l.b16 %v36
  %v181 = vunpack.c.h.b16 %v36
  %v182 = vunpack.c.l.b16 %v37
  %v183 = vunpack.c.h.b16 %v37
  %v184 = vunpack.c.l.b16 %v38
  %v185 = vunpack.c.l.b16 %v39
  %v186 = vunpack.c.h.b16 %v39
  %v187 = vunpack.c.l.b16 %v40
  %v188 = vunpack.c.h.b16 %v40
  %v189 = vunpack.c.l.b16 %v41
  %v190 = vpack.c.b16 %v150, %v145
  %v191 = vpack.c.b16 %v151, %v146
  %v192 = vpack.c.b16 %v152, %v147
  %v193 = vpack.c.b16 %v153, %v148
  %v194 = vpack.c.b16 %v154, %v149
  %v195 = vpack.c.b16 %v160, %v155
  %v196 = vpack.c.b16 %v161, %v156
  %v197 = vpack.c.b16 %v162, %v157
  %v198 = vpack.c.b16 %v163, %v158
  %v199 = vpack.c.b16 %v164, %v159
  %v200 = vpack.c.b16 %v170, %v165
  %v201 = vpack.c.b16 %v171, %v166
  %v202 = vpack.c.b16 %v172, %v167
  %v203 = vpack.c.b16 %v173, %v168
  %v204 = vpack.c.b16 %v174, %v169
  %v205 = vpack.c.b16 %v180, %v175
  %v206 = vpack.c.b16 %v181, %v176
  %v207 = vpack.c.b16 %v182, %v177
  %v208 = vpack.c.b16 %v183, %v178
  %v209 = vpack.c.b16 %v184, %v179
  %v210 = vpack.c.b16 %v185, %v185
  %v211 = vpack.c.b16 %v186, %v186
  %v212 = vpack.c.b16 %v187, %v187
  %v213 = vpack.c.b16 %v188, %v188
  %v214 = vpack.c.b16 %v189, %v189
  %v307 = vunpack.c.l.b16 %v42
  %v308 = vunpack.c.l.b16 %v43
  %v309 = vunpack.c.l.b16 %v44
  %v310 = vunpack.c.l.b16 %v45
  %v311 = vunpack.c.l.b16 %v46
  %v312 = vunpack.c.l.b16 %v47
  %v313 = vunpack.c.l.b16 %v48
  %v314 = vunpack.c.l.b16 %v49
  %v315 = vunpack.c.l.b16 %v50
  %v316 = vunpack.c.l.b16 %v51
  %v317 = vunpack.c.l.b16 %v52
  %v318 = vunpack.c.l.b16 %v53
  %v319 = vunpack.c.l.b16 %v54
  %v320 = vunpack.c.l.b16 %v55
  %v321 = vunpack.c.l.b16 %v56
  %v322 = vunpack.c.l.b16 %v57
  %v323 = vunpack.c.l.b16 %v58
  %v324 = vunpack.c.l.b16 %v59
  %v325 = vunpack.c.l.b16 %v60
  %v326 = vunpack.c.l.b16 %v61
  %v327 = vunpack.c.l.b16 %v62
  %v328 = vunpack.c.l.b16 %v63
  %v329 = vunpack.c.l.b16 %v64
  %v330 = vunpack.c.l.b16 %v65
  %v331 = vunpack.c.l.b16 %v66
  %v332 = vunpack.c.l.b16 %v67
  %v333 = vunpack.c.l.b16 %v68
  %v334 = vunpack.c.l.b16 %v69
  %v335 = vunpack.c.l.b16 %v70
  %v336 = vunpack.c.l.b16 %v71
  %v337 = vunpack.c.l.b16 %v72
  %v338 = vunpack.c.l.b16 %v73
  %v339 = vunpack.c.l.b16 %v74
  %v340 = vunpack.c.l.b16 %v75
  %v341 = vunpack.c.l.b16 %v76
  %v342 = vunpack.c.l.b16 %v77
  %v343 = vunpack.c.l.b16 %v78
  %v344 = vunpack.c.l.b16 %v79
  %v345 = vunpack.c.l.b16 %v80
  %v346 = vunpack.c.l.b16 %v81
  %v347 = vunpack.c.l.b16 %v82
  %v348 = vunpack.c.l.b16 %v83
  %v349 = vunpack.c.l.b16 %v84
  %v350 = vunpack.c.l.b16 %v85
  %v351 = vunpack.c.l.b16 %v86
  %v352 = vunpack.c.l.b16 %v87
  %v353 = vunpack.c.l.b16 %v88
  %v354 = vunpack.c.l.b16 %v89
  %v355 = vunpack.c.l.b16 %v90
  %v356 = vunpack.c.l.b16 %v91
  %v357 = vunpack.c.l.b16 %v92
  %v358 = vunpack.c.l.b16 %v93
  %v359 = vunpack.c.l.b16 %v94
  %v360 = vunpack.c.l.b16 %v95
  %v361 = vunpack.c.l.b16 %v96
  %v362 = vunpack.c.l.b16 %v97
  %v363 = vunpack.c.l.b16 %v98
  %v364 = vunpack.c.l.b16 %v99
  %v365 = vunpack.c.l.b16 %v100
  %v366 = vunpack.c.l.b16 %v101
  %v367 = vunpack.c.l.b16 %v102
  %v368 = vunpack.c.l.b16 %v103
  %v369 = vunpack.c.l.b16 %v104
  %v370 = vunpack.c.l.b16 %v105
  %v371 = vunpack.c.l.b16 %v106
  %v372 = vunpack.c.l.b16 %v107
  %v373 = vunpack.c.l.b16 %v108
  %v374 = vunpack.c.l.b16 %v109
  %v375 = vunpack.c.l.b16 %v110
  %v376 = vunpack.c.l.b16 %v111
  %v377 = vunpack.c.l.b16 %v112
  %v378 = vunpack.c.l.b16 %v113
  %v379 = vpack.c.b16 %v308, %v307
  %v380 = vpack.c.b16 %v310, %v309
  %v381 = vpack.c.b16 %v312, %v311
  %v382 = vpack.c.b16 %v314, %v313
  %v383 = vpack.c.b16 %v316, %v315
  %v384 = vpack.c.b16 %v318, %v317
  %v385 = vpack.c.b16 %v320, %v319
  %v386 = vpack.c.b16 %v322, %v321
  %v387 = vpack.c.b16 %v324, %v323
  %v388 = vpack.c.b16 %v326, %v325
  %v389 = vpack.c.b16 %v328, %v327
  %v390 = vpack.c.b16 %v330, %v329
  %v391 = vpack.c.b16 %v332, %v331
  %v392 = vpack.c.b16 %v334, %v333
  %v393 = vpack.c.b16 %v336, %v335
  %v394 = vpack.c.b16 %v338, %v337
  %v395 = vpack.c.b16 %v340, %v339
  %v396 = vpack.c.b16 %v342, %v341
  %v397 = vpack.c.b16 %v344, %v343
  %v398 = vpack.c.b16 %v346, %v345
  %v399 = vpack.c.b16 %v348, %v347
  %v400 = vpack.c.b16 %v350, %v349
  %v401 = vpack.c.b16 %v352, %v351
  %v402 = vpack.c.b16 %v354, %v353
  %v403 = vpack.c.b16 %v356, %v355
  %v404 = vpack.c.b16 %v358, %v357
  %v405 = vpack.c.b16 %v360, %v359
  %v406 = vpack.c.b16 %v362, %v361
  %v407 = vpack.c.b16 %v364, %v363
  %v408 = vpack.c.b16 %v366, %v365
  %v409 = vpack.c.b16 %v368, %v367
  %v410 = vpack.c.b16 %v370, %v369
  %v411 = vpack.c.b16 %v372, %v371
  %v412 = vpack.c.b16 %v374, %v373
  %v413 = vpack.c.b16 %v376, %v375
  %v414 = vpack.c.b16 %v378, %v377
  %vm451 = vcmask 523264
  %v453 = vsel %vm451, %v194, 0
  %v456 = vsel %vm451, %v199, 0
  %v459 = vsel %vm451, %v204, 0
  %v462 = vsel %vm451, %v209, 0
  %v465 = vsel %vm451, %v214, 0
  %467 = vmatpush.bf16.msra.mxu0 %v386
  %468 = vmatpush.bf16.msra.mxu0 %v385
  %469 = vmatpush.bf16.msra.mxu0 %v384
  %470 = vmatpush.bf16.msra.mxu0 %v383
  %471 = vmatpush.bf16.msra.mxu0 %v382
  %472 = vmatpush.bf16.msra.mxu0 %v381
  %473 = vmatpush.bf16.msra.mxu0 %v380
  %474 = vmatpush.bf16.msra.mxu0 %v379
  %475 = vmatmul.bf16.gmra.mxu0 %v190
  %v476 = vpop.f32.mrf.mxu0
  %v477 = vadd.f32 %v116, %v476
  %v478 = vpop.f32.mrf.mxu0
  %v479 = vadd.f32 %v116, %v478
  %480 = vmatmul.bf16.gmra.mxu0 %v195
  %v481 = vpop.f32.mrf.mxu0
  %v482 = vadd.f32 %v116, %v481
  %v483 = vpop.f32.mrf.mxu0
  %v484 = vadd.f32 %v116, %v483
  %485 = vmatmul.bf16.gmra.mxu0 %v200
  %v486 = vpop.f32.mrf.mxu0
  %v487 = vadd.f32 %v116, %v486
  %v488 = vpop.f32.mrf.mxu0
  %v489 = vadd.f32 %v116, %v488
  %490 = vmatmul.bf16.gmra.mxu0 %v205
  %v491 = vpop.f32.mrf.mxu0
  %v492 = vadd.f32 %v116, %v491
  %v493 = vpop.f32.mrf.mxu0
  %v494 = vadd.f32 %v116, %v493
  %495 = vmatmul.bf16.gmra.mxu0 %v210
  %v496 = vpop.f32.mrf.mxu0
  %v497 = vadd.f32 %v116, %v496
  %v498 = vpop.f32.mrf.mxu0
  %499 = vdwg.mxu0
  %500 = vmatpush.bf16.msra.mxu0 %v394
  %501 = vmatpush.bf16.msra.mxu0 %v393
  %502 = vmatpush.bf16.msra.mxu0 %v392
  %503 = vmatpush.bf16.msra.mxu0 %v391
  %504 = vmatpush.bf16.msra.mxu0 %v390
  %505 = vmatpush.bf16.msra.mxu0 %v389
  %506 = vmatpush.bf16.msra.mxu0 %v388
  %507 = vmatpush.bf16.msra.mxu0 %v387
  %508 = vmatmul.bf16.gmra.mxu0 %v191
  %v509 = vpop.f32.mrf.mxu0
  %v510 = vadd.f32 %v477, %v509
  %v511 = vpop.f32.mrf.mxu0
  %v512 = vadd.f32 %v479, %v511
  %513 = vmatmul.bf16.gmra.mxu0 %v196
  %v514 = vpop.f32.mrf.mxu0
  %v515 = vadd.f32 %v482, %v514
  %v516 = vpop.f32.mrf.mxu0
  %v517 = vadd.f32 %v484, %v516
  %518 = vmatmul.bf16.gmra.mxu0 %v201
  %v519 = vpop.f32.mrf.mxu0
  %v520 = vadd.f32 %v487, %v519
  %v521 = vpop.f32.mrf.mxu0
  %v522 = vadd.f32 %v489, %v521
  %523 = vmatmul.bf16.gmra.mxu0 %v206
  %v524 = vpop.f32.mrf.mxu0
  %v525 = vadd.f32 %v492, %v524
  %v526 = vpop.f32.mrf.mxu0
  %v527 = vadd.f32 %v494, %v526
  %528 = vmatmul.bf16.gmra.mxu0 %v211
  %v529 = vpop.f32.mrf.mxu0
  %v530 = vadd.f32 %v497, %v529
  %v531 = vpop.f32.mrf.mxu0
  %532 = vdwg.mxu0
  %533 = vmatpush.bf16.msra.mxu0 %v402
  %534 = vmatpush.bf16.msra.mxu0 %v401
  %535 = vmatpush.bf16.msra.mxu0 %v400
  %536 = vmatpush.bf16.msra.mxu0 %v399
  %537 = vmatpush.bf16.msra.mxu0 %v398
  %538 = vmatpush.bf16.msra.mxu0 %v397
  %539 = vmatpush.bf16.msra.mxu0 %v396
  %540 = vmatpush.bf16.msra.mxu0 %v395
  %541 = vmatmul.bf16.gmra.mxu0 %v192
  %v542 = vpop.f32.mrf.mxu0
  %v543 = vadd.f32 %v510, %v542
  %v544 = vpop.f32.mrf.mxu0
  %v545 = vadd.f32 %v512, %v544
  %546 = vmatmul.bf16.gmra.mxu0 %v197
  %v547 = vpop.f32.mrf.mxu0
  %v548 = vadd.f32 %v515, %v547
  %v549 = vpop.f32.mrf.mxu0
  %v550 = vadd.f32 %v517, %v549
  %551 = vmatmul.bf16.gmra.mxu0 %v202
  %v552 = vpop.f32.mrf.mxu0
  %v553 = vadd.f32 %v520, %v552
  %v554 = vpop.f32.mrf.mxu0
  %v555 = vadd.f32 %v522, %v554
  %556 = vmatmul.bf16.gmra.mxu0 %v207
  %v557 = vpop.f32.mrf.mxu0
  %v558 = vadd.f32 %v525, %v557
  %v559 = vpop.f32.mrf.mxu0
  %v560 = vadd.f32 %v527, %v559
  %561 = vmatmul.bf16.gmra.mxu0 %v212
  %v562 = vpop.f32.mrf.mxu0
  %v563 = vadd.f32 %v530, %v562
  %v564 = vpop.f32.mrf.mxu0
  %565 = vdwg.mxu0
  %566 = vmatpush.bf16.msra.mxu0 %v410
  %567 = vmatpush.bf16.msra.mxu0 %v409
  %568 = vmatpush.bf16.msra.mxu0 %v408
  %569 = vmatpush.bf16.msra.mxu0 %v407
  %570 = vmatpush.bf16.msra.mxu0 %v406
  %571 = vmatpush.bf16.msra.mxu0 %v405
  %572 = vmatpush.bf16.msra.mxu0 %v404
  %573 = vmatpush.bf16.msra.mxu0 %v403
  %574 = vmatmul.bf16.gmra.mxu0 %v193
  %v575 = vpop.f32.mrf.mxu0
  %v576 = vadd.f32 %v543, %v575
  %v577 = vpop.f32.mrf.mxu0
  %v578 = vadd.f32 %v545, %v577
  %579 = vmatmul.bf16.gmra.mxu0 %v198
  %v580 = vpop.f32.mrf.mxu0
  %v581 = vadd.f32 %v548, %v580
  %v582 = vpop.f32.mrf.mxu0
  %v583 = vadd.f32 %v550, %v582
  %584 = vmatmul.bf16.gmra.mxu0 %v203
  %v585 = vpop.f32.mrf.mxu0
  %v586 = vadd.f32 %v553, %v585
  %v587 = vpop.f32.mrf.mxu0
  %v588 = vadd.f32 %v555, %v587
  %589 = vmatmul.bf16.gmra.mxu0 %v208
  %v590 = vpop.f32.mrf.mxu0
  %v591 = vadd.f32 %v558, %v590
  %v592 = vpop.f32.mrf.mxu0
  %v593 = vadd.f32 %v560, %v592
  %594 = vmatmul.bf16.gmra.mxu0 %v213
  %v595 = vpop.f32.mrf.mxu0
  %v596 = vadd.f32 %v563, %v595
  %v597 = vpop.f32.mrf.mxu0
  %598 = vdwg.mxu0
  %599 = vmatpush.bf16.msra.mxu0 0
  %600 = vmatpush.bf16.msra.mxu0 0
  %601 = vmatpush.bf16.msra.mxu0 0
  %602 = vmatpush.bf16.msra.mxu0 0
  %603 = vmatpush.bf16.msra.mxu0 %v414
  %604 = vmatpush.bf16.msra.mxu0 %v413
  %605 = vmatpush.bf16.msra.mxu0 %v412
  %606 = vmatpush.bf16.msra.mxu0 %v411
  %607 = vmatmul.bf16.gmra.mxu0 %v453
  %v608 = vpop.f32.mrf.mxu0
  %v609 = vadd.f32 %v576, %v608
  %v610 = vpop.f32.mrf.mxu0
  %v611 = vadd.f32 %v578, %v610
  %612 = vmatmul.bf16.gmra.mxu0 %v456
  %v613 = vpop.f32.mrf.mxu0
  %v614 = vadd.f32 %v581, %v613
  %v615 = vpop.f32.mrf.mxu0
  %v616 = vadd.f32 %v583, %v615
  %617 = vmatmul.bf16.gmra.mxu0 %v459
  %v618 = vpop.f32.mrf.mxu0
  %v619 = vadd.f32 %v586, %v618
  %v620 = vpop.f32.mrf.mxu0
  %v621 = vadd.f32 %v588, %v620
  %622 = vmatmul.bf16.gmra.mxu0 %v462
  %v623 = vpop.f32.mrf.mxu0
  %v624 = vadd.f32 %v591, %v623
  %v625 = vpop.f32.mrf.mxu0
  %v626 = vadd.f32 %v593, %v625
  %627 = vmatmul.bf16.gmra.mxu0 %v465
  %v628 = vpop.f32.mrf.mxu0
  %v629 = vadd.f32 %v596, %v628
  %v630 = vpop.f32.mrf.mxu0
  %631 = vdwg.mxu0
  %vm632 = vcmask 23552
  %633 = vst.msk [vmem:[%s3] sm:$0xff] %vm632, %v609
  %634 = vst.msk [vmem:[%s3 + $0x8] sm:$0xff] %vm632, %v611
  %635 = vst.msk [vmem:[%s3 + $0x10] sm:$0xff] %vm632, %v614
  %636 = vst.msk [vmem:[%s3 + $0x18] sm:$0xff] %vm632, %v616
  %637 = vst.msk [vmem:[%s3 + $0x20] sm:$0xff] %vm632, %v619
  %638 = vst.msk [vmem:[%s3 + $0x28] sm:$0xff] %vm632, %v621
  %639 = vst.msk [vmem:[%s3 + $0x30] sm:$0xff] %vm632, %v624
  %640 = vst.msk [vmem:[%s3 + $0x38] sm:$0xff] %vm632, %v626
  %641 = vst.msk [vmem:[%s3 + $0x40] sm:$0xff] %vm632, %v629
  // Predicated region
  $region14: #{_pspnet_forward.10} parent=0 // pred_check
    _
  $region15: #{_pspnet_forward.10} parent=0 // pred_check_branch
    %643 = sbr.rel (0) target = $region17
  $region16: #{_pspnet_forward.10} parent=0 // pred_region
    _
  $region17: #{_pspnet_forward.10} parent=0 // pred_fallthru
    _
  // Predicated region
  $region18: #{_pspnet_forward.10} parent=0 // pred_check
    _
  $region19: #{_pspnet_forward.10} parent=0 // pred_check_branch
    %645 = sbr.rel (0) target = $region21
  $region20: #{_pspnet_forward.10} parent=0 // pred_region
    _
  $region21: #{_pspnet_forward.10} parent=0 // pred_fallthru
    _

// kernel: _pspnet_forward.11
$region0: #{_pspnet_forward.11}
  #allocation0 [shape = 'u32[]', space=smem, size = 0x4, offset = 0x4, fixed_abs, tag = 'smem constant byte address 0x4 - core index']
  #allocation1 [shape = 'u32[72,128]{1,0:T(1,128)}', space=vmem, size = 0x9000, scoped, tag = 'internal scratch']
  %s0 = inlined_call_operand.vmem [shape: bf16[8,40], index: 0, kind: input, shape index: {}]
  %s1 = inlined_call_operand.vmem [shape: bf16[40,2304], index: 1, kind: input, shape index: {}]
  %s2 = inlined_call_operand.vmem [shape: f32[1,2304], index: 2, kind: input, shape index: {}]
  %s3 = inlined_call_operand.vmem [shape: f32[8,2304], index: 3, kind: output, shape index: {}]
  %s4 = sld [smem:[#allocation0]]
  $region22: #{_pspnet_forward.11} parent=0
    _
  %s6 = ssub.s32 1, %s4
  %s7 = scalar_select 0, %s6, %s4
  // Predicated region
  $region2: #{_pspnet_forward.11} parent=0 // pred_check
    _
  $region3: #{_pspnet_forward.11} parent=0 // pred_check_branch
    %9 = sbr.rel (0) target = $region5
  $region4: #{_pspnet_forward.11} parent=0 // pred_region
    _
  $region5: #{_pspnet_forward.11} parent=0 // pred_fallthru
    _
  // Predicated region
  $region6: #{_pspnet_forward.11} parent=0 // pred_check
    _
  $region7: #{_pspnet_forward.11} parent=0 // pred_check_branch
    %11 = sbr.rel (0) target = $region9
  $region8: #{_pspnet_forward.11} parent=0 // pred_region
    _
  $region9: #{_pspnet_forward.11} parent=0 // pred_fallthru
    _
  // Predicated region
  $region10: #{_pspnet_forward.11} parent=0 // pred_check
    _
  $region11: #{_pspnet_forward.11} parent=0 // pred_check_branch
    %13 = sbr.rel (0) target = $region13
  $region12: #{_pspnet_forward.11} parent=0 // pred_region
    _
  $region13: #{_pspnet_forward.11} parent=0 // pred_fallthru
    _
  %v15 = vld [vmem:[%s0] sm:$0xf]
  %v16 = vld [vmem:[%s1] sm:$0xff]
  %v17 = vld [vmem:[%s1 + $0x8] sm:$0xff]
  %v18 = vld [vmem:[%s1 + $0x10] sm:$0xff]
  %v19 = vld [vmem:[%s1 + $0x18] sm:$0xff]
  %v20 = vld [vmem:[%s1 + $0x20] sm:$0xff]
  %v21 = vld [vmem:[%s1 + $0x28] sm:$0xff]
  %v22 = vld [vmem:[%s1 + $0x30] sm:$0xff]
  %v23 = vld [vmem:[%s1 + $0x38] sm:$0xff]
  %v24 = vld [vmem:[%s1 + $0x40] sm:$0xff]
  %v25 = vld [vmem:[%s1 + $0x48] sm:$0xff]
  %v26 = vld [vmem:[%s1 + $0x50] sm:$0xff]
  %v27 = vld [vmem:[%s1 + $0x58] sm:$0xff]
  %v28 = vld [vmem:[%s1 + $0x60] sm:$0xff]
  %v29 = vld [vmem:[%s1 + $0x68] sm:$0xff]
  %v30 = vld [vmem:[%s1 + $0x70] sm:$0xff]
  %v31 = vld [vmem:[%s1 + $0x78] sm:$0xff]
  %v32 = vld [vmem:[%s1 + $0x80] sm:$0xff]
  %v33 = vld [vmem:[%s1 + $0x88] sm:$0xff]
  %v34 = vld [vmem:[%s1 + $0x90] sm:$0xff]
  %v35 = vld [vmem:[%s1 + $0x98] sm:$0xff]
  %v36 = vld [vmem:[%s1 + $0xa0] sm:$0xff]
  %v37 = vld [vmem:[%s1 + $0xa8] sm:$0xff]
  %v38 = vld [vmem:[%s1 + $0xb0] sm:$0xff]
  %v39 = vld [vmem:[%s1 + $0xb8] sm:$0xff]
  %v40 = vld [vmem:[%s1 + $0xc0] sm:$0xff]
  %v41 = vld [vmem:[%s1 + $0xc8] sm:$0xff]
  %v42 = vld [vmem:[%s1 + $0xd0] sm:$0xff]
  %v43 = vld [vmem:[%s1 + $0xd8] sm:$0xff]
  %v44 = vld [vmem:[%s1 + $0xe0] sm:$0xff]
  %v45 = vld [vmem:[%s1 + $0xe8] sm:$0xff]
  %v46 = vld [vmem:[%s1 + $0xf0] sm:$0xff]
  %v47 = vld [vmem:[%s1 + $0xf8] sm:$0xff]
  %v48 = vld [vmem:[%s1 + $0x100] sm:$0xff]
  %v49 = vld [vmem:[%s1 + $0x108] sm:$0xff]
  %v50 = vld [vmem:[%s1 + $0x110] sm:$0xff]
  %v51 = vld [vmem:[%s1 + $0x118] sm:$0xff]
  %v52 = vld [vmem:[%s1 + $0x120] sm:$0xff]
  %v53 = vld [vmem:[%s1 + $0x128] sm:$0xff]
  %v54 = vld [vmem:[%s1 + $0x130] sm:$0xff]
  %v55 = vld [vmem:[%s1 + $0x138] sm:$0xff]
  %v56 = vld [vmem:[%s1 + $0x140] sm:$0xff]
  %v57 = vld [vmem:[%s1 + $0x148] sm:$0xff]
  %v58 = vld [vmem:[%s1 + $0x150] sm:$0xff]
  %v59 = vld [vmem:[%s1 + $0x158] sm:$0xff]
  %v60 = vld [vmem:[%s1 + $0x160] sm:$0xff]
  %v61 = vld [vmem:[%s2] sm:$0xff]
  %v62 = vld [vmem:[%s2 + $0x8] sm:$0xff]
  %v63 = vld [vmem:[%s2 + $0x10] sm:$0x3]
  %v67 = vperm.slane %v61, 0
  %v68 = vperm.slane %v61, 1
  %v69 = vperm.slane %v61, 2
  %v70 = vperm.slane %v61, 3
  %v71 = vperm.slane %v61, 4
  %v72 = vperm.slane %v61, 5
  %v73 = vperm.slane %v61, 6
  %v74 = vperm.slane %v61, 7
  %v75 = vperm.slane %v62, 0
  %v76 = vperm.slane %v62, 1
  %v77 = vperm.slane %v62, 2
  %v78 = vperm.slane %v62, 3
  %v79 = vperm.slane %v62, 4
  %v80 = vperm.slane %v62, 5
  %v81 = vperm.slane %v62, 6
  %v82 = vperm.slane %v62, 7
  %v83 = vperm.slane %v63, 0
  %v84 = vperm.slane %v63, 1
  %v148 = vunpack.c.l.b16 %v16
  %v149 = vunpack.c.h.b16 %v16
  %v150 = vunpack.c.l.b16 %v17
  %v151 = vunpack.c.h.b16 %v17
  %v152 = vunpack.c.l.b16 %v18
  %v153 = vunpack.c.h.b16 %v18
  %v154 = vunpack.c.l.b16 %v19
  %v155 = vunpack.c.h.b16 %v19
  %v156 = vunpack.c.l.b16 %v20
  %v157 = vunpack.c.h.b16 %v20
  %v158 = vunpack.c.l.b16 %v21
  %v159 = vunpack.c.h.b16 %v21
  %v160 = vunpack.c.l.b16 %v22
  %v161 = vunpack.c.h.b16 %v22
  %v162 = vunpack.c.l.b16 %v23
  %v163 = vunpack.c.h.b16 %v23
  %v164 = vunpack.c.l.b16 %v24
  %v165 = vunpack.c.h.b16 %v24
  %v166 = vunpack.c.l.b16 %v25
  %v167 = vunpack.c.h.b16 %v25
  %v168 = vunpack.c.l.b16 %v26
  %v169 = vunpack.c.h.b16 %v26
  %v170 = vunpack.c.l.b16 %v27
  %v171 = vunpack.c.h.b16 %v27
  %v172 = vunpack.c.l.b16 %v28
  %v173 = vunpack.c.h.b16 %v28
  %v174 = vunpack.c.l.b16 %v29
  %v175 = vunpack.c.h.b16 %v29
  %v176 = vunpack.c.l.b16 %v30
  %v177 = vunpack.c.h.b16 %v30
  %v178 = vunpack.c.l.b16 %v31
  %v179 = vunpack.c.h.b16 %v31
  %v180 = vunpack.c.l.b16 %v32
  %v181 = vunpack.c.h.b16 %v32
  %v182 = vunpack.c.l.b16 %v33
  %v183 = vunpack.c.h.b16 %v33
  %v184 = vunpack.c.l.b16 %v34
  %v185 = vunpack.c.h.b16 %v34
  %v186 = vunpack.c.l.b16 %v35
  %v187 = vunpack.c.h.b16 %v35
  %v188 = vunpack.c.l.b16 %v36
  %v189 = vunpack.c.h.b16 %v36
  %v190 = vunpack.c.l.b16 %v37
  %v191 = vunpack.c.h.b16 %v37
  %v192 = vunpack.c.l.b16 %v38
  %v193 = vunpack.c.h.b16 %v38
  %v194 = vunpack.c.l.b16 %v39
  %v195 = vunpack.c.h.b16 %v39
  %v196 = vunpack.c.l.b16 %v40
  %v197 = vunpack.c.h.b16 %v40
  %v198 = vunpack.c.l.b16 %v41
  %v199 = vunpack.c.h.b16 %v41
  %v200 = vunpack.c.l.b16 %v42
  %v201 = vunpack.c.h.b16 %v42
  %v202 = vunpack.c.l.b16 %v43
  %v203 = vunpack.c.h.b16 %v43
  %v204 = vunpack.c.l.b16 %v44
  %v205 = vunpack.c.h.b16 %v44
  %v206 = vunpack.c.l.b16 %v45
  %v207 = vunpack.c.h.b16 %v45
  %v208 = vunpack.c.l.b16 %v46
  %v209 = vunpack.c.h.b16 %v46
  %v210 = vunpack.c.l.b16 %v47
  %v211 = vunpack.c.h.b16 %v47
  %v212 = vunpack.c.l.b16 %v48
  %v213 = vunpack.c.h.b16 %v48
  %v214 = vunpack.c.l.b16 %v49
  %v215 = vunpack.c.h.b16 %v49
  %v216 = vunpack.c.l.b16 %v50
  %v217 = vunpack.c.h.b16 %v50
  %v218 = vunpack.c.l.b16 %v51
  %v219 = vunpack.c.h.b16 %v51
  %v220 = vunpack.c.l.b16 %v52
  %v221 = vunpack.c.h.b16 %v52
  %v222 = vunpack.c.l.b16 %v53
  %v223 = vunpack.c.h.b16 %v53
  %v224 = vunpack.c.l.b16 %v54
  %v225 = vunpack.c.h.b16 %v54
  %v226 = vunpack.c.l.b16 %v55
  %v227 = vunpack.c.h.b16 %v55
  %v228 = vunpack.c.l.b16 %v56
  %v229 = vunpack.c.h.b16 %v56
  %v230 = vunpack.c.l.b16 %v57
  %v231 = vunpack.c.h.b16 %v57
  %v232 = vunpack.c.l.b16 %v58
  %v233 = vunpack.c.h.b16 %v58
  %v234 = vunpack.c.l.b16 %v59
  %v235 = vunpack.c.h.b16 %v59
  %v236 = vunpack.c.l.b16 %v60
  %v237 = vunpack.c.h.b16 %v60
  %v238 = vpack.c.b16 %v166, %v148
  %v239 = vpack.c.b16 %v167, %v149
  %v240 = vpack.c.b16 %v168, %v150
  %v241 = vpack.c.b16 %v169, %v151
  %v242 = vpack.c.b16 %v170, %v152
  %v243 = vpack.c.b16 %v171, %v153
  %v244 = vpack.c.b16 %v172, %v154
  %v245 = vpack.c.b16 %v173, %v155
  %v246 = vpack.c.b16 %v174, %v156
  %v247 = vpack.c.b16 %v175, %v157
  %v248 = vpack.c.b16 %v176, %v158
  %v249 = vpack.c.b16 %v177, %v159
  %v250 = vpack.c.b16 %v178, %v160
  %v251 = vpack.c.b16 %v179, %v161
  %v252 = vpack.c.b16 %v180, %v162
  %v253 = vpack.c.b16 %v181, %v163
  %v254 = vpack.c.b16 %v182, %v164
  %v255 = vpack.c.b16 %v183, %v165
  %v256 = vpack.c.b16 %v202, %v184
  %v257 = vpack.c.b16 %v203, %v185
  %v258 = vpack.c.b16 %v204, %v186
  %v259 = vpack.c.b16 %v205, %v187
  %v260 = vpack.c.b16 %v206, %v188
  %v261 = vpack.c.b16 %v207, %v189
  %v262 = vpack.c.b16 %v208, %v190
  %v263 = vpack.c.b16 %v209, %v191
  %v264 = vpack.c.b16 %v210, %v192
  %v265 = vpack.c.b16 %v211, %v193
  %v266 = vpack.c.b16 %v212, %v194
  %v267 = vpack.c.b16 %v213, %v195
  %v268 = vpack.c.b16 %v214, %v196
  %v269 = vpack.c.b16 %v215, %v197
  %v270 = vpack.c.b16 %v216, %v198
  %v271 = vpack.c.b16 %v217, %v199
  %v272 = vpack.c.b16 %v218, %v200
  %v273 = vpack.c.b16 %v219, %v201
  %v274 = vpack.c.b16 %v220, %v220
  %v275 = vpack.c.b16 %v221, %v221
  %v276 = vpack.c.b16 %v222, %v222
  %v277 = vpack.c.b16 %v223, %v223
  %v278 = vpack.c.b16 %v224, %v224
  %v279 = vpack.c.b16 %v225, %v225
  %v280 = vpack.c.b16 %v226, %v226
  %v281 = vpack.c.b16 %v227, %v227
  %v282 = vpack.c.b16 %v228, %v228
  %v283 = vpack.c.b16 %v229, %v229
  %v284 = vpack.c.b16 %v230, %v230
  %v285 = vpack.c.b16 %v231, %v231
  %v286 = vpack.c.b16 %v232, %v232
  %v287 = vpack.c.b16 %v233, %v233
  %v288 = vpack.c.b16 %v234, %v234
  %v289 = vpack.c.b16 %v235, %v235
  %v290 = vpack.c.b16 %v236, %v236
  %v291 = vpack.c.b16 %v237, %v237
  %vm328 = vcmask 326656
  %v330 = vsel %vm328, %v15, 0
  %vm332 = vcmask 1043456
  %v334 = vsel %vm332, %v274, 0
  %v337 = vsel %vm332, %v275, 0
  %v340 = vsel %vm332, %v276, 0
  %v343 = vsel %vm332, %v277, 0
  %v346 = vsel %vm332, %v278, 0
  %v349 = vsel %vm332, %v279, 0
  %v352 = vsel %vm332, %v280, 0
  %v355 = vsel %vm332, %v281, 0
  %v358 = vsel %vm332, %v282, 0
  %v361 = vsel %vm332, %v283, 0
  %v364 = vsel %vm332, %v284, 0
  %v367 = vsel %vm332, %v285, 0
  %v370 = vsel %vm332, %v286, 0
  %v373 = vsel %vm332, %v287, 0
  %v376 = vsel %vm332, %v288, 0
  %v379 = vsel %vm332, %v289, 0
  %v382 = vsel %vm332, %v290, 0
  %v385 = vsel %vm332, %v291, 0
  %387 = vmatpush.bf16.msra.mxu0 0
  %388 = vmatpush.bf16.msra.mxu0 0
  %389 = vmatpush.bf16.msra.mxu0 0
  %390 = vmatpush.bf16.msra.mxu0 0
  %391 = vmatpush.bf16.msra.mxu0 0
  %392 = vmatpush.bf16.msra.mxu0 %v334
  %393 = vmatpush.bf16.msra.mxu0 %v256
  %394 = vmatpush.bf16.msra.mxu0 %v238
  %395 = vmatmul.bf16.gmra.mxu0 %v330
  %v396 = vpop.f32.mrf.mxu0
  %v397 = vadd.f32 %v67, %v396
  %v398 = vpop.f32.mrf.mxu0
  %399 = vdwg.mxu0
  %400 = vmatpush.bf16.msra.mxu0 0
  %401 = vmatpush.bf16.msra.mxu0 0
  %402 = vmatpush.bf16.msra.mxu0 0
  %403 = vmatpush.bf16.msra.mxu0 0
  %404 = vmatpush.bf16.msra.mxu0 0
  %405 = vmatpush.bf16.msra.mxu0 %v337
  %406 = vmatpush.bf16.msra.mxu0 %v257
  %407 = vmatpush.bf16.msra.mxu0 %v239
  %408 = vmatmul.bf16.gmra.mxu0 %v330
  %v409 = vpop.f32.mrf.mxu0
  %v410 = vadd.f32 %v68, %v409
  %v411 = vpop.f32.mrf.mxu0
  %412 = vdwg.mxu0
  %413 = vmatpush.bf16.msra.mxu0 0
  %414 = vmatpush.bf16.msra.mxu0 0
  %415 = vmatpush.bf16.msra.mxu0 0
  %416 = vmatpush.bf16.msra.mxu0 0
  %417 = vmatpush.bf16.msra.mxu0 0
  %418 = vmatpush.bf16.msra.mxu0 %v340
  %419 = vmatpush.bf16.msra.mxu0 %v258
  %420 = vmatpush.bf16.msra.mxu0 %v240
  %421 = vmatmul.bf16.gmra.mxu0 %v330
  %v422 = vpop.f32.mrf.mxu0
  %v423 = vadd.f32 %v69, %v422
  %v424 = vpop.f32.mrf.mxu0
  %425 = vdwg.mxu0
  %426 = vmatpush.bf16.msra.mxu0 0
  %427 = vmatpush.bf16.msra.mxu0 0
  %428 = vmatpush.bf16.msra.mxu0 0
  %429 = vmatpush.bf16.msra.mxu0 0
  %430 = vmatpush.bf16.msra.mxu0 0
  %431 = vmatpush.bf16.msra.mxu0 %v343
  %432 = vmatpush.bf16.msra.mxu0 %v259
  %433 = vmatpush.bf16.msra.mxu0 %v241
  %434 = vmatmul.bf16.gmra.mxu0 %v330
  %v435 = vpop.f32.mrf.mxu0
  %v436 = vadd.f32 %v70, %v435
  %v437 = vpop.f32.mrf.mxu0
  %438 = vdwg.mxu0
  %439 = vmatpush.bf16.msra.mxu0 0
  %440 = vmatpush.bf16.msra.mxu0 0
  %441 = vmatpush.bf16.msra.mxu0 0
  %442 = vmatpush.bf16.msra.mxu0 0
  %443 = vmatpush.bf16.msra.mxu0 0
  %444 = vmatpush.bf16.msra.mxu0 %v346
  %445 = vmatpush.bf16.msra.mxu0 %v260
  %446 = vmatpush.bf16.msra.mxu0 %v242
  %447 = vmatmul.bf16.gmra.mxu0 %v330
  %v448 = vpop.f32.mrf.mxu0
  %v449 = vadd.f32 %v71, %v448
  %v450 = vpop.f32.mrf.mxu0
  %451 = vdwg.mxu0
  %452 = vmatpush.bf16.msra.mxu0 0
  %453 = vmatpush.bf16.msra.mxu0 0
  %454 = vmatpush.bf16.msra.mxu0 0
  %455 = vmatpush.bf16.msra.mxu0 0
  %456 = vmatpush.bf16.msra.mxu0 0
  %457 = vmatpush.bf16.msra.mxu0 %v349
  %458 = vmatpush.bf16.msra.mxu0 %v261
  %459 = vmatpush.bf16.msra.mxu0 %v243
  %460 = vmatmul.bf16.gmra.mxu0 %v330
  %v461 = vpop.f32.mrf.mxu0
  %v462 = vadd.f32 %v72, %v461
  %v463 = vpop.f32.mrf.mxu0
  %464 = vdwg.mxu0
  %465 = vmatpush.bf16.msra.mxu0 0
  %466 = vmatpush.bf16.msra.mxu0 0
  %467 = vmatpush.bf16.msra.mxu0 0
  %468 = vmatpush.bf16.msra.mxu0 0
  %469 = vmatpush.bf16.msra.mxu0 0
  %470 = vmatpush.bf16.msra.mxu0 %v352
  %471 = vmatpush.bf16.msra.mxu0 %v262
  %472 = vmatpush.bf16.msra.mxu0 %v244
  %473 = vmatmul.bf16.gmra.mxu0 %v330
  %v474 = vpop.f32.mrf.mxu0
  %v475 = vadd.f32 %v73, %v474
  %v476 = vpop.f32.mrf.mxu0
  %477 = vdwg.mxu0
  %478 = vmatpush.bf16.msra.mxu0 0
  %479 = vmatpush.bf16.msra.mxu0 0
  %480 = vmatpush.bf16.msra.mxu0 0
  %481 = vmatpush.bf16.msra.mxu0 0
  %482 = vmatpush.bf16.msra.mxu0 0
  %483 = vmatpush.bf16.msra.mxu0 %v355
  %484 = vmatpush.bf16.msra.mxu0 %v263
  %485 = vmatpush.bf16.msra.mxu0 %v245
  %486 = vmatmul.bf16.gmra.mxu0 %v330
  %v487 = vpop.f32.mrf.mxu0
  %v488 = vadd.f32 %v74, %v487
  %v489 = vpop.f32.mrf.mxu0
  %490 = vdwg.mxu0
  %491 = vmatpush.bf16.msra.mxu0 0
  %492 = vmatpush.bf16.msra.mxu0 0
  %493 = vmatpush.bf16.msra.mxu0 0
  %494 = vmatpush.bf16.msra.mxu0 0
  %495 = vmatpush.bf16.msra.mxu0 0
  %496 = vmatpush.bf16.msra.mxu0 %v358
  %497 = vmatpush.bf16.msra.mxu0 %v264
  %498 = vmatpush.bf16.msra.mxu0 %v246
  %499 = vmatmul.bf16.gmra.mxu0 %v330
  %v500 = vpop.f32.mrf.mxu0
  %v501 = vadd.f32 %v75, %v500
  %v502 = vpop.f32.mrf.mxu0
  %503 = vdwg.mxu0
  %504 = vmatpush.bf16.msra.mxu0 0
  %505 = vmatpush.bf16.msra.mxu0 0
  %506 = vmatpush.bf16.msra.mxu0 0
  %507 = vmatpush.bf16.msra.mxu0 0
  %508 = vmatpush.bf16.msra.mxu0 0
  %509 = vmatpush.bf16.msra.mxu0 %v361
  %510 = vmatpush.bf16.msra.mxu0 %v265
  %511 = vmatpush.bf16.msra.mxu0 %v247
  %512 = vmatmul.bf16.gmra.mxu0 %v330
  %v513 = vpop.f32.mrf.mxu0
  %v514 = vadd.f32 %v76, %v513
  %v515 = vpop.f32.mrf.mxu0
  %516 = vdwg.mxu0
  %517 = vmatpush.bf16.msra.mxu0 0
  %518 = vmatpush.bf16.msra.mxu0 0
  %519 = vmatpush.bf16.msra.mxu0 0
  %520 = vmatpush.bf16.msra.mxu0 0
  %521 = vmatpush.bf16.msra.mxu0 0
  %522 = vmatpush.bf16.msra.mxu0 %v364
  %523 = vmatpush.bf16.msra.mxu0 %v266
  %524 = vmatpush.bf16.msra.mxu0 %v248
  %525 = vmatmul.bf16.gmra.mxu0 %v330
  %v526 = vpop.f32.mrf.mxu0
  %v527 = vadd.f32 %v77, %v526
  %v528 = vpop.f32.mrf.mxu0
  %529 = vdwg.mxu0
  %530 = vmatpush.bf16.msra.mxu0 0
  %531 = vmatpush.bf16.msra.mxu0 0
  %532 = vmatpush.bf16.msra.mxu0 0
  %533 = vmatpush.bf16.msra.mxu0 0
  %534 = vmatpush.bf16.msra.mxu0 0
  %535 = vmatpush.bf16.msra.mxu0 %v367
  %536 = vmatpush.bf16.msra.mxu0 %v267
  %537 = vmatpush.bf16.msra.mxu0 %v249
  %538 = vmatmul.bf16.gmra.mxu0 %v330
  %v539 = vpop.f32.mrf.mxu0
  %v540 = vadd.f32 %v78, %v539
  %v541 = vpop.f32.mrf.mxu0
  %542 = vdwg.mxu0
  %543 = vmatpush.bf16.msra.mxu0 0
  %544 = vmatpush.bf16.msra.mxu0 0
  %545 = vmatpush.bf16.msra.mxu0 0
  %546 = vmatpush.bf16.msra.mxu0 0
  %547 = vmatpush.bf16.msra.mxu0 0
  %548 = vmatpush.bf16.msra.mxu0 %v370
  %549 = vmatpush.bf16.msra.mxu0 %v268
  %550 = vmatpush.bf16.msra.mxu0 %v250
  %551 = vmatmul.bf16.gmra.mxu0 %v330
  %v552 = vpop.f32.mrf.mxu0
  %v553 = vadd.f32 %v79, %v552
  %v554 = vpop.f32.mrf.mxu0
  %555 = vdwg.mxu0
  %556 = vmatpush.bf16.msra.mxu0 0
  %557 = vmatpush.bf16.msra.mxu0 0
  %558 = vmatpush.bf16.msra.mxu0 0
  %559 = vmatpush.bf16.msra.mxu0 0
  %560 = vmatpush.bf16.msra.mxu0 0
  %561 = vmatpush.bf16.msra.mxu0 %v373
  %562 = vmatpush.bf16.msra.mxu0 %v269
  %563 = vmatpush.bf16.msra.mxu0 %v251
  %564 = vmatmul.bf16.gmra.mxu0 %v330
  %v565 = vpop.f32.mrf.mxu0
  %v566 = vadd.f32 %v80, %v565
  %v567 = vpop.f32.mrf.mxu0
  %568 = vdwg.mxu0
  %569 = vmatpush.bf16.msra.mxu0 0
  %570 = vmatpush.bf16.msra.mxu0 0
  %571 = vmatpush.bf16.msra.mxu0 0
  %572 = vmatpush.bf16.msra.mxu0 0
  %573 = vmatpush.bf16.msra.mxu0 0
  %574 = vmatpush.bf16.msra.mxu0 %v376
  %575 = vmatpush.bf16.msra.mxu0 %v270
  %576 = vmatpush.bf16.msra.mxu0 %v252
  %577 = vmatmul.bf16.gmra.mxu0 %v330
  %v578 = vpop.f32.mrf.mxu0
  %v579 = vadd.f32 %v81, %v578
  %v580 = vpop.f32.mrf.mxu0
  %581 = vdwg.mxu0
  %582 = vmatpush.bf16.msra.mxu0 0
  %583 = vmatpush.bf16.msra.mxu0 0
  %584 = vmatpush.bf16.msra.mxu0 0
  %585 = vmatpush.bf16.msra.mxu0 0
  %586 = vmatpush.bf16.msra.mxu0 0
  %587 = vmatpush.bf16.msra.mxu0 %v379
  %588 = vmatpush.bf16.msra.mxu0 %v271
  %589 = vmatpush.bf16.msra.mxu0 %v253
  %590 = vmatmul.bf16.gmra.mxu0 %v330
  %v591 = vpop.f32.mrf.mxu0
  %v592 = vadd.f32 %v82, %v591
  %v593 = vpop.f32.mrf.mxu0
  %594 = vdwg.mxu0
  %595 = vmatpush.bf16.msra.mxu0 0
  %596 = vmatpush.bf16.msra.mxu0 0
  %597 = vmatpush.bf16.msra.mxu0 0
  %598 = vmatpush.bf16.msra.mxu0 0
  %599 = vmatpush.bf16.msra.mxu0 0
  %600 = vmatpush.bf16.msra.mxu0 %v382
  %601 = vmatpush.bf16.msra.mxu0 %v272
  %602 = vmatpush.bf16.msra.mxu0 %v254
  %603 = vmatmul.bf16.gmra.mxu0 %v330
  %v604 = vpop.f32.mrf.mxu0
  %v605 = vadd.f32 %v83, %v604
  %v606 = vpop.f32.mrf.mxu0
  %607 = vdwg.mxu0
  %608 = vmatpush.bf16.msra.mxu0 0
  %609 = vmatpush.bf16.msra.mxu0 0
  %610 = vmatpush.bf16.msra.mxu0 0
  %611 = vmatpush.bf16.msra.mxu0 0
  %612 = vmatpush.bf16.msra.mxu0 0
  %613 = vmatpush.bf16.msra.mxu0 %v385
  %614 = vmatpush.bf16.msra.mxu0 %v273
  %615 = vmatpush.bf16.msra.mxu0 %v255
  %616 = vmatmul.bf16.gmra.mxu0 %v330
  %v617 = vpop.f32.mrf.mxu0
  %v618 = vadd.f32 %v84, %v617
  %v619 = vpop.f32.mrf.mxu0
  %620 = vdwg.mxu0
  %621 = vst [vmem:[%s3] sm:$0xff] %v397
  %622 = vst [vmem:[%s3 + $0x8] sm:$0xff] %v410
  %623 = vst [vmem:[%s3 + $0x10] sm:$0xff] %v423
  %624 = vst [vmem:[%s3 + $0x18] sm:$0xff] %v436
  %625 = vst [vmem:[%s3 + $0x20] sm:$0xff] %v449
  %626 = vst [vmem:[%s3 + $0x28] sm:$0xff] %v462
  %627 = vst [vmem:[%s3 + $0x30] sm:$0xff] %v475
  %628 = vst [vmem:[%s3 + $0x38] sm:$0xff] %v488
  %629 = vst [vmem:[%s3 + $0x40] sm:$0xff] %v501
  %630 = vst [vmem:[%s3 + $0x48] sm:$0xff] %v514
  %631 = vst [vmem:[%s3 + $0x50] sm:$0xff] %v527
  %632 = vst [vmem:[%s3 + $0x58] sm:$0xff] %v540
  %633 = vst [vmem:[%s3 + $0x60] sm:$0xff] %v553
  %634 = vst [vmem:[%s3 + $0x68] sm:$0xff] %v566
  %635 = vst [vmem:[%s3 + $0x70] sm:$0xff] %v579
  %636 = vst [vmem:[%s3 + $0x78] sm:$0xff] %v592
  %637 = vst [vmem:[%s3 + $0x80] sm:$0xff] %v605
  %638 = vst [vmem:[%s3 + $0x88] sm:$0xff] %v618
  // Predicated region
  $region14: #{_pspnet_forward.11} parent=0 // pred_check
    _
  $region15: #{_pspnet_forward.11} parent=0 // pred_check_branch
    %640 = sbr.rel (0) target = $region17
  $region16: #{_pspnet_forward.11} parent=0 // pred_region
    _
  $region17: #{_pspnet_forward.11} parent=0 // pred_fallthru
    _
  // Predicated region
  $region18: #{_pspnet_forward.11} parent=0 // pred_check
    _
  $region19: #{_pspnet_forward.11} parent=0 // pred_check_branch
    %642 = sbr.rel (0) target = $region21
  $region20: #{_pspnet_forward.11} parent=0 // pred_region
    _
  $region21: #{_pspnet_forward.11} parent=0 // pred_fallthru
    _

</llo_original>
